<compile_context>
chip_gen: v6e
topology: v6e:2x2x1
jax: 0.10.0
libtpu: 0.0.40
codegen_flags: <defaults>
</compile_context>

<pallas_src>
import functools
import math

import jax
import jax.numpy as jnp
from jax.experimental import pallas as pl
from jax.experimental.pallas import tpu as pltpu


LANE = 128
BOX_OBJ_OFS = 64      # obj-box lanes start here inside the merged 128-lane box out


def _round_up(x, m):
    return ((x + m - 1) // m) * m


def _cdiv(a, b):
    return -(-a // b)


# ----------------------------------------------------------------------------
# conv1x1 (image_adapter): per-batch W[Cout,Cin] @ X[Cin, H*W], transpose-free
# ----------------------------------------------------------------------------

def _conv1x1_kernel(x_ref, w_ref, b_ref, o_ref):
    # bf16 operands, f32 accumulate; bias (Cout,1) broadcast along lanes;
    # output cast to o_ref.dtype (bf16) on store.
    acc = jnp.dot(w_ref[...], x_ref[...],
                  preferred_element_type=jnp.float32) + b_ref[...]
    o_ref[...] = acc.astype(o_ref.dtype)


def conv1x1_pallas(x_nchw, w_oc_ic, b_o, *, block_cols=1024,
                   out_dtype=jnp.bfloat16):
    """nn.Conv2d(Cin, Cout, kernel_size=1) as W @ X[Cin, H*W] per batch.

    No NCHW<->NHWC transposes: X is a free reshape of NCHW, the output is
    produced directly in [B, Cout, H*W] layout.  The spatial dim is the lane
    dim (naturally 128-dense for real feature maps); ragged last column tile
    is handled by the cdiv grid (no jnp.pad copy).
    """
    B, C, H, W = x_nchw.shape
    Cout = w_oc_ic.shape[0]
    HW = H * W
    x = x_nchw.reshape(B, C, HW).astype(jnp.bfloat16)
    w = w_oc_ic.astype(jnp.bfloat16)
    b = b_o.reshape(Cout, 1).astype(jnp.float32)

    if HW <= block_cols:
        bc = HW                      # full lane dim (ok even if < 128)
    else:
        bc = block_cols              # multiple of 128; ragged last tile masked
    n_col = _cdiv(HW, bc)

    y = pl.pallas_call(
        _conv1x1_kernel,
        out_shape=jax.ShapeDtypeStruct((B, Cout, HW), out_dtype),
        grid=(B, n_col),
        in_specs=[pl.BlockSpec((None, C, bc), lambda bi, j: (bi, 0, j)),
                  pl.BlockSpec((Cout, C), lambda bi, j: (0, 0)),
                  pl.BlockSpec((Cout, 1), lambda bi, j: (0, 0))],
        out_specs=pl.BlockSpec((None, Cout, bc), lambda bi, j: (bi, 0, j)),
        compiler_params=pltpu.CompilerParams(
            dimension_semantics=("parallel", "parallel")),
    )(x, w, b)
    return y.reshape(B, Cout, H, W)


def interpolate_nearest(x_nchw, out_h, out_w):
    """torch.nn.functional.interpolate(..., mode='nearest').

    Integer upsample -> pure broadcast/reshape (layout op, no gather).
    Non-integer factors fall back to the index formula (rare path).
    """
    B, C, H, W = x_nchw.shape
    if out_h % H == 0 and out_w % W == 0:
        fh, fw = out_h // H, out_w // W
        y = jnp.broadcast_to(x_nchw[:, :, :, None, :, None],
                             (B, C, H, fh, W, fw))
        return y.reshape(B, C, out_h, out_w)
    idx_h = (jnp.arange(out_h) * H) // out_h
    idx_w = (jnp.arange(out_w) * W) // out_w
    return x_nchw[:, :, idx_h[:, None], idx_w[None, :]]


# ----------------------------------------------------------------------------
# Fused prediction-head kernel (flattened-row grid)
# ----------------------------------------------------------------------------

def _layer_norm(y, gamma, beta, eps=1e-5):
    mu = jnp.mean(y, axis=-1, keepdims=True)
    var = jnp.mean((y - mu) * (y - mu), axis=-1, keepdims=True)
    return (y - mu) * jax.lax.rsqrt(var + eps) * gamma + beta


def _l2_normalize(y, eps=1e-12):
    # rsqrt -> EUP slot; eps avoids div-by-zero on a zero row.
    return y * jax.lax.rsqrt(jnp.sum(y * y, axis=-1, keepdims=True) + eps)


def _fused_heads_kernel(
        scales_ref,                       # SMEM (2,) f32 [exp(obj), exp(hoi)]
        h_ref, o_ref, i_ref,              # (rows, hidden) bf16 decoder states
        ad_ref,                           # (rows, ce) f32 adapted CLIP feature
        hw1, hw2, hw3,                    # hum bbox MLP (w3 -> lanes 0:4 of 128)
        ow1, ow2, ow3,                    # obj bbox MLP (w3 -> lanes 64:68 of 128)
        hb_ref,                           # (4, hidden) [hum_b1,hum_b2,obj_b1,obj_b2]
        bb3_ref,                          # (1, 128) merged box bias
        ofc_w, ovp_w,                     # obj class head (bf16)
        ifc_w, ivp_w,                     # hoi class head (bf16)
        cb_ref,                           # (6, ce) [ofc_b,o_g,o_b,ifc_b,i_g,i_b]
        ovp_b, ivp_b,                     # (1, obj_pad)/(1, hoi_pad) f32
        box_ref, objcls_ref, hoicls_ref, inter_ref):
    f32, bf16 = jnp.float32, jnp.bfloat16

    def ffn(x_bf16, w_ref, b_row):
        t = jnp.dot(x_bf16, w_ref[...], preferred_element_type=f32) + b_row
        return jnp.maximum(t, 0.0).astype(bf16)

    h_x = h_ref[...]
    o_x = o_ref[...]
    i_x = i_ref[...]

    # ---- bbox MLP heads, merged 128-lane output (sub: 0:4, obj: 64:68) -----
    th = ffn(ffn(h_x, hw1, hb_ref[0:1, :]), hw2, hb_ref[1:2, :])
    to = ffn(ffn(o_x, ow1, hb_ref[2:3, :]), ow2, hb_ref[3:4, :])
    box = (jnp.dot(th, hw3[...], preferred_element_type=f32)
           + jnp.dot(to, ow3[...], preferred_element_type=f32)
           + bb3_ref[...])
    box_ref[...] = jax.nn.sigmoid(box)      # padded lanes hold 0.5, sliced off

    # ---- obj classification head: Linear + LN -> L2 norm -> scaled proj ----
    yo = jnp.dot(o_x, ofc_w[...], preferred_element_type=f32) + cb_ref[0:1, :]
    yo = _layer_norm(yo, cb_ref[1:2, :], cb_ref[2:3, :])
    zo = _l2_normalize(yo).astype(bf16)
    objcls_ref[...] = scales_ref[0] * (
        jnp.dot(zo, ovp_w[...], preferred_element_type=f32) + ovp_b[...])

    # ---- hoi classification head --------------------------------------------
    yi = jnp.dot(i_x, ifc_w[...], preferred_element_type=f32) + cb_ref[3:4, :]
    yi = _layer_norm(yi, cb_ref[4:5, :], cb_ref[5:6, :])
    inter_ref[...] = yi                      # "clone" before the clip add
    zi = _l2_normalize(yi + ad_ref[...]).astype(bf16)
    hoicls_ref[...] = scales_ref[1] * (
        jnp.dot(zi, ivp_w[...], preferred_element_type=f32) + ivp_b[...])


def _pick_row_block(rows, target=512):
    """Multiple-of-16 row tile; >=2 grid tiles when rows allow (v7x megacore).
    target<=512 keeps the resident weight set + streams inside v5e's 16 MiB
    scoped VMEM default at real model sizes."""
    blk = min(target, _round_up(rows, 16))
    if rows > 16 and _cdiv(rows, blk) < 2:
        blk = _round_up(_cdiv(rows, 2), 16)
    return max(16, blk)


def fused_prediction_heads(h_hs, o_hs, inter_hs, adapted_clip, scales, p,
                           num_obj_classes_p1, num_hoi_classes):
    """One pallas_call for every DiffHOI_S prediction head.

    (L, B, Q) is flattened into the matmul M dimension and tiled in
    multiple-of-16 row blocks over a 1-D "parallel" grid.  Weights use
    constant index maps so they stay resident in VMEM; the per-image adapted
    CLIP feature (clip_adapter already applied in XLA) is pre-expanded per
    row and streamed alongside the decoder states.
    """
    L, B, Q, hidden = h_hs.shape
    ce = adapted_clip.shape[-1]
    R = L * B * Q
    bf16 = jnp.bfloat16

    obj_pad = _round_up(num_obj_classes_p1, LANE)
    hoi_pad = _round_up(num_hoi_classes, LANE)

    # Merged box projection: hum -> lanes 0:4, obj -> lanes 64:68 of 128 lanes.
    hw3 = jnp.zeros((hidden, LANE), jnp.float32).at[:, 0:4].set(p['hum_w3'])
    ow3 = jnp.zeros((hidden, LANE), jnp.float32).at[
        :, BOX_OBJ_OFS:BOX_OBJ_OFS + 4].set(p['obj_w3'])
    bb3 = (jnp.zeros((1, LANE), jnp.float32)
           .at[:, 0:4].set(p['hum_b3'])
           .at[:, BOX_OBJ_OFS:BOX_OBJ_OFS + 4].set(p['obj_b3']))

    ovp_w = jnp.pad(p['obj_vp_w'], ((0, 0), (0, obj_pad - num_obj_classes_p1)))
    ovp_b = jnp.pad(p['obj_vp_b'], ((0, 0), (0, obj_pad - num_obj_classes_p1)))
    ivp_w = jnp.pad(p['hoi_vp_w'], ((0, 0), (0, hoi_pad - num_hoi_classes)))
    ivp_b = jnp.pad(p['hoi_vp_b'], ((0, 0), (0, hoi_pad - num_hoi_classes)))

    # Packed 1-row constants (fewer operands / DMA descriptors).
    hb_pack = jnp.concatenate(
        [p['hum_b1'], p['hum_b2'], p['obj_b1'], p['obj_b2']], axis=0)   # (4,h)
    ce_pack = jnp.concatenate(
        [p['obj_fc_b'], p['obj_ln_g'], p['obj_ln_b'],
         p['hoi_fc_b'], p['hoi_ln_g'], p['hoi_ln_b']], axis=0)          # (6,ce)

    # Flatten rows; bf16 decoder-state streams (halves HBM read traffic).
    h_flat = h_hs.reshape(R, hidden).astype(bf16)
    o_flat = o_hs.reshape(R, hidden).astype(bf16)
    i_flat = inter_hs.reshape(R, hidden).astype(bf16)
    ad_flat = jnp.broadcast_to(adapted_clip[None, :, None, :],
                               (L, B, Q, ce)).reshape(R, ce).astype(jnp.float32)

    weights = [p['hum_w1'].astype(bf16), p['hum_w2'].astype(bf16),
               hw3.astype(bf16),
               p['obj_w1'].astype(bf16), p['obj_w2'].astype(bf16),
               ow3.astype(bf16),
               hb_pack, bb3,
               p['obj_fc_w'].astype(bf16), ovp_w.astype(bf16),
               p['hoi_fc_w'].astype(bf16), ivp_w.astype(bf16),
               ce_pack, ovp_b, ivp_b]

    block_rows = _pick_row_block(R)
    n_tiles = _cdiv(R, block_rows)          # ragged last tile masked by Pallas

    row_spec = lambda d: pl.BlockSpec((block_rows, d), lambda i: (i, 0))
    full_spec = lambda a: pl.BlockSpec(a.shape,
                                       lambda i: tuple(0 for _ in a.shape))
    smem_spec = pl.BlockSpec(memory_space=pltpu.MemorySpace.SMEM)

    out_shapes = (
        jax.ShapeDtypeStruct((R, LANE), jnp.float32),     # merged boxes
        jax.ShapeDtypeStruct((R, obj_pad), jnp.float32),  # obj logits (padded)
        jax.ShapeDtypeStruct((R, hoi_pad), jnp.float32),  # hoi logits (padded)
        jax.ShapeDtypeStruct((R, ce), jnp.float32),       # inter memory
    )

    box, objcls, hoicls, inter = pl.pallas_call(
        _fused_heads_kernel,
        out_shape=out_shapes,
        grid=(n_tiles,),
        in_specs=[smem_spec,
                  row_spec(hidden), row_spec(hidden), row_spec(hidden),
                  row_spec(ce)]
                 + [full_spec(w) for w in weights],
        out_specs=[row_spec(LANE), row_spec(obj_pad),
                   row_spec(hoi_pad), row_spec(ce)],
        compiler_params=pltpu.CompilerParams(
            dimension_semantics=("parallel",)),
    )(scales, h_flat, o_flat, i_flat, ad_flat, *weights)

    box = box.reshape(L, B, Q, LANE)
    sub_coord = box[..., 0:4]
    obj_coord = box[..., BOX_OBJ_OFS:BOX_OBJ_OFS + 4]
    obj_logits = objcls.reshape(L, B, Q, obj_pad)[..., :num_obj_classes_p1]
    hoi_logits = hoicls.reshape(L, B, Q, hoi_pad)[..., :num_hoi_classes]
    inter_mem = inter.reshape(L, B, Q, ce)
    return sub_coord, obj_coord, obj_logits, hoi_logits, inter_mem


# ----------------------------------------------------------------------------
# Model (deterministic synthetic parameters)
# ----------------------------------------------------------------------------

class Cfg:
    batch = 2
    backbone_channels = 4        # backbone.num_channels
    H = W = 16                   # spatial size of the last backbone feature
    sd_channels = 16             # TODO(synk): real UNet feature has 1280 chans
    sd_H = sd_W = 8
    hidden = 32                  # transformer.d_model (256 in production)
    clip_embed = 32              # args.clip_embed_dim (512 in production)
    num_queries = 8
    dec_layers = 3
    num_hoi_classes = 16         # len(hoi_text)
    num_obj_classes_p1 = 12      # num_obj_classes + 1


def init_params(key, cfg):
    ks = iter(jax.random.split(key, 64))
    n = lambda shape, s=0.02: (s * jax.random.normal(next(ks), shape)
                               ).astype(jnp.float32)
    z = lambda shape: jnp.zeros(shape, jnp.float32)
    h, ce = cfg.hidden, cfg.clip_embed
    p = {
        # 1x1 convs
        'input_proj_w': n((h, cfg.backbone_channels)),
        'input_proj_b': z((h,)),
        'image_adapter_w': n((h, cfg.sd_channels)),
        'image_adapter_b': z((h,)),
        # query embeddings
        'query_embed_h': n((cfg.num_queries, h), 1.0),
        'query_embed_o': n((cfg.num_queries, h), 1.0),
        'pos_guided_embedd': jax.random.uniform(next(ks),
                                                (cfg.num_queries, h)),
        # clip adapter (Linear(clip_embed, clip_embed)), applied in XLA once
        'clip_adapter_w': n((ce, ce)), 'clip_adapter_b': z((ce,)),
        # bbox MLP heads (hidden -> hidden -> hidden -> 4)
        'hum_w1': n((h, h)), 'hum_b1': z((1, h)),
        'hum_w2': n((h, h)), 'hum_b2': z((1, h)),
        'hum_w3': n((h, 4)), 'hum_b3': z((1, 4)),
        'obj_w1': n((h, h)), 'obj_b1': z((1, h)),
        'obj_w2': n((h, h)), 'obj_b2': z((1, h)),
        'obj_w3': n((h, 4)), 'obj_b3': z((1, 4)),
        # obj classification head
        'obj_fc_w': n((h, ce)), 'obj_fc_b': z((1, ce)),
        'obj_ln_g': jnp.ones((1, ce), jnp.float32),
        'obj_ln_b': z((1, ce)),
        'obj_vp_b': z((1, cfg.num_obj_classes_p1)),
        # hoi classification head
        'hoi_fc_w': n((h, ce)), 'hoi_fc_b': z((1, ce)),
        'hoi_ln_g': jnp.ones((1, ce), jnp.float32),
        'hoi_ln_b': z((1, ce)),
        'hoi_vp_b': z((1, cfg.num_hoi_classes)),
        # logit scales
        'logit_scale': jnp.float32(math.log(1.0 / 0.07)),
        'obj_logit_scale': jnp.float32(math.log(1.0 / 0.07)),
    }
    # visual_projection weights initialised from (synthetic) CLIP text
    # embeddings, row-normalised as in the reference.
    hoi_lbl = jax.random.normal(next(ks), (cfg.num_hoi_classes, ce))
    hoi_lbl = hoi_lbl / jnp.linalg.norm(hoi_lbl, axis=-1, keepdims=True)
    obj_lbl = jax.random.normal(next(ks), (cfg.num_obj_classes_p1, ce))
    obj_lbl = obj_lbl / jnp.linalg.norm(obj_lbl, axis=-1, keepdims=True)
    p['hoi_vp_w'] = jnp.transpose(hoi_lbl).astype(jnp.float32)   # [ce, n_hoi]
    p['obj_vp_w'] = jnp.transpose(obj_lbl).astype(jnp.float32)   # [ce, n_obj]
    return p


def diffhoi_s_forward(params, cfg, src, sd_feat, target_clip_feats,
                      is_training=True, aux_loss=True, with_mimic=True):
    B, Q, L = cfg.batch, cfg.num_queries, cfg.dec_layers

    # input_proj: Cin=4 1x1 conv.  K=4 uses ~3% of one MXU pass and the
    # pallas_call launch cost exceeds the compute -> leave to XLA/VPU;
    # the Pallas conv is reserved for the big image_adapter.
    memory = (jnp.einsum('bchw,oc->bohw', src, params['input_proj_w'])
              + params['input_proj_b'][None, :, None, None])

    # image_adapter (the real-FLOP 1x1 conv: 1280 -> hidden in production),
    # transpose-free W @ X Pallas kernel, bf16 output (mem-bound op).
    sd_dec = conv1x1_pallas(sd_feat, params['image_adapter_w'],
                            params['image_adapter_b'])
    sd_dec = interpolate_nearest(sd_dec, src.shape[-2], src.shape[-1])

    # TODO(synk): backbone / CLIP encoders / SD VAE+UNet / HOI transformer are
    # external submodules; replaced by a deterministic pooled-query stub that
    # still consumes the projected memory + sd_decoder.
    pooled = jnp.mean(memory + sd_dec.astype(jnp.float32), axis=(2, 3))
    layer_scale = ((jnp.arange(L) + 1.0) / L)[:, None, None, None]
    mk = lambda q: layer_scale * (pooled[None, :, None, :] +
                                  q[None, None, :, :])             # [L,B,Q,h]
    h_hs = mk(params['query_embed_h'])
    o_hs = mk(params['query_embed_o'])
    inter_hs = mk(params['pos_guided_embedd'])

    # clip_adapter hoisted out of the kernel: one tiny [B,ce]x[ce,ce] matmul,
    # exactly as the reference computes it once before the heads.
    adapted_clip = (target_clip_feats @ params['clip_adapter_w']
                    + params['clip_adapter_b'][None, :])

    # logit scales -> (2,) f32 consumed from SMEM inside the fused kernel
    scales = jnp.exp(jnp.stack([params['obj_logit_scale'],
                                params['logit_scale']])).astype(jnp.float32)

    (sub_coord, obj_coord, obj_logits, hoi_logits, inter_mem) = \
        fused_prediction_heads(h_hs, o_hs, inter_hs, adapted_clip, scales,
                               params, cfg.num_obj_classes_p1,
                               cfg.num_hoi_classes)

    out = {'pred_hoi_logits': hoi_logits[-1],
           'pred_obj_logits': obj_logits[-1],
           'pred_sub_boxes': sub_coord[-1],
           'pred_obj_boxes': obj_coord[-1]}
    if is_training and with_mimic:
        out['inter_memory'] = inter_mem[-1]
    if aux_loss:
        aux = []
        for i in range(L - 1):
            a = {'pred_hoi_logits': hoi_logits[-L:-1][i],
                 'pred_obj_logits': obj_logits[-L:-1][i],
                 'pred_sub_boxes': sub_coord[-L:-1][i],
                 'pred_obj_boxes': obj_coord[-L:-1][i]}
            if with_mimic and is_training:
                a['inter_memory'] = inter_mem[-L:-1][i]
            aux.append(a)
        out['aux_outputs'] = aux
    return out


# ----------------------------------------------------------------------------
if __name__ == "__main__":
    cfg = Cfg()
    key = jax.random.PRNGKey(0)
    k_param, k_src, k_sd, k_clip = jax.random.split(key, 4)
    params = init_params(k_param, cfg)

    # Example inputs (small, deterministic)
    src = jax.random.normal(
        k_src, (cfg.batch, cfg.backbone_channels, cfg.H, cfg.W), jnp.float32)
    sd_feat = jax.random.normal(
        k_sd, (cfg.batch, cfg.sd_channels, cfg.sd_H, cfg.sd_W), jnp.float32)
    target_clip_feats = jax.random.normal(
        k_clip, (cfg.batch, cfg.clip_embed), jnp.float32)

    fwd = jax.jit(lambda prm, s, f, c: diffhoi_s_forward(
        prm, cfg, s, f, c, is_training=True, aux_loss=True, with_mimic=True))
    out = fwd(params, src, sd_feat, target_clip_feats)
    jax.block_until_ready(out)

    assert out['pred_hoi_logits'].shape == (cfg.batch, cfg.num_queries,
                                            cfg.num_hoi_classes)
    assert out['pred_obj_logits'].shape == (cfg.batch, cfg.num_queries,
                                            cfg.num_obj_classes_p1)
    assert out['pred_sub_boxes'].shape == (cfg.batch, cfg.num_queries, 4)
    assert out['pred_obj_boxes'].shape == (cfg.batch, cfg.num_queries, 4)
    assert out['inter_memory'].shape == (cfg.batch, cfg.num_queries,
                                         cfg.clip_embed)
    assert len(out['aux_outputs']) == cfg.dec_layers - 1
    assert bool(jnp.all(jnp.isfinite(out['pred_hoi_logits'])))
    print("KERNEL_OK")
</pallas_src>

<mosaic_0001>
module attributes {stable_mosaic.version = 11 : i64} {
  func.func @_conv1x1_kernel(%arg0: i32, %arg1: i32, %arg2: memref<1x16x64xbf16, #tpu.memory_space<vmem>>, %arg3: memref<32x16xbf16, #tpu.memory_space<vmem>>, %arg4: memref<32x1xf32, #tpu.memory_space<vmem>>, %arg5: memref<1x32x64xbf16, #tpu.memory_space<vmem>>) attributes {dimension_semantics = [#tpu.dimension_semantics<parallel>, #tpu.dimension_semantics<parallel>], iteration_bounds = array<i64: 2, 1>, scalar_prefetch = 0 : i64, scratch_operands = 0 : i64, tpu.core_type = #tpu.core_type<tc>, window_params = [{transform_indices = @transform_0, window_bounds = array<i64: 1, 16, 64>}, {pipeline_mode = #tpu.pipeline_mode<synchronous>, transform_indices = @transform_1, window_bounds = array<i64: 32, 16>}, {pipeline_mode = #tpu.pipeline_mode<synchronous>, transform_indices = @transform_2, window_bounds = array<i64: 32, 1>}, {transform_indices = @transform_3, window_bounds = array<i64: 1, 32, 64>}]} {
    %c0 = arith.constant 0 : index
    %c0_0 = arith.constant 0 : index
    %0 = vector.load %arg3[%c0, %c0_0] : memref<32x16xbf16, #tpu.memory_space<vmem>>, vector<32x16xbf16>
    %c0_1 = arith.constant 0 : index
    %c0_2 = arith.constant 0 : index
    %c0_3 = arith.constant 0 : index
    %1 = vector.load %arg2[%c0_1, %c0_2, %c0_3] : memref<1x16x64xbf16, #tpu.memory_space<vmem>>, vector<1x16x64xbf16>
    %2 = vector.shape_cast %1 : vector<1x16x64xbf16> to vector<16x64xbf16>
    %cst = arith.constant dense<0.000000e+00> : vector<32x64xf32>
    %3 = tpu.matmul %0, %2, %cst {dimension_numbers = #tpu.dot_dimension_numbers<[1], [0], [0], [1], [0, 0, 1, 1], [], []>} : vector<32x16xbf16>, vector<16x64xbf16>, vector<32x64xf32> -> vector<32x64xf32>
    %c0_4 = arith.constant 0 : index
    %c0_5 = arith.constant 0 : index
    %4 = vector.load %arg4[%c0_4, %c0_5] : memref<32x1xf32, #tpu.memory_space<vmem>>, vector<32x1xf32>
    %5 = vector.broadcast %4 : vector<32x1xf32> to vector<32x64xf32>
    %6 = arith.addf %3, %5 : vector<32x64xf32>
    %7 = arith.truncf %6 : vector<32x64xf32> to vector<32x64xbf16>
    %c0_6 = arith.constant 0 : index
    %c0_7 = arith.constant 0 : index
    %c0_8 = arith.constant 0 : index
    %8 = vector.load %arg5[%c0_6, %c0_7, %c0_8] : memref<1x32x64xbf16, #tpu.memory_space<vmem>>, vector<1x32x64xbf16>
    %9 = vector.shape_cast %8 : vector<1x32x64xbf16> to vector<32x64xbf16>
    %10 = vector.shape_cast %7 : vector<32x64xbf16> to vector<1x32x64xbf16>
    tpu.vector_store %arg5[%c0_6, %c0_7, %c0_8], %10 {strides = array<i32>} : memref<1x32x64xbf16, #tpu.memory_space<vmem>>, vector<1x32x64xbf16>,
    return
  }
  func.func @transform_0(%arg0: i32, %arg1: i32) -> (i32, i32, i32) {
    %c0_i32 = arith.constant 0 : i32
    %c0_i32_0 = arith.constant 0 : i32
    return %arg0, %c0_i32, %arg1 : i32, i32, i32
  }
  func.func @transform_1(%arg0: i32, %arg1: i32) -> (i32, i32) {
    %c0_i32 = arith.constant 0 : i32
    %c0_i32_0 = arith.constant 0 : i32
    %c0_i32_1 = arith.constant 0 : i32
    return %c0_i32, %c0_i32_0 : i32, i32
  }
  func.func @transform_2(%arg0: i32, %arg1: i32) -> (i32, i32) {
    %c0_i32 = arith.constant 0 : i32
    %c0_i32_0 = arith.constant 0 : i32
    %c0_i32_1 = arith.constant 0 : i32
    return %c0_i32, %c0_i32_0 : i32, i32
  }
  func.func @transform_3(%arg0: i32, %arg1: i32) -> (i32, i32, i32) {
    %c0_i32 = arith.constant 0 : i32
    %c0_i32_0 = arith.constant 0 : i32
    return %arg0, %c0_i32, %arg1 : i32, i32, i32
  }
}

module attributes {stable_mosaic.version = 11 : i64} {
  func.func @_fused_heads_kernel(%arg0: i32, %arg1: memref<2xf32, #tpu.memory_space<smem>>, %arg2: memref<32x32xbf16, #tpu.memory_space<vmem>>, %arg3: memref<32x32xbf16, #tpu.memory_space<vmem>>, %arg4: memref<32x32xbf16, #tpu.memory_space<vmem>>, %arg5: memref<32x32xf32, #tpu.memory_space<vmem>>, %arg6: memref<32x32xbf16, #tpu.memory_space<vmem>>, %arg7: memref<32x32xbf16, #tpu.memory_space<vmem>>, %arg8: memref<32x128xbf16, #tpu.memory_space<vmem>>, %arg9: memref<32x32xbf16, #tpu.memory_space<vmem>>, %arg10: memref<32x32xbf16, #tpu.memory_space<vmem>>, %arg11: memref<32x128xbf16, #tpu.memory_space<vmem>>, %arg12: memref<4x32xf32, #tpu.memory_space<vmem>>, %arg13: memref<1x128xf32, #tpu.memory_space<vmem>>, %arg14: memref<32x32xbf16, #tpu.memory_space<vmem>>, %arg15: memref<32x128xbf16, #tpu.memory_space<vmem>>, %arg16: memref<32x32xbf16, #tpu.memory_space<vmem>>, %arg17: memref<32x128xbf16, #tpu.memory_space<vmem>>, %arg18: memref<6x32xf32, #tpu.memory_space<vmem>>, %arg19: memref<1x128xf32, #tpu.memory_space<vmem>>, %arg20: memref<1x128xf32, #tpu.memory_space<vmem>>, %arg21: memref<32x128xf32, #tpu.memory_space<vmem>>, %arg22: memref<32x128xf32, #tpu.memory_space<vmem>>, %arg23: memref<32x128xf32, #tpu.memory_space<vmem>>, %arg24: memref<32x32xf32, #tpu.memory_space<vmem>>) attributes {dimension_semantics = [#tpu.dimension_semantics<parallel>], iteration_bounds = array<i64: 2>, scalar_prefetch = 0 : i64, scratch_operands = 0 : i64, tpu.core_type = #tpu.core_type<tc>, window_params = [{transform_indices = @transform_0, window_bounds = array<i64: 2>}, {transform_indices = @transform_1, window_bounds = array<i64: 32, 32>}, {transform_indices = @transform_2, window_bounds = array<i64: 32, 32>}, {transform_indices = @transform_3, window_bounds = array<i64: 32, 32>}, {transform_indices = @transform_4, window_bounds = array<i64: 32, 32>}, {pipeline_mode = #tpu.pipeline_mode<synchronous>, transform_indices = @transform_5, window_bounds = array<i64: 32, 32>}, {pipeline_mode = #tpu.pipeline_mode<synchronous>, transform_indices = @transform_6, window_bounds = array<i64: 32, 32>}, {pipeline_mode = #tpu.pipeline_mode<synchronous>, transform_indices = @transform_7, window_bounds = array<i64: 32, 128>}, {pipeline_mode = #tpu.pipeline_mode<synchronous>, transform_indices = @transform_8, window_bounds = array<i64: 32, 32>}, {pipeline_mode = #tpu.pipeline_mode<synchronous>, transform_indices = @transform_9, window_bounds = array<i64: 32, 32>}, {pipeline_mode = #tpu.pipeline_mode<synchronous>, transform_indices = @transform_10, window_bounds = array<i64: 32, 128>}, {pipeline_mode = #tpu.pipeline_mode<synchronous>, transform_indices = @transform_11, window_bounds = array<i64: 4, 32>}, {pipeline_mode = #tpu.pipeline_mode<synchronous>, transform_indices = @transform_12, window_bounds = array<i64: 1, 128>}, {pipeline_mode = #tpu.pipeline_mode<synchronous>, transform_indices = @transform_13, window_bounds = array<i64: 32, 32>}, {pipeline_mode = #tpu.pipeline_mode<synchronous>, transform_indices = @transform_14, window_bounds = array<i64: 32, 128>}, {pipeline_mode = #tpu.pipeline_mode<synchronous>, transform_indices = @transform_15, window_bounds = array<i64: 32, 32>}, {pipeline_mode = #tpu.pipeline_mode<synchronous>, transform_indices = @transform_16, window_bounds = array<i64: 32, 128>}, {pipeline_mode = #tpu.pipeline_mode<synchronous>, transform_indices = @transform_17, window_bounds = array<i64: 6, 32>}, {pipeline_mode = #tpu.pipeline_mode<synchronous>, transform_indices = @transform_18, window_bounds = array<i64: 1, 128>}, {pipeline_mode = #tpu.pipeline_mode<synchronous>, transform_indices = @transform_19, window_bounds = array<i64: 1, 128>}, {transform_indices = @transform_20, window_bounds = array<i64: 32, 128>}, {transform_indices = @transform_21, window_bounds = array<i64: 32, 128>}, {transform_indices = @transform_22, window_bounds = array<i64: 32, 128>}, {transform_indices = @transform_23, window_bounds = array<i64: 32, 32>}]} {
    %c0 = arith.constant 0 : index
    %c0_0 = arith.constant 0 : index
    %0 = vector.load %arg2[%c0, %c0_0] : memref<32x32xbf16, #tpu.memory_space<vmem>>, vector<32x32xbf16>
    %c0_1 = arith.constant 0 : index
    %c0_2 = arith.constant 0 : index
    %1 = vector.load %arg3[%c0_1, %c0_2] : memref<32x32xbf16, #tpu.memory_space<vmem>>, vector<32x32xbf16>
    %c0_3 = arith.constant 0 : index
    %c0_4 = arith.constant 0 : index
    %2 = vector.load %arg4[%c0_3, %c0_4] : memref<32x32xbf16, #tpu.memory_space<vmem>>, vector<32x32xbf16>
    %c0_5 = arith.constant 0 : index
    %c0_6 = arith.constant 0 : index
    %3 = vector.load %arg12[%c0_5, %c0_6] : memref<4x32xf32, #tpu.memory_space<vmem>>, vector<1x32xf32>
    %c0_7 = arith.constant 0 : index
    %c0_8 = arith.constant 0 : index
    %4 = vector.load %arg6[%c0_7, %c0_8] : memref<32x32xbf16, #tpu.memory_space<vmem>>, vector<32x32xbf16>
    %cst = arith.constant dense<0.000000e+00> : vector<32x32xf32>
    %5 = tpu.matmul %0, %4, %cst {dimension_numbers = #tpu.dot_dimension_numbers<[1], [0], [0], [1], [0, 0, 1, 1], [], []>} : vector<32x32xbf16>, vector<32x32xbf16>, vector<32x32xf32> -> vector<32x32xf32>
    %6 = vector.broadcast %3 : vector<1x32xf32> to vector<32x32xf32>
    %7 = arith.addf %5, %6 : vector<32x32xf32>
    %cst_9 = arith.constant 0.000000e+00 : f32
    %8 = vector.broadcast %cst_9 : f32 to vector<32x32xf32>
    %9 = arith.maximumf %7, %8 : vector<32x32xf32>
    %10 = arith.truncf %9 : vector<32x32xf32> to vector<32x32xbf16>
    %c1 = arith.constant 1 : index
    %c0_10 = arith.constant 0 : index
    %11 = vector.load %arg12[%c1, %c0_10] : memref<4x32xf32, #tpu.memory_space<vmem>>, vector<1x32xf32>
    %c0_11 = arith.constant 0 : index
    %c0_12 = arith.constant 0 : index
    %12 = vector.load %arg7[%c0_11, %c0_12] : memref<32x32xbf16, #tpu.memory_space<vmem>>, vector<32x32xbf16>
    %cst_13 = arith.constant dense<0.000000e+00> : vector<32x32xf32>
    %13 = tpu.matmul %10, %12, %cst_13 {dimension_numbers = #tpu.dot_dimension_numbers<[1], [0], [0], [1], [0, 0, 1, 1], [], []>} : vector<32x32xbf16>, vector<32x32xbf16>, vector<32x32xf32> -> vector<32x32xf32>
    %14 = vector.broadcast %11 : vector<1x32xf32> to vector<32x32xf32>
    %15 = arith.addf %13, %14 : vector<32x32xf32>
    %cst_14 = arith.constant 0.000000e+00 : f32
    %16 = vector.broadcast %cst_14 : f32 to vector<32x32xf32>
    %17 = arith.maximumf %15, %16 : vector<32x32xf32>
    %18 = arith.truncf %17 : vector<32x32xf32> to vector<32x32xbf16>
    %c2 = arith.constant 2 : index
    %c0_15 = arith.constant 0 : index
    %19 = vector.load %arg12[%c2, %c0_15] : memref<4x32xf32, #tpu.memory_space<vmem>>, vector<1x32xf32>
    %c0_16 = arith.constant 0 : index
    %c0_17 = arith.constant 0 : index
    %20 = vector.load %arg9[%c0_16, %c0_17] : memref<32x32xbf16, #tpu.memory_space<vmem>>, vector<32x32xbf16>
    %cst_18 = arith.constant dense<0.000000e+00> : vector<32x32xf32>
    %21 = tpu.matmul %1, %20, %cst_18 {dimension_numbers = #tpu.dot_dimension_numbers<[1], [0], [0], [1], [0, 0, 1, 1], [], []>} : vector<32x32xbf16>, vector<32x32xbf16>, vector<32x32xf32> -> vector<32x32xf32>
    %22 = vector.broadcast %19 : vector<1x32xf32> to vector<32x32xf32>
    %23 = arith.addf %21, %22 : vector<32x32xf32>
    %cst_19 = arith.constant 0.000000e+00 : f32
    %24 = vector.broadcast %cst_19 : f32 to vector<32x32xf32>
    %25 = arith.maximumf %23, %24 : vector<32x32xf32>
    %26 = arith.truncf %25 : vector<32x32xf32> to vector<32x32xbf16>
    %c3 = arith.constant 3 : index
    %c0_20 = arith.constant 0 : index
    %27 = vector.load %arg12[%c3, %c0_20] : memref<4x32xf32, #tpu.memory_space<vmem>>, vector<1x32xf32>
    %c0_21 = arith.constant 0 : index
    %c0_22 = arith.constant 0 : index
    %28 = vector.load %arg10[%c0_21, %c0_22] : memref<32x32xbf16, #tpu.memory_space<vmem>>, vector<32x32xbf16>
    %cst_23 = arith.constant dense<0.000000e+00> : vector<32x32xf32>
    %29 = tpu.matmul %26, %28, %cst_23 {dimension_numbers = #tpu.dot_dimension_numbers<[1], [0], [0], [1], [0, 0, 1, 1], [], []>} : vector<32x32xbf16>, vector<32x32xbf16>, vector<32x32xf32> -> vector<32x32xf32>
    %30 = vector.broadcast %27 : vector<1x32xf32> to vector<32x32xf32>
    %31 = arith.addf %29, %30 : vector<32x32xf32>
    %cst_24 = arith.constant 0.000000e+00 : f32
    %32 = vector.broadcast %cst_24 : f32 to vector<32x32xf32>
    %33 = arith.maximumf %31, %32 : vector<32x32xf32>
    %34 = arith.truncf %33 : vector<32x32xf32> to vector<32x32xbf16>
    %c0_25 = arith.constant 0 : index
    %c0_26 = arith.constant 0 : index
    %35 = vector.load %arg8[%c0_25, %c0_26] : memref<32x128xbf16, #tpu.memory_space<vmem>>, vector<32x128xbf16>
    %cst_27 = arith.constant dense<0.000000e+00> : vector<32x128xf32>
    %36 = tpu.matmul %18, %35, %cst_27 {dimension_numbers = #tpu.dot_dimension_numbers<[1], [0], [0], [1], [0, 0, 1, 1], [], []>} : vector<32x32xbf16>, vector<32x128xbf16>, vector<32x128xf32> -> vector<32x128xf32>
    %c0_28 = arith.constant 0 : index
    %c0_29 = arith.constant 0 : index
    %37 = vector.load %arg11[%c0_28, %c0_29] : memref<32x128xbf16, #tpu.memory_space<vmem>>, vector<32x128xbf16>
    %cst_30 = arith.constant dense<0.000000e+00> : vector<32x128xf32>
    %38 = tpu.matmul %34, %37, %cst_30 {dimension_numbers = #tpu.dot_dimension_numbers<[1], [0], [0], [1], [0, 0, 1, 1], [], []>} : vector<32x32xbf16>, vector<32x128xbf16>, vector<32x128xf32> -> vector<32x128xf32>
    %39 = arith.addf %36, %38 : vector<32x128xf32>
    %c0_31 = arith.constant 0 : index
    %c0_32 = arith.constant 0 : index
    %40 = vector.load %arg13[%c0_31, %c0_32] : memref<1x128xf32, #tpu.memory_space<vmem>>, vector<1x128xf32>
    %41 = vector.broadcast %40 : vector<1x128xf32> to vector<32x128xf32>
    %42 = arith.addf %39, %41 : vector<32x128xf32>
    %43 = arith.negf %42 : vector<32x128xf32>
    %44 = math.exp %43 : vector<32x128xf32>
    %cst_33 = arith.constant 1.000000e+00 : f32
    %45 = vector.broadcast %cst_33 : f32 to vector<32x128xf32>
    %46 = arith.addf %45, %44 : vector<32x128xf32>
    %47 = arith.divf %45, %46 : vector<32x128xf32>
    %c0_34 = arith.constant 0 : index
    %c0_35 = arith.constant 0 : index
    %48 = vector.load %arg21[%c0_34, %c0_35] : memref<32x128xf32, #tpu.memory_space<vmem>>, vector<32x128xf32>
    tpu.vector_store %arg21[%c0_34, %c0_35], %47 {strides = array<i32>} : memref<32x128xf32, #tpu.memory_space<vmem>>, vector<32x128xf32>,
    %c0_36 = arith.constant 0 : index
    %c0_37 = arith.constant 0 : index
    %49 = vector.load %arg14[%c0_36, %c0_37] : memref<32x32xbf16, #tpu.memory_space<vmem>>, vector<32x32xbf16>
    %cst_38 = arith.constant dense<0.000000e+00> : vector<32x32xf32>
    %50 = tpu.matmul %1, %49, %cst_38 {dimension_numbers = #tpu.dot_dimension_numbers<[1], [0], [0], [1], [0, 0, 1, 1], [], []>} : vector<32x32xbf16>, vector<32x32xbf16>, vector<32x32xf32> -> vector<32x32xf32>
    %c0_39 = arith.constant 0 : index
    %c0_40 = arith.constant 0 : index
    %51 = vector.load %arg18[%c0_39, %c0_40] : memref<6x32xf32, #tpu.memory_space<vmem>>, vector<1x32xf32>
    %52 = vector.broadcast %51 : vector<1x32xf32> to vector<32x32xf32>
    %53 = arith.addf %50, %52 : vector<32x32xf32>
    %c1_41 = arith.constant 1 : index
    %c0_42 = arith.constant 0 : index
    %54 = vector.load %arg18[%c1_41, %c0_42] : memref<6x32xf32, #tpu.memory_space<vmem>>, vector<1x32xf32>
    %c2_43 = arith.constant 2 : index
    %c0_44 = arith.constant 0 : index
    %55 = vector.load %arg18[%c2_43, %c0_44] : memref<6x32xf32, #tpu.memory_space<vmem>>, vector<1x32xf32>
    %cst_45 = arith.constant dense<0.000000e+00> : vector<32xf32>
    %56 = vector.multi_reduction <add>, %53, %cst_45 [1] : vector<32x32xf32> to vector<32xf32>
    %57 = vector.shape_cast %56 : vector<32xf32> to vector<32x1xf32>
    %cst_46 = arith.constant 3.200000e+01 : f32
    %58 = vector.broadcast %cst_46 : f32 to vector<32x1xf32>
    %59 = arith.divf %57, %58 : vector<32x1xf32>
    %60 = vector.broadcast %59 : vector<32x1xf32> to vector<32x32xf32>
    %61 = arith.subf %53, %60 : vector<32x32xf32>
    %62 = vector.broadcast %59 : vector<32x1xf32> to vector<32x32xf32>
    %63 = arith.subf %53, %62 : vector<32x32xf32>
    %64 = arith.mulf %61, %63 : vector<32x32xf32>
    %cst_47 = arith.constant dense<0.000000e+00> : vector<32xf32>
    %65 = vector.multi_reduction <add>, %64, %cst_47 [1] : vector<32x32xf32> to vector<32xf32>
    %66 = vector.shape_cast %65 : vector<32xf32> to vector<32x1xf32>
    %cst_48 = arith.constant 3.200000e+01 : f32
    %67 = vector.broadcast %cst_48 : f32 to vector<32x1xf32>
    %68 = arith.divf %66, %67 : vector<32x1xf32>
    %69 = vector.broadcast %59 : vector<32x1xf32> to vector<32x32xf32>
    %70 = arith.subf %53, %69 : vector<32x32xf32>
    %cst_49 = arith.constant 9.99999974E-6 : f32
    %71 = vector.broadcast %cst_49 : f32 to vector<32x1xf32>
    %72 = arith.addf %68, %71 : vector<32x1xf32>
    %73 = math.rsqrt %72 : vector<32x1xf32>
    %74 = vector.broadcast %73 : vector<32x1xf32> to vector<32x32xf32>
    %75 = arith.mulf %70, %74 : vector<32x32xf32>
    %76 = vector.broadcast %54 : vector<1x32xf32> to vector<32x32xf32>
    %77 = arith.mulf %75, %76 : vector<32x32xf32>
    %78 = vector.broadcast %55 : vector<1x32xf32> to vector<32x32xf32>
    %79 = arith.addf %77, %78 : vector<32x32xf32>
    %80 = arith.mulf %79, %79 : vector<32x32xf32>
    %cst_50 = arith.constant dense<0.000000e+00> : vector<32xf32>
    %81 = vector.multi_reduction <add>, %80, %cst_50 [1] : vector<32x32xf32> to vector<32xf32>
    %82 = vector.shape_cast %81 : vector<32xf32> to vector<32x1xf32>
    %cst_51 = arith.constant 9.99999996E-13 : f32
    %83 = vector.broadcast %cst_51 : f32 to vector<32x1xf32>
    %84 = arith.addf %82, %83 : vector<32x1xf32>
    %85 = math.rsqrt %84 : vector<32x1xf32>
    %86 = vector.broadcast %85 : vector<32x1xf32> to vector<32x32xf32>
    %87 = arith.mulf %79, %86 : vector<32x32xf32>
    %88 = arith.truncf %87 : vector<32x32xf32> to vector<32x32xbf16>
    %c0_52 = arith.constant 0 : index
    %89 = memref.load %arg1[%c0_52] : memref<2xf32, #tpu.memory_space<smem>>
    %c0_53 = arith.constant 0 : index
    %c0_54 = arith.constant 0 : index
    %90 = vector.load %arg15[%c0_53, %c0_54] : memref<32x128xbf16, #tpu.memory_space<vmem>>, vector<32x128xbf16>
    %cst_55 = arith.constant dense<0.000000e+00> : vector<32x128xf32>
    %91 = tpu.matmul %88, %90, %cst_55 {dimension_numbers = #tpu.dot_dimension_numbers<[1], [0], [0], [1], [0, 0, 1, 1], [], []>} : vector<32x32xbf16>, vector<32x128xbf16>, vector<32x128xf32> -> vector<32x128xf32>
    %c0_56 = arith.constant 0 : index
    %c0_57 = arith.constant 0 : index
    %92 = vector.load %arg19[%c0_56, %c0_57] : memref<1x128xf32, #tpu.memory_space<vmem>>, vector<1x128xf32>
    %93 = vector.broadcast %92 : vector<1x128xf32> to vector<32x128xf32>
    %94 = arith.addf %91, %93 : vector<32x128xf32>
    %95 = vector.broadcast %89 : f32 to vector<32x128xf32>
    %96 = arith.mulf %95, %94 : vector<32x128xf32>
    %c0_58 = arith.constant 0 : index
    %c0_59 = arith.constant 0 : index
    %97 = vector.load %arg22[%c0_58, %c0_59] : memref<32x128xf32, #tpu.memory_space<vmem>>, vector<32x128xf32>
    tpu.vector_store %arg22[%c0_58, %c0_59], %96 {strides = array<i32>} : memref<32x128xf32, #tpu.memory_space<vmem>>, vector<32x128xf32>,
    %c0_60 = arith.constant 0 : index
    %c0_61 = arith.constant 0 : index
    %98 = vector.load %arg16[%c0_60, %c0_61] : memref<32x32xbf16, #tpu.memory_space<vmem>>, vector<32x32xbf16>
    %cst_62 = arith.constant dense<0.000000e+00> : vector<32x32xf32>
    %99 = tpu.matmul %2, %98, %cst_62 {dimension_numbers = #tpu.dot_dimension_numbers<[1], [0], [0], [1], [0, 0, 1, 1], [], []>} : vector<32x32xbf16>, vector<32x32xbf16>, vector<32x32xf32> -> vector<32x32xf32>
    %c3_63 = arith.constant 3 : index
    %c0_64 = arith.constant 0 : index
    %100 = vector.load %arg18[%c3_63, %c0_64] : memref<6x32xf32, #tpu.memory_space<vmem>>, vector<1x32xf32>
    %101 = vector.broadcast %100 : vector<1x32xf32> to vector<32x32xf32>
    %102 = arith.addf %99, %101 : vector<32x32xf32>
    %c4 = arith.constant 4 : index
    %c0_65 = arith.constant 0 : index
    %103 = vector.load %arg18[%c4, %c0_65] : memref<6x32xf32, #tpu.memory_space<vmem>>, vector<1x32xf32>
    %c5 = arith.constant 5 : index
    %c0_66 = arith.constant 0 : index
    %104 = vector.load %arg18[%c5, %c0_66] : memref<6x32xf32, #tpu.memory_space<vmem>>, vector<1x32xf32>
    %cst_67 = arith.constant dense<0.000000e+00> : vector<32xf32>
    %105 = vector.multi_reduction <add>, %102, %cst_67 [1] : vector<32x32xf32> to vector<32xf32>
    %106 = vector.shape_cast %105 : vector<32xf32> to vector<32x1xf32>
    %cst_68 = arith.constant 3.200000e+01 : f32
    %107 = vector.broadcast %cst_68 : f32 to vector<32x1xf32>
    %108 = arith.divf %106, %107 : vector<32x1xf32>
    %109 = vector.broadcast %108 : vector<32x1xf32> to vector<32x32xf32>
    %110 = arith.subf %102, %109 : vector<32x32xf32>
    %111 = vector.broadcast %108 : vector<32x1xf32> to vector<32x32xf32>
    %112 = arith.subf %102, %111 : vector<32x32xf32>
    %113 = arith.mulf %110, %112 : vector<32x32xf32>
    %cst_69 = arith.constant dense<0.000000e+00> : vector<32xf32>
    %114 = vector.multi_reduction <add>, %113, %cst_69 [1] : vector<32x32xf32> to vector<32xf32>
    %115 = vector.shape_cast %114 : vector<32xf32> to vector<32x1xf32>
    %cst_70 = arith.constant 3.200000e+01 : f32
    %116 = vector.broadcast %cst_70 : f32 to vector<32x1xf32>
    %117 = arith.divf %115, %116 : vector<32x1xf32>
    %118 = vector.broadcast %108 : vector<32x1xf32> to vector<32x32xf32>
    %119 = arith.subf %102, %118 : vector<32x32xf32>
    %cst_71 = arith.constant 9.99999974E-6 : f32
    %120 = vector.broadcast %cst_71 : f32 to vector<32x1xf32>
    %121 = arith.addf %117, %120 : vector<32x1xf32>
    %122 = math.rsqrt %121 : vector<32x1xf32>
    %123 = vector.broadcast %122 : vector<32x1xf32> to vector<32x32xf32>
    %124 = arith.mulf %119, %123 : vector<32x32xf32>
    %125 = vector.broadcast %103 : vector<1x32xf32> to vector<32x32xf32>
    %126 = arith.mulf %124, %125 : vector<32x32xf32>
    %127 = vector.broadcast %104 : vector<1x32xf32> to vector<32x32xf32>
    %128 = arith.addf %126, %127 : vector<32x32xf32>
    %c0_72 = arith.constant 0 : index
    %c0_73 = arith.constant 0 : index
    %129 = vector.load %arg24[%c0_72, %c0_73] : memref<32x32xf32, #tpu.memory_space<vmem>>, vector<32x32xf32>
    tpu.vector_store %arg24[%c0_72, %c0_73], %128 {strides = array<i32>} : memref<32x32xf32, #tpu.memory_space<vmem>>, vector<32x32xf32>,
    %c0_74 = arith.constant 0 : index
    %c0_75 = arith.constant 0 : index
    %130 = vector.load %arg5[%c0_74, %c0_75] : memref<32x32xf32, #tpu.memory_space<vmem>>, vector<32x32xf32>
    %131 = arith.addf %128, %130 : vector<32x32xf32>
    %132 = arith.mulf %131, %131 : vector<32x32xf32>
    %cst_76 = arith.constant dense<0.000000e+00> : vector<32xf32>
    %133 = vector.multi_reduction <add>, %132, %cst_76 [1] : vector<32x32xf32> to vector<32xf32>
    %134 = vector.shape_cast %133 : vector<32xf32> to vector<32x1xf32>
    %cst_77 = arith.constant 9.99999996E-13 : f32
    %135 = vector.broadcast %cst_77 : f32 to vector<32x1xf32>
    %136 = arith.addf %134, %135 : vector<32x1xf32>
    %137 = math.rsqrt %136 : vector<32x1xf32>
    %138 = vector.broadcast %137 : vector<32x1xf32> to vector<32x32xf32>
    %139 = arith.mulf %131, %138 : vector<32x32xf32>
    %140 = arith.truncf %139 : vector<32x32xf32> to vector<32x32xbf16>
    %c1_78 = arith.constant 1 : index
    %141 = memref.load %arg1[%c1_78] : memref<2xf32, #tpu.memory_space<smem>>
    %c0_79 = arith.constant 0 : index
    %c0_80 = arith.constant 0 : index
    %142 = vector.load %arg17[%c0_79, %c0_80] : memref<32x128xbf16, #tpu.memory_space<vmem>>, vector<32x128xbf16>
    %cst_81 = arith.constant dense<0.000000e+00> : vector<32x128xf32>
    %143 = tpu.matmul %140, %142, %cst_81 {dimension_numbers = #tpu.dot_dimension_numbers<[1], [0], [0], [1], [0, 0, 1, 1], [], []>} : vector<32x32xbf16>, vector<32x128xbf16>, vector<32x128xf32> -> vector<32x128xf32>
    %c0_82 = arith.constant 0 : index
    %c0_83 = arith.constant 0 : index
    %144 = vector.load %arg20[%c0_82, %c0_83] : memref<1x128xf32, #tpu.memory_space<vmem>>, vector<1x128xf32>
    %145 = vector.broadcast %144 : vector<1x128xf32> to vector<32x128xf32>
    %146 = arith.addf %143, %145 : vector<32x128xf32>
    %147 = vector.broadcast %141 : f32 to vector<32x128xf32>
    %148 = arith.mulf %147, %146 : vector<32x128xf32>
    %c0_84 = arith.constant 0 : index
    %c0_85 = arith.constant 0 : index
    %149 = vector.load %arg23[%c0_84, %c0_85] : memref<32x128xf32, #tpu.memory_space<vmem>>, vector<32x128xf32>
    tpu.vector_store %arg23[%c0_84, %c0_85], %148 {strides = array<i32>} : memref<32x128xf32, #tpu.memory_space<vmem>>, vector<32x128xf32>,
    return
  }
  func.func @transform_0(%arg0: i32) -> i32 {
    %c0_i32 = arith.constant 0 : i32
    %c0_i32_0 = arith.constant 0 : i32
    return %c0_i32 : i32
  }
  func.func @transform_1(%arg0: i32) -> (i32, i32) {
    %c0_i32 = arith.constant 0 : i32
    %c0_i32_0 = arith.constant 0 : i32
    return %arg0, %c0_i32 : i32, i32
  }
  func.func @transform_2(%arg0: i32) -> (i32, i32) {
    %c0_i32 = arith.constant 0 : i32
    %c0_i32_0 = arith.constant 0 : i32
    return %arg0, %c0_i32 : i32, i32
  }
  func.func @transform_3(%arg0: i32) -> (i32, i32) {
    %c0_i32 = arith.constant 0 : i32
    %c0_i32_0 = arith.constant 0 : i32
    return %arg0, %c0_i32 : i32, i32
  }
  func.func @transform_4(%arg0: i32) -> (i32, i32) {
    %c0_i32 = arith.constant 0 : i32
    %c0_i32_0 = arith.constant 0 : i32
    return %arg0, %c0_i32 : i32, i32
  }
  func.func @transform_5(%arg0: i32) -> (i32, i32) {
    %c0_i32 = arith.constant 0 : i32
    %c0_i32_0 = arith.constant 0 : i32
    %c0_i32_1 = arith.constant 0 : i32
    return %c0_i32, %c0_i32_0 : i32, i32
  }
  func.func @transform_6(%arg0: i32) -> (i32, i32) {
    %c0_i32 = arith.constant 0 : i32
    %c0_i32_0 = arith.constant 0 : i32
    %c0_i32_1 = arith.constant 0 : i32
    return %c0_i32, %c0_i32_0 : i32, i32
  }
  func.func @transform_7(%arg0: i32) -> (i32, i32) {
    %c0_i32 = arith.constant 0 : i32
    %c0_i32_0 = arith.constant 0 : i32
    %c0_i32_1 = arith.constant 0 : i32
    return %c0_i32, %c0_i32_0 : i32, i32
  }
  func.func @transform_8(%arg0: i32) -> (i32, i32) {
    %c0_i32 = arith.constant 0 : i32
    %c0_i32_0 = arith.constant 0 : i32
    %c0_i32_1 = arith.constant 0 : i32
    return %c0_i32, %c0_i32_0 : i32, i32
  }
  func.func @transform_9(%arg0: i32) -> (i32, i32) {
    %c0_i32 = arith.constant 0 : i32
    %c0_i32_0 = arith.constant 0 : i32
    %c0_i32_1 = arith.constant 0 : i32
    return %c0_i32, %c0_i32_0 : i32, i32
  }
  func.func @transform_10(%arg0: i32) -> (i32, i32) {
    %c0_i32 = arith.constant 0 : i32
    %c0_i32_0 = arith.constant 0 : i32
    %c0_i32_1 = arith.constant 0 : i32
    return %c0_i32, %c0_i32_0 : i32, i32
  }
  func.func @transform_11(%arg0: i32) -> (i32, i32) {
    %c0_i32 = arith.constant 0 : i32
    %c0_i32_0 = arith.constant 0 : i32
    %c0_i32_1 = arith.constant 0 : i32
    return %c0_i32, %c0_i32_0 : i32, i32
  }
  func.func @transform_12(%arg0: i32) -> (i32, i32) {
    %c0_i32 = arith.constant 0 : i32
    %c0_i32_0 = arith.constant 0 : i32
    %c0_i32_1 = arith.constant 0 : i32
    return %c0_i32, %c0_i32_0 : i32, i32
  }
  func.func @transform_13(%arg0: i32) -> (i32, i32) {
    %c0_i32 = arith.constant 0 : i32
    %c0_i32_0 = arith.constant 0 : i32
    %c0_i32_1 = arith.constant 0 : i32
    return %c0_i32, %c0_i32_0 : i32, i32
  }
  func.func @transform_14(%arg0: i32) -> (i32, i32) {
    %c0_i32 = arith.constant 0 : i32
    %c0_i32_0 = arith.constant 0 : i32
    %c0_i32_1 = arith.constant 0 : i32
    return %c0_i32, %c0_i32_0 : i32, i32
  }
  func.func @transform_15(%arg0: i32) -> (i32, i32) {
    %c0_i32 = arith.constant 0 : i32
    %c0_i32_0 = arith.constant 0 : i32
    %c0_i32_1 = arith.constant 0 : i32
    return %c0_i32, %c0_i32_0 : i32, i32
  }
  func.func @transform_16(%arg0: i32) -> (i32, i32) {
    %c0_i32 = arith.constant 0 : i32
    %c0_i32_0 = arith.constant 0 : i32
    %c0_i32_1 = arith.constant 0 : i32
    return %c0_i32, %c0_i32_0 : i32, i32
  }
  func.func @transform_17(%arg0: i32) -> (i32, i32) {
    %c0_i32 = arith.constant 0 : i32
    %c0_i32_0 = arith.constant 0 : i32
    %c0_i32_1 = arith.constant 0 : i32
    return %c0_i32, %c0_i32_0 : i32, i32
  }
  func.func @transform_18(%arg0: i32) -> (i32, i32) {
    %c0_i32 = arith.constant 0 : i32
    %c0_i32_0 = arith.constant 0 : i32
    %c0_i32_1 = arith.constant 0 : i32
    return %c0_i32, %c0_i32_0 : i32, i32
  }
  func.func @transform_19(%arg0: i32) -> (i32, i32) {
    %c0_i32 = arith.constant 0 : i32
    %c0_i32_0 = arith.constant 0 : i32
    %c0_i32_1 = arith.constant 0 : i32
    return %c0_i32, %c0_i32_0 : i32, i32
  }
  func.func @transform_20(%arg0: i32) -> (i32, i32) {
    %c0_i32 = arith.constant 0 : i32
    %c0_i32_0 = arith.constant 0 : i32
    return %arg0, %c0_i32 : i32, i32
  }
  func.func @transform_21(%arg0: i32) -> (i32, i32) {
    %c0_i32 = arith.constant 0 : i32
    %c0_i32_0 = arith.constant 0 : i32
    return %arg0, %c0_i32 : i32, i32
  }
  func.func @transform_22(%arg0: i32) -> (i32, i32) {
    %c0_i32 = arith.constant 0 : i32
    %c0_i32_0 = arith.constant 0 : i32
    return %arg0, %c0_i32 : i32, i32
  }
  func.func @transform_23(%arg0: i32) -> (i32, i32) {
    %c0_i32 = arith.constant 0 : i32
    %c0_i32_0 = arith.constant 0 : i32
    return %arg0, %c0_i32 : i32, i32
  }
}

</mosaic_0001>

<llo_original>
// kernel: _lambda_.2
$region0: #{_lambda_.2}
  #allocation0 [shape = 'u32[]', space=smem, size = 0x4, offset = 0x4, fixed_abs, tag = 'smem constant byte address 0x4 - core index']
  #allocation1 [shape = 'u32[144,128]{1,0:T(1,128)}', space=vmem, size = 0x12000, scoped, tag = 'internal scratch']
  %s0 = inlined_call_operand.vmem [shape: bf16[2,16,64], index: 0, kind: input, shape index: {}]
  %s1 = inlined_call_operand.vmem [shape: bf16[32,16], index: 1, kind: input, shape index: {}]
  %s2 = inlined_call_operand.vmem [shape: f32[32,1], index: 2, kind: input, shape index: {}]
  %s3 = inlined_call_operand.vmem [shape: bf16[2,32,64], index: 3, kind: output, shape index: {}]
  %s4 = sld [smem:[#allocation0]]
  $region45: #{_lambda_.2} parent=0
    _
  %s6 = ssub.s32 1, %s4
  %s7 = scalar_select 0, %s6, %s4
  loop: start=0, step=1, limit=4
  $region2: #{_lambda_.2} parent=0 // loop_pre_header
    _
  $region3: #{_lambda_.2} parent=0 // loop_header
    %s9 = sphi 0, %s13
    %p10 = scmp.ge.s32.totalorder %s9, 4
    %s16 = sphi 0, %s28
    %s17 = sphi 0, %s24
    %s18 = sphi 0, %s16
    %s19 = sphi 0, %s17
    %s20 = sphi 0, %s18
    %s21 = sphi 0, %s19
    %s33 = sphi 0, %s35
    %s36 = sphi 0, %s33
    %s37 = sphi 0, %s36
    %s53 = sphi 0, %s37
    %s57 = sphi 0, %s57
    %s59 = sphi 0, %s57
    %s60 = sphi 0, %s59
    %s74 = sphi 0, %s60
    %s78 = sphi 0, %s78
    %s80 = sphi 0, %s78
    %s81 = sphi 0, %s80
    %s95 = sphi 0, %s81
    %s103 = sphi 0, %s105
    %s106 = sphi 0, %s103
    %s107 = sphi 0, %s106
    %s123 = sphi 0, %s107
  $region4: #{_lambda_.2} parent=0 // loop_header_branch
    %12 = sbr.rel (%p10) target = $region8
  $region5: #{_lambda_.2} parent=0 // loop_body
    %s14 = ssub.s32 %s9, 1
    %s15 = ssub.s32 %s9, 2
    %s22 = sadd.s32 1, %s17
    %p23 = scmp.ge.s32.totalorder %s22, 1
    %s24 = scalar_select %p23, 0, %s22
    %s25 = sadd.s32 1, %s16
    %s26 = scalar_select %p23, %s25, %s16
    %p27 = scmp.ge.s32.totalorder %s26, 2
    %s28 = scalar_select %p27, 0, %s26
    %s29 = ssub.s32 %s16, %s28
    %s30 = ssub.s32 %s17, %s24
    %s31 = sor.u32 %s29, %s30
    %p32 = scmp.eq.s32.totalorder %s31, 0
    %s34 = sadd.s32 %s33, 1
    %s35 = scalar_select %p32, %s33, %s34
    %p38 = pneg %p32
    %p39 = scmp.eq.s32.totalorder %s9, 1
    %p40 = por %p38, %p39
    %p41 = scmp.ne.s32.totalorder %s33, %s36
    %p42 = scmp.eq.s32.totalorder %s9, 0
    %p43 = por %p41, %p42
    %p44 = scmp.ne.s32.totalorder %s33, %s36
    %p45 = scmp.eq.s32.totalorder %s14, 1
    %p46 = por %p44, %p45
    %p47 = scmp.ne.s32.totalorder %s36, %s37
    %p48 = scmp.eq.s32.totalorder %s14, 0
    %p49 = por %p47, %p48
    %p50 = scmp.ne.s32.totalorder %s36, %s37
    %p51 = scmp.eq.s32.totalorder %s15, 1
    %p52 = por %p50, %p51
    %p54 = scmp.ne.s32.totalorder %s37, %s53
    %p55 = scmp.eq.s32.totalorder %s15, 0
    %p56 = por %p54, %p55
    %s58 = sadd.s32 %s57, 1
    %p61 = scmp.eq.s32.totalorder %s9, 1
    %p62 = scmp.ne.s32.totalorder %s57, %s59
    %p63 = scmp.eq.s32.totalorder %s9, 0
    %p64 = por %p62, %p63
    %p65 = scmp.ne.s32.totalorder %s57, %s59
    %p66 = scmp.eq.s32.totalorder %s14, 1
    %p67 = por %p65, %p66
    %p68 = scmp.ne.s32.totalorder %s59, %s60
    %p69 = scmp.eq.s32.totalorder %s14, 0
    %p70 = por %p68, %p69
    %p71 = scmp.ne.s32.totalorder %s59, %s60
    %p72 = scmp.eq.s32.totalorder %s15, 1
    %p73 = por %p71, %p72
    %p75 = scmp.ne.s32.totalorder %s60, %s74
    %p76 = scmp.eq.s32.totalorder %s15, 0
    %p77 = por %p75, %p76
    %s79 = sadd.s32 %s78, 1
    %p82 = scmp.eq.s32.totalorder %s9, 1
    %p83 = scmp.ne.s32.totalorder %s78, %s80
    %p84 = scmp.eq.s32.totalorder %s9, 0
    %p85 = por %p83, %p84
    %p86 = scmp.ne.s32.totalorder %s78, %s80
    %p87 = scmp.eq.s32.totalorder %s14, 1
    %p88 = por %p86, %p87
    %p89 = scmp.ne.s32.totalorder %s80, %s81
    %p90 = scmp.eq.s32.totalorder %s14, 0
    %p91 = por %p89, %p90
    %p92 = scmp.ne.s32.totalorder %s80, %s81
    %p93 = scmp.eq.s32.totalorder %s15, 1
    %p94 = por %p92, %p93
    %p96 = scmp.ne.s32.totalorder %s81, %s95
    %p97 = scmp.eq.s32.totalorder %s15, 0
    %p98 = por %p96, %p97
    %s99 = ssub.s32 %s16, %s28
    %s100 = ssub.s32 %s17, %s24
    %s101 = sor.u32 %s99, %s100
    %p102 = scmp.eq.s32.totalorder %s101, 0
    %s104 = sadd.s32 %s103, 1
    %s105 = scalar_select %p102, %s103, %s104
    %p108 = pneg %p102
    %p109 = scmp.eq.s32.totalorder %s9, 1
    %p110 = por %p108, %p109
    %p111 = scmp.ne.s32.totalorder %s103, %s106
    %p112 = scmp.eq.s32.totalorder %s9, 0
    %p113 = por %p111, %p112
    %p114 = scmp.ne.s32.totalorder %s103, %s106
    %p115 = scmp.eq.s32.totalorder %s14, 1
    %p116 = por %p114, %p115
    %p117 = scmp.ne.s32.totalorder %s106, %s107
    %p118 = scmp.eq.s32.totalorder %s14, 0
    %p119 = por %p117, %p118
    %p120 = scmp.ne.s32.totalorder %s106, %s107
    %p121 = scmp.eq.s32.totalorder %s15, 1
    %p122 = por %p120, %p121
    %p124 = scmp.ne.s32.totalorder %s107, %s123
    %p125 = scmp.eq.s32.totalorder %s15, 0
    %p126 = por %p124, %p125
    %p127 = scmp.le.s32.totalorder 1, %s9
    %p128 = scmp.lt.s32.totalorder %s9, 3
    %p129 = pnand %p127, %p128
    %p130 = pneg %p129
    // Predicated region
    $region9: #{_lambda_.2} parent=5 // pred_check
      _
    $region10: #{_lambda_.2} parent=5 // pred_check_branch
      %132 = sbr.rel (%p129) target = $region12
    $region11: #{_lambda_.2} parent=5 // pred_region
      %s133 = ssub.s32 %s9, 1
      // Predicated region
      $region13: #{_lambda_.2} parent=11 // pred_check
        %p134 = pneg %p70
      $region14: #{_lambda_.2} parent=11 // pred_check_branch
        %136 = sbr.rel (%p134) target = $region16
      $region15: #{_lambda_.2} parent=11 // pred_region
        _
      $region16: #{_lambda_.2} parent=11 // pred_fallthru
        _
      // Predicated region
      $region17: #{_lambda_.2} parent=11 // pred_check
        %p137 = pneg %p91
      $region18: #{_lambda_.2} parent=11 // pred_check_branch
        %139 = sbr.rel (%p137) target = $region20
      $region19: #{_lambda_.2} parent=11 // pred_region
        _
      $region20: #{_lambda_.2} parent=11 // pred_fallthru
        _
    $region12: #{_lambda_.2} parent=5 // pred_fallthru
      _
    %p140 = scmp.lt.s32.totalorder %s9, 2
    // Predicated region
    $region21: #{_lambda_.2} parent=5 // pred_check
      %p141 = pneg %p140
    $region22: #{_lambda_.2} parent=5 // pred_check_branch
      %143 = sbr.rel (%p141) target = $region24
    $region23: #{_lambda_.2} parent=5 // pred_region
      // Predicated region
      $region25: #{_lambda_.2} parent=23 // pred_check
        %p144 = pneg %p43
      $region26: #{_lambda_.2} parent=23 // pred_check_branch
        %146 = sbr.rel (%p144) target = $region28
      $region27: #{_lambda_.2} parent=23 // pred_region
        %p147 = scmp.lt.s32.totalorder %s16, 1
        %s148 = scalar_select %p147, %s16, 1
        %p149 = scmp.lt.s32.totalorder %s17, 0
        %s150 = scalar_select %p149, %s17, 0
        %s151 = smul.addr %s148, 2
        %s152 = sadd.s32 %s150, %s151
        %s153 = smul.addr %s152, 4
        %s154 = scalar_lea.vmem %s0, %s153
      $region28: #{_lambda_.2} parent=23 // pred_fallthru
        _
    $region24: #{_lambda_.2} parent=5 // pred_fallthru
      _
    %p155 = scmp.le.s32.totalorder 1, %s9
    %p156 = scmp.lt.s32.totalorder %s9, 3
    %p157 = pnand %p155, %p156
    %p158 = pneg %p157
    // Predicated region
    $region29: #{_lambda_.2} parent=5 // pred_check
      _
    $region30: #{_lambda_.2} parent=5 // pred_check_branch
      %160 = sbr.rel (%p157) target = $region32
    $region31: #{_lambda_.2} parent=5 // pred_region
      %s161 = ssub.s32 %s9, 1
      %p162 = scmp.lt.s32.totalorder %s18, 1
      %s163 = scalar_select %p162, %s18, 1
      %p164 = scmp.lt.s32.totalorder %s19, 0
      %s165 = scalar_select %p164, %s19, 0
      %s166 = smul.addr %s163, 2
      %s167 = sadd.s32 %s165, %s166
      %s168 = smul.addr %s167, 4
      %s169 = scalar_lea.vmem %s0, %s168
      %p170 = pneg %p49
      %p171 = pneg %p46
      %p172 = pneg %p70
      %p173 = pneg %p67
      %p174 = pneg %p91
      %p175 = pneg %p88
      %p176 = pneg %p119
      %p177 = pneg %p116
      %p178 = scmp.lt.s32.totalorder %s18, 1
      %s179 = scalar_select %p178, %s18, 1
      %p180 = scmp.lt.s32.totalorder %s19, 0
      %s181 = scalar_select %p180, %s19, 0
      %s182 = smul.addr %s179, 4
      %s183 = sadd.s32 %s181, %s182
      %s184 = smul.addr %s183, 4
      %s185 = scalar_lea.vmem %s3, %s184
      %p186 = scmp.lt.s32.totalorder %s18, 1
      %s187 = scalar_select %p186, %s18, 1
      %p188 = scmp.lt.s32.totalorder %s19, 0
      %s189 = scalar_select %p188, %s19, 0
      %s190 = smul.addr %s187, 2
      %s191 = sadd.s32 %s189, %s190
      %s192 = smul.addr %s191, 4
      %s193 = scalar_lea.vmem %s0, %s192
      %p194 = scmp.lt.s32.totalorder %s18, 1
      %s195 = scalar_select %p194, %s18, 1
      %p196 = scmp.lt.s32.totalorder %s19, 0
      %s197 = scalar_select %p196, %s19, 0
      %s198 = smul.addr %s195, 4
      %s199 = sadd.s32 %s197, %s198
      %s200 = smul.addr %s199, 4
      %s201 = scalar_lea.vmem %s3, %s200
      %v203 = vld [vmem:[%s1] sm:$0xf]
      %v204 = vld [vmem:[%s1 + $0x4] sm:$0xf]
      %v205 = vld [vmem:[%s1 + $0x8] sm:$0xf]
      %v206 = vld [vmem:[%s1 + $0xc] sm:$0xf]
      %v207 = vld [vmem:[%s193] sm:$0xf]
      %v208 = vld [vmem:[%s193 + $0x4] sm:$0xf]
      %v209 = vld [vmem:[%s2] sm:$0xff]
      %v210 = vld [vmem:[%s2 + $0x8] sm:$0xff]
      %v211 = vld [vmem:[%s2 + $0x10] sm:$0xff]
      %v212 = vld [vmem:[%s2 + $0x18] sm:$0xff]
      %214 = vset.pattern.permute.xlu0 0
      %215 = vperm.xlu0 %214, %v209
      %v216 = vpop.permute.xlu0 %215
      %219 = vset.pattern.permute.xlu0 0
      %220 = vperm.xlu0 %219, %v210
      %v221 = vpop.permute.xlu0 %220
      %224 = vset.pattern.permute.xlu0 0
      %225 = vperm.xlu0 %224, %v211
      %v226 = vpop.permute.xlu0 %225
      %229 = vset.pattern.permute.xlu0 0
      %230 = vperm.xlu0 %229, %v212
      %v231 = vpop.permute.xlu0 %230
      %v237 = vunpack.c.l.b16 %v203
      %v238 = vunpack.c.l.b16 %v204
      %v239 = vunpack.c.l.b16 %v205
      %v240 = vunpack.c.l.b16 %v206
      %v241 = vpack.c.b16 %v238, %v237
      %v242 = vpack.c.b16 %v240, %v239
      %v245 = vunpack.c.l.b16 %v207
      %v246 = vunpack.c.l.b16 %v208
      %v247 = vpack.c.b16 %v246, %v245
      %vm249 = vcmask 130048
      %v251 = vsel %vm249, %v241, 0
      %v254 = vsel %vm249, %v242, 0
      %256 = vmatprep.subr.bf16.mxu0 0
      %257 = vmatpush1.bf16.msra.mxu0 0
      %258 = vmatprep.subr.bf16.mxu0 0
      %259 = vmatpush1.bf16.msra.mxu0 0
      %260 = vmatprep.subr.bf16.mxu0 0
      %261 = vmatpush1.bf16.msra.mxu0 0
      %262 = vmatprep.subr.bf16.mxu0 0
      %263 = vmatpush1.bf16.msra.mxu0 0
      %264 = vmatprep.subr.bf16.mxu0 0
      %265 = vmatpush1.bf16.msra.mxu0 0
      %266 = vmatprep.subr.bf16.mxu0 0
      %267 = vmatpush1.bf16.msra.mxu0 0
      %268 = vmatprep.subr.bf16.mxu0 0
      %269 = vmatpush1.bf16.msra.mxu0 0
      %270 = vmatprep.subr.bf16.mxu0 0
      %271 = vmatpush1.bf16.msra.mxu0 %v247
      %272 = vmatprep.subr.bf16.mxu0 0
      %273 = vmatpush2.bf16.msra.mxu0 0
      %274 = vmatprep.subr.bf16.mxu0 0
      %275 = vmatpush2.bf16.msra.mxu0 0
      %276 = vmatprep.subr.bf16.mxu0 0
      %277 = vmatpush2.bf16.msra.mxu0 0
      %278 = vmatprep.subr.bf16.mxu0 0
      %279 = vmatpush2.bf16.msra.mxu0 0
      %280 = vmatprep.subr.bf16.mxu0 0
      %281 = vmatpush2.bf16.msra.mxu0 0
      %282 = vmatprep.subr.bf16.mxu0 0
      %283 = vmatpush2.bf16.msra.mxu0 0
      %284 = vmatprep.subr.bf16.mxu0 0
      %285 = vmatpush2.bf16.msra.mxu0 0
      %286 = vmatprep.subr.bf16.mxu0 0
      %287 = vmatpush2.bf16.msra.mxu0 0
      %288 = vmatprep.mubr.bf16.mxu0 0
      %289 = vmatmul.mubr.bf16.gmra.mxu0 %v251
      %v290 = vpop.f32.mrf.mxu0
      %v291 = vadd.f32 %v216, %v290
      %v292 = vpop.f32.mrf.mxu0
      %v293 = vpop.f32.mrf.mxu0
      %v294 = vadd.f32 %v221, %v293
      %v295 = vpop.f32.mrf.mxu0
      %296 = vmatprep.mubr.bf16.mxu0 0
      %297 = vmatmul.mubr.bf16.gmra.mxu0 %v254
      %v298 = vpop.f32.mrf.mxu0
      %v299 = vadd.f32 %v226, %v298
      %v300 = vpop.f32.mrf.mxu0
      %v301 = vpop.f32.mrf.mxu0
      %v302 = vadd.f32 %v231, %v301
      %v303 = vpop.f32.mrf.mxu0
      %304 = vdwg.mxu0
      %v305 = vpack.c.bf16 %v294, %v291
      %v306 = vpack.c.bf16 %v302, %v299
      %v309 = vunpack.c.l.b16 %v305
      %v310 = vunpack.c.h.b16 %v305
      %v311 = vunpack.c.l.b16 %v306
      %v312 = vunpack.c.h.b16 %v306
      %v313 = vpack.c.b16 %v309, %v309
      %v314 = vpack.c.b16 %v310, %v310
      %v315 = vpack.c.b16 %v311, %v311
      %v316 = vpack.c.b16 %v312, %v312
      %vm321 = vcmask 519168
      %322 = vst.msk [vmem:[%s201] sm:$0xf] %vm321, %v313
      %323 = vst.msk [vmem:[%s201 + $0x4] sm:$0xf] %vm321, %v314
      %324 = vst.msk [vmem:[%s201 + $0x8] sm:$0xf] %vm321, %v315
      %325 = vst.msk [vmem:[%s201 + $0xc] sm:$0xf] %vm321, %v316
      %p326 = scmp.lt.s32.totalorder %s18, 1
      %s327 = scalar_select %p326, %s18, 1
      %p328 = scmp.lt.s32.totalorder %s19, 0
      %s329 = scalar_select %p328, %s19, 0
      %s330 = smul.addr %s327, 4
      %s331 = sadd.s32 %s329, %s330
      %s332 = smul.addr %s331, 4
      %s333 = scalar_lea.vmem %s3, %s332
      // Predicated region
      $region33: #{_lambda_.2} parent=31 // pred_check
        %p334 = pneg %p116
      $region34: #{_lambda_.2} parent=31 // pred_check_branch
        %336 = sbr.rel (%p334) target = $region36
      $region35: #{_lambda_.2} parent=31 // pred_region
        _
      $region36: #{_lambda_.2} parent=31 // pred_fallthru
        _
    $region32: #{_lambda_.2} parent=5 // pred_fallthru
      _
    %p337 = scmp.le.s32.totalorder 2, %s9
    // Predicated region
    $region37: #{_lambda_.2} parent=5 // pred_check
      %p338 = pneg %p337
    $region38: #{_lambda_.2} parent=5 // pred_check_branch
      %340 = sbr.rel (%p338) target = $region40
    $region39: #{_lambda_.2} parent=5 // pred_region
      %s341 = ssub.s32 %s9, 2
      // Predicated region
      $region41: #{_lambda_.2} parent=39 // pred_check
        %p342 = pneg %p122
      $region42: #{_lambda_.2} parent=39 // pred_check_branch
        %344 = sbr.rel (%p342) target = $region44
      $region43: #{_lambda_.2} parent=39 // pred_region
        %p345 = scmp.lt.s32.totalorder %s20, 1
        %s346 = scalar_select %p345, %s20, 1
        %p347 = scmp.lt.s32.totalorder %s21, 0
        %s348 = scalar_select %p347, %s21, 0
        %s349 = smul.addr %s346, 4
        %s350 = sadd.s32 %s348, %s349
        %s351 = smul.addr %s350, 4
        %s352 = scalar_lea.vmem %s3, %s351
      $region44: #{_lambda_.2} parent=39 // pred_fallthru
        _
    $region40: #{_lambda_.2} parent=5 // pred_fallthru
      _
  $region6: #{_lambda_.2} parent=0 // loop_footer
    %s13 = sadd.s32 1, %s9
  $region7: #{_lambda_.2} parent=0 // loop_footer_branch
    %8 = sbr.rel target = $region3
  $region8: #{_lambda_.2} parent=0 // loop_exit
    _

// kernel: _lambda_.3
$region0: #{_lambda_.3}
  #allocation0 [shape = 'u32[]', space=smem, size = 0x4, offset = 0x4, fixed_abs, tag = 'smem constant byte address 0x4 - core index']
  #allocation1 [shape = 'u32[144,128]{1,0:T(1,128)}', space=vmem, size = 0x12000, scoped, tag = 'internal scratch']
  %s0 = inlined_call_operand.vmem [shape: f32[2], index: 0, kind: input, shape index: {}]
  %s1 = inlined_call_operand.vmem [shape: bf16[48,32], index: 1, kind: input, shape index: {}]
  %s2 = inlined_call_operand.vmem [shape: bf16[48,32], index: 2, kind: input, shape index: {}]
  %s3 = inlined_call_operand.vmem [shape: bf16[48,32], index: 3, kind: input, shape index: {}]
  %s4 = inlined_call_operand.vmem [shape: f32[48,32], index: 4, kind: input, shape index: {}]
  %s5 = inlined_call_operand.vmem [shape: bf16[32,32], index: 5, kind: input, shape index: {}]
  %s6 = inlined_call_operand.vmem [shape: bf16[32,32], index: 6, kind: input, shape index: {}]
  %s7 = inlined_call_operand.vmem [shape: bf16[32,128], index: 7, kind: input, shape index: {}]
  %s8 = inlined_call_operand.vmem [shape: bf16[32,32], index: 8, kind: input, shape index: {}]
  %s9 = inlined_call_operand.vmem [shape: bf16[32,32], index: 9, kind: input, shape index: {}]
  %s10 = inlined_call_operand.vmem [shape: bf16[32,128], index: 10, kind: input, shape index: {}]
  %s11 = inlined_call_operand.vmem [shape: f32[4,32], index: 11, kind: input, shape index: {}]
  %s12 = inlined_call_operand.vmem [shape: f32[1,128], index: 12, kind: input, shape index: {}]
  %s13 = inlined_call_operand.vmem [shape: bf16[32,32], index: 13, kind: input, shape index: {}]
  %s14 = inlined_call_operand.vmem [shape: bf16[32,128], index: 14, kind: input, shape index: {}]
  %s15 = inlined_call_operand.vmem [shape: bf16[32,32], index: 15, kind: input, shape index: {}]
  %s16 = inlined_call_operand.vmem [shape: bf16[32,128], index: 16, kind: input, shape index: {}]
  %s17 = inlined_call_operand.vmem [shape: f32[6,32], index: 17, kind: input, shape index: {}]
  %s18 = inlined_call_operand.vmem [shape: f32[1,128], index: 18, kind: input, shape index: {}]
  %s19 = inlined_call_operand.vmem [shape: f32[1,128], index: 19, kind: input, shape index: {}]
  %s20 = inlined_call_operand.vmem [shape: f32[48,128], index: 20, kind: output, shape index: {0}]
  %s21 = inlined_call_operand.vmem [shape: f32[48,128], index: 21, kind: output, shape index: {1}]
  %s22 = inlined_call_operand.vmem [shape: f32[48,128], index: 22, kind: output, shape index: {2}]
  %s23 = inlined_call_operand.vmem [shape: f32[48,32], index: 23, kind: output, shape index: {3}]
  %24 = xla_tuple %s20, %s21, %s22, %s23
  %s25 = sld [smem:[#allocation0]]
  $region333: #{_lambda_.3} parent=0
    _
  %s27 = ssub.s32 1, %s25
  %s28 = scalar_select 0, %s27, %s25
  $region1: #{_lambda_.3} parent=0
    #allocation2 [shape = 'u8[512]{0}', space=smem, size = 0x200, scoped, tag = 'input window, operand 0, single buffered']
    #allocation3 [shape = 's32[2]{0}', space=sflag, size = 0x8, scoped, tag = 'scoped memory for _lambda_.3']
    #allocation4 [shape = 'u8[32768]{0}', space=vmem, size = 0x8000, scoped, tag = 'output window, operand 0']
    #allocation5 [shape = 'u8[32768]{0}', space=vmem, size = 0x8000, scoped, tag = 'output window, operand 1']
    #allocation6 [shape = 'u8[32768]{0}', space=vmem, size = 0x8000, scoped, tag = 'output window, operand 2']
    #allocation7 [shape = 'u8[32768]{0}', space=vmem, size = 0x8000, scoped, tag = 'output window, operand 3']
    %29 = vsyncpa [#allocation3], 0
    loop: start=0, step=1, limit=4
    $region2: #{_lambda_.3} parent=1 // loop_pre_header
      _
    $region3: #{_lambda_.3} parent=1 // loop_header
      %s31 = sphi 0, %s35
      %p32 = scmp.ge.s32.totalorder %s31, 4
      %s39 = sphi 0, %s39
      %s41 = sphi 0, %s39
      %s42 = sphi 0, %s41
      %s56 = sphi 0, %s42
      %s62 = sphi 0, %s64
      %s65 = sphi 0, %s62
      %s66 = sphi 0, %s65
      %s82 = sphi 0, %s66
      %s88 = sphi 0, %s90
      %s91 = sphi 0, %s88
      %s92 = sphi 0, %s91
      %s108 = sphi 0, %s92
      %s114 = sphi 0, %s116
      %s117 = sphi 0, %s114
      %s118 = sphi 0, %s117
      %s134 = sphi 0, %s118
      %s140 = sphi 0, %s142
      %s143 = sphi 0, %s140
      %s144 = sphi 0, %s143
      %s160 = sphi 0, %s144
      %s164 = sphi 0, %s164
      %s166 = sphi 0, %s164
      %s167 = sphi 0, %s166
      %s181 = sphi 0, %s167
      %s185 = sphi 0, %s185
      %s187 = sphi 0, %s185
      %s188 = sphi 0, %s187
      %s202 = sphi 0, %s188
      %s206 = sphi 0, %s206
      %s208 = sphi 0, %s206
      %s209 = sphi 0, %s208
      %s223 = sphi 0, %s209
      %s227 = sphi 0, %s227
      %s229 = sphi 0, %s227
      %s230 = sphi 0, %s229
      %s244 = sphi 0, %s230
      %s248 = sphi 0, %s248
      %s250 = sphi 0, %s248
      %s251 = sphi 0, %s250
      %s265 = sphi 0, %s251
      %s269 = sphi 0, %s269
      %s271 = sphi 0, %s269
      %s272 = sphi 0, %s271
      %s286 = sphi 0, %s272
      %s290 = sphi 0, %s290
      %s292 = sphi 0, %s290
      %s293 = sphi 0, %s292
      %s307 = sphi 0, %s293
      %s311 = sphi 0, %s311
      %s313 = sphi 0, %s311
      %s314 = sphi 0, %s313
      %s328 = sphi 0, %s314
      %s332 = sphi 0, %s332
      %s334 = sphi 0, %s332
      %s335 = sphi 0, %s334
      %s349 = sphi 0, %s335
      %s353 = sphi 0, %s353
      %s355 = sphi 0, %s353
      %s356 = sphi 0, %s355
      %s370 = sphi 0, %s356
      %s374 = sphi 0, %s374
      %s376 = sphi 0, %s374
      %s377 = sphi 0, %s376
      %s391 = sphi 0, %s377
      %s395 = sphi 0, %s395
      %s397 = sphi 0, %s395
      %s398 = sphi 0, %s397
      %s412 = sphi 0, %s398
      %s416 = sphi 0, %s416
      %s418 = sphi 0, %s416
      %s419 = sphi 0, %s418
      %s433 = sphi 0, %s419
      %s437 = sphi 0, %s437
      %s439 = sphi 0, %s437
      %s440 = sphi 0, %s439
      %s454 = sphi 0, %s440
      %s458 = sphi 0, %s458
      %s460 = sphi 0, %s458
      %s461 = sphi 0, %s460
      %s475 = sphi 0, %s461
      %s481 = sphi 0, %s483
      %s484 = sphi 0, %s481
      %s485 = sphi 0, %s484
      %s501 = sphi 0, %s485
      %s507 = sphi 0, %s509
      %s510 = sphi 0, %s507
      %s511 = sphi 0, %s510
      %s527 = sphi 0, %s511
      %s533 = sphi 0, %s535
      %s536 = sphi 0, %s533
      %s537 = sphi 0, %s536
      %s553 = sphi 0, %s537
      %s559 = sphi 0, %s561
      %s562 = sphi 0, %s559
      %s563 = sphi 0, %s562
      %s579 = sphi 0, %s563
    $region4: #{_lambda_.3} parent=1 // loop_header_branch
      %34 = sbr.rel (%p32) target = $region8
    $region5: #{_lambda_.3} parent=1 // loop_body
      %s36 = ssub.s32 %s31, 1
      %s37 = ssub.s32 %s31, 2
      %s38 = sadd.s32 %s31, 1
      %s40 = sadd.s32 %s39, 1
      %p43 = scmp.eq.s32.totalorder %s31, 1
      %p44 = scmp.ne.s32.totalorder %s39, %s41
      %p45 = scmp.eq.s32.totalorder %s31, 0
      %p46 = por %p44, %p45
      %p47 = scmp.ne.s32.totalorder %s39, %s41
      %p48 = scmp.eq.s32.totalorder %s36, 1
      %p49 = por %p47, %p48
      %p50 = scmp.ne.s32.totalorder %s41, %s42
      %p51 = scmp.eq.s32.totalorder %s36, 0
      %p52 = por %p50, %p51
      %p53 = scmp.ne.s32.totalorder %s41, %s42
      %p54 = scmp.eq.s32.totalorder %s37, 1
      %p55 = por %p53, %p54
      %p57 = scmp.ne.s32.totalorder %s42, %s56
      %p58 = scmp.eq.s32.totalorder %s37, 0
      %p59 = por %p57, %p58
      %s60 = ssub.s32 %s31, %s38
      %p61 = scmp.eq.s32.totalorder %s60, 0
      %s63 = sadd.s32 %s62, 1
      %s64 = scalar_select %p61, %s62, %s63
      %p67 = pneg %p61
      %p68 = scmp.eq.s32.totalorder %s31, 1
      %p69 = por %p67, %p68
      %p70 = scmp.ne.s32.totalorder %s62, %s65
      %p71 = scmp.eq.s32.totalorder %s31, 0
      %p72 = por %p70, %p71
      %p73 = scmp.ne.s32.totalorder %s62, %s65
      %p74 = scmp.eq.s32.totalorder %s36, 1
      %p75 = por %p73, %p74
      %p76 = scmp.ne.s32.totalorder %s65, %s66
      %p77 = scmp.eq.s32.totalorder %s36, 0
      %p78 = por %p76, %p77
      %p79 = scmp.ne.s32.totalorder %s65, %s66
      %p80 = scmp.eq.s32.totalorder %s37, 1
      %p81 = por %p79, %p80
      %p83 = scmp.ne.s32.totalorder %s66, %s82
      %p84 = scmp.eq.s32.totalorder %s37, 0
      %p85 = por %p83, %p84
      %s86 = ssub.s32 %s31, %s38
      %p87 = scmp.eq.s32.totalorder %s86, 0
      %s89 = sadd.s32 %s88, 1
      %s90 = scalar_select %p87, %s88, %s89
      %p93 = pneg %p87
      %p94 = scmp.eq.s32.totalorder %s31, 1
      %p95 = por %p93, %p94
      %p96 = scmp.ne.s32.totalorder %s88, %s91
      %p97 = scmp.eq.s32.totalorder %s31, 0
      %p98 = por %p96, %p97
      %p99 = scmp.ne.s32.totalorder %s88, %s91
      %p100 = scmp.eq.s32.totalorder %s36, 1
      %p101 = por %p99, %p100
      %p102 = scmp.ne.s32.totalorder %s91, %s92
      %p103 = scmp.eq.s32.totalorder %s36, 0
      %p104 = por %p102, %p103
      %p105 = scmp.ne.s32.totalorder %s91, %s92
      %p106 = scmp.eq.s32.totalorder %s37, 1
      %p107 = por %p105, %p106
      %p109 = scmp.ne.s32.totalorder %s92, %s108
      %p110 = scmp.eq.s32.totalorder %s37, 0
      %p111 = por %p109, %p110
      %s112 = ssub.s32 %s31, %s38
      %p113 = scmp.eq.s32.totalorder %s112, 0
      %s115 = sadd.s32 %s114, 1
      %s116 = scalar_select %p113, %s114, %s115
      %p119 = pneg %p113
      %p120 = scmp.eq.s32.totalorder %s31, 1
      %p121 = por %p119, %p120
      %p122 = scmp.ne.s32.totalorder %s114, %s117
      %p123 = scmp.eq.s32.totalorder %s31, 0
      %p124 = por %p122, %p123
      %p125 = scmp.ne.s32.totalorder %s114, %s117
      %p126 = scmp.eq.s32.totalorder %s36, 1
      %p127 = por %p125, %p126
      %p128 = scmp.ne.s32.totalorder %s117, %s118
      %p129 = scmp.eq.s32.totalorder %s36, 0
      %p130 = por %p128, %p129
      %p131 = scmp.ne.s32.totalorder %s117, %s118
      %p132 = scmp.eq.s32.totalorder %s37, 1
      %p133 = por %p131, %p132
      %p135 = scmp.ne.s32.totalorder %s118, %s134
      %p136 = scmp.eq.s32.totalorder %s37, 0
      %p137 = por %p135, %p136
      %s138 = ssub.s32 %s31, %s38
      %p139 = scmp.eq.s32.totalorder %s138, 0
      %s141 = sadd.s32 %s140, 1
      %s142 = scalar_select %p139, %s140, %s141
      %p145 = pneg %p139
      %p146 = scmp.eq.s32.totalorder %s31, 1
      %p147 = por %p145, %p146
      %p148 = scmp.ne.s32.totalorder %s140, %s143
      %p149 = scmp.eq.s32.totalorder %s31, 0
      %p150 = por %p148, %p149
      %p151 = scmp.ne.s32.totalorder %s140, %s143
      %p152 = scmp.eq.s32.totalorder %s36, 1
      %p153 = por %p151, %p152
      %p154 = scmp.ne.s32.totalorder %s143, %s144
      %p155 = scmp.eq.s32.totalorder %s36, 0
      %p156 = por %p154, %p155
      %p157 = scmp.ne.s32.totalorder %s143, %s144
      %p158 = scmp.eq.s32.totalorder %s37, 1
      %p159 = por %p157, %p158
      %p161 = scmp.ne.s32.totalorder %s144, %s160
      %p162 = scmp.eq.s32.totalorder %s37, 0
      %p163 = por %p161, %p162
      %s165 = sadd.s32 %s164, 1
      %p168 = scmp.eq.s32.totalorder %s31, 1
      %p169 = scmp.ne.s32.totalorder %s164, %s166
      %p170 = scmp.eq.s32.totalorder %s31, 0
      %p171 = por %p169, %p170
      %p172 = scmp.ne.s32.totalorder %s164, %s166
      %p173 = scmp.eq.s32.totalorder %s36, 1
      %p174 = por %p172, %p173
      %p175 = scmp.ne.s32.totalorder %s166, %s167
      %p176 = scmp.eq.s32.totalorder %s36, 0
      %p177 = por %p175, %p176
      %p178 = scmp.ne.s32.totalorder %s166, %s167
      %p179 = scmp.eq.s32.totalorder %s37, 1
      %p180 = por %p178, %p179
      %p182 = scmp.ne.s32.totalorder %s167, %s181
      %p183 = scmp.eq.s32.totalorder %s37, 0
      %p184 = por %p182, %p183
      %s186 = sadd.s32 %s185, 1
      %p189 = scmp.eq.s32.totalorder %s31, 1
      %p190 = scmp.ne.s32.totalorder %s185, %s187
      %p191 = scmp.eq.s32.totalorder %s31, 0
      %p192 = por %p190, %p191
      %p193 = scmp.ne.s32.totalorder %s185, %s187
      %p194 = scmp.eq.s32.totalorder %s36, 1
      %p195 = por %p193, %p194
      %p196 = scmp.ne.s32.totalorder %s187, %s188
      %p197 = scmp.eq.s32.totalorder %s36, 0
      %p198 = por %p196, %p197
      %p199 = scmp.ne.s32.totalorder %s187, %s188
      %p200 = scmp.eq.s32.totalorder %s37, 1
      %p201 = por %p199, %p200
      %p203 = scmp.ne.s32.totalorder %s188, %s202
      %p204 = scmp.eq.s32.totalorder %s37, 0
      %p205 = por %p203, %p204
      %s207 = sadd.s32 %s206, 1
      %p210 = scmp.eq.s32.totalorder %s31, 1
      %p211 = scmp.ne.s32.totalorder %s206, %s208
      %p212 = scmp.eq.s32.totalorder %s31, 0
      %p213 = por %p211, %p212
      %p214 = scmp.ne.s32.totalorder %s206, %s208
      %p215 = scmp.eq.s32.totalorder %s36, 1
      %p216 = por %p214, %p215
      %p217 = scmp.ne.s32.totalorder %s208, %s209
      %p218 = scmp.eq.s32.totalorder %s36, 0
      %p219 = por %p217, %p218
      %p220 = scmp.ne.s32.totalorder %s208, %s209
      %p221 = scmp.eq.s32.totalorder %s37, 1
      %p222 = por %p220, %p221
      %p224 = scmp.ne.s32.totalorder %s209, %s223
      %p225 = scmp.eq.s32.totalorder %s37, 0
      %p226 = por %p224, %p225
      %s228 = sadd.s32 %s227, 1
      %p231 = scmp.eq.s32.totalorder %s31, 1
      %p232 = scmp.ne.s32.totalorder %s227, %s229
      %p233 = scmp.eq.s32.totalorder %s31, 0
      %p234 = por %p232, %p233
      %p235 = scmp.ne.s32.totalorder %s227, %s229
      %p236 = scmp.eq.s32.totalorder %s36, 1
      %p237 = por %p235, %p236
      %p238 = scmp.ne.s32.totalorder %s229, %s230
      %p239 = scmp.eq.s32.totalorder %s36, 0
      %p240 = por %p238, %p239
      %p241 = scmp.ne.s32.totalorder %s229, %s230
      %p242 = scmp.eq.s32.totalorder %s37, 1
      %p243 = por %p241, %p242
      %p245 = scmp.ne.s32.totalorder %s230, %s244
      %p246 = scmp.eq.s32.totalorder %s37, 0
      %p247 = por %p245, %p246
      %s249 = sadd.s32 %s248, 1
      %p252 = scmp.eq.s32.totalorder %s31, 1
      %p253 = scmp.ne.s32.totalorder %s248, %s250
      %p254 = scmp.eq.s32.totalorder %s31, 0
      %p255 = por %p253, %p254
      %p256 = scmp.ne.s32.totalorder %s248, %s250
      %p257 = scmp.eq.s32.totalorder %s36, 1
      %p258 = por %p256, %p257
      %p259 = scmp.ne.s32.totalorder %s250, %s251
      %p260 = scmp.eq.s32.totalorder %s36, 0
      %p261 = por %p259, %p260
      %p262 = scmp.ne.s32.totalorder %s250, %s251
      %p263 = scmp.eq.s32.totalorder %s37, 1
      %p264 = por %p262, %p263
      %p266 = scmp.ne.s32.totalorder %s251, %s265
      %p267 = scmp.eq.s32.totalorder %s37, 0
      %p268 = por %p266, %p267
      %s270 = sadd.s32 %s269, 1
      %p273 = scmp.eq.s32.totalorder %s31, 1
      %p274 = scmp.ne.s32.totalorder %s269, %s271
      %p275 = scmp.eq.s32.totalorder %s31, 0
      %p276 = por %p274, %p275
      %p277 = scmp.ne.s32.totalorder %s269, %s271
      %p278 = scmp.eq.s32.totalorder %s36, 1
      %p279 = por %p277, %p278
      %p280 = scmp.ne.s32.totalorder %s271, %s272
      %p281 = scmp.eq.s32.totalorder %s36, 0
      %p282 = por %p280, %p281
      %p283 = scmp.ne.s32.totalorder %s271, %s272
      %p284 = scmp.eq.s32.totalorder %s37, 1
      %p285 = por %p283, %p284
      %p287 = scmp.ne.s32.totalorder %s272, %s286
      %p288 = scmp.eq.s32.totalorder %s37, 0
      %p289 = por %p287, %p288
      %s291 = sadd.s32 %s290, 1
      %p294 = scmp.eq.s32.totalorder %s31, 1
      %p295 = scmp.ne.s32.totalorder %s290, %s292
      %p296 = scmp.eq.s32.totalorder %s31, 0
      %p297 = por %p295, %p296
      %p298 = scmp.ne.s32.totalorder %s290, %s292
      %p299 = scmp.eq.s32.totalorder %s36, 1
      %p300 = por %p298, %p299
      %p301 = scmp.ne.s32.totalorder %s292, %s293
      %p302 = scmp.eq.s32.totalorder %s36, 0
      %p303 = por %p301, %p302
      %p304 = scmp.ne.s32.totalorder %s292, %s293
      %p305 = scmp.eq.s32.totalorder %s37, 1
      %p306 = por %p304, %p305
      %p308 = scmp.ne.s32.totalorder %s293, %s307
      %p309 = scmp.eq.s32.totalorder %s37, 0
      %p310 = por %p308, %p309
      %s312 = sadd.s32 %s311, 1
      %p315 = scmp.eq.s32.totalorder %s31, 1
      %p316 = scmp.ne.s32.totalorder %s311, %s313
      %p317 = scmp.eq.s32.totalorder %s31, 0
      %p318 = por %p316, %p317
      %p319 = scmp.ne.s32.totalorder %s311, %s313
      %p320 = scmp.eq.s32.totalorder %s36, 1
      %p321 = por %p319, %p320
      %p322 = scmp.ne.s32.totalorder %s313, %s314
      %p323 = scmp.eq.s32.totalorder %s36, 0
      %p324 = por %p322, %p323
      %p325 = scmp.ne.s32.totalorder %s313, %s314
      %p326 = scmp.eq.s32.totalorder %s37, 1
      %p327 = por %p325, %p326
      %p329 = scmp.ne.s32.totalorder %s314, %s328
      %p330 = scmp.eq.s32.totalorder %s37, 0
      %p331 = por %p329, %p330
      %s333 = sadd.s32 %s332, 1
      %p336 = scmp.eq.s32.totalorder %s31, 1
      %p337 = scmp.ne.s32.totalorder %s332, %s334
      %p338 = scmp.eq.s32.totalorder %s31, 0
      %p339 = por %p337, %p338
      %p340 = scmp.ne.s32.totalorder %s332, %s334
      %p341 = scmp.eq.s32.totalorder %s36, 1
      %p342 = por %p340, %p341
      %p343 = scmp.ne.s32.totalorder %s334, %s335
      %p344 = scmp.eq.s32.totalorder %s36, 0
      %p345 = por %p343, %p344
      %p346 = scmp.ne.s32.totalorder %s334, %s335
      %p347 = scmp.eq.s32.totalorder %s37, 1
      %p348 = por %p346, %p347
      %p350 = scmp.ne.s32.totalorder %s335, %s349
      %p351 = scmp.eq.s32.totalorder %s37, 0
      %p352 = por %p350, %p351
      %s354 = sadd.s32 %s353, 1
      %p357 = scmp.eq.s32.totalorder %s31, 1
      %p358 = scmp.ne.s32.totalorder %s353, %s355
      %p359 = scmp.eq.s32.totalorder %s31, 0
      %p360 = por %p358, %p359
      %p361 = scmp.ne.s32.totalorder %s353, %s355
      %p362 = scmp.eq.s32.totalorder %s36, 1
      %p363 = por %p361, %p362
      %p364 = scmp.ne.s32.totalorder %s355, %s356
      %p365 = scmp.eq.s32.totalorder %s36, 0
      %p366 = por %p364, %p365
      %p367 = scmp.ne.s32.totalorder %s355, %s356
      %p368 = scmp.eq.s32.totalorder %s37, 1
      %p369 = por %p367, %p368
      %p371 = scmp.ne.s32.totalorder %s356, %s370
      %p372 = scmp.eq.s32.totalorder %s37, 0
      %p373 = por %p371, %p372
      %s375 = sadd.s32 %s374, 1
      %p378 = scmp.eq.s32.totalorder %s31, 1
      %p379 = scmp.ne.s32.totalorder %s374, %s376
      %p380 = scmp.eq.s32.totalorder %s31, 0
      %p381 = por %p379, %p380
      %p382 = scmp.ne.s32.totalorder %s374, %s376
      %p383 = scmp.eq.s32.totalorder %s36, 1
      %p384 = por %p382, %p383
      %p385 = scmp.ne.s32.totalorder %s376, %s377
      %p386 = scmp.eq.s32.totalorder %s36, 0
      %p387 = por %p385, %p386
      %p388 = scmp.ne.s32.totalorder %s376, %s377
      %p389 = scmp.eq.s32.totalorder %s37, 1
      %p390 = por %p388, %p389
      %p392 = scmp.ne.s32.totalorder %s377, %s391
      %p393 = scmp.eq.s32.totalorder %s37, 0
      %p394 = por %p392, %p393
      %s396 = sadd.s32 %s395, 1
      %p399 = scmp.eq.s32.totalorder %s31, 1
      %p400 = scmp.ne.s32.totalorder %s395, %s397
      %p401 = scmp.eq.s32.totalorder %s31, 0
      %p402 = por %p400, %p401
      %p403 = scmp.ne.s32.totalorder %s395, %s397
      %p404 = scmp.eq.s32.totalorder %s36, 1
      %p405 = por %p403, %p404
      %p406 = scmp.ne.s32.totalorder %s397, %s398
      %p407 = scmp.eq.s32.totalorder %s36, 0
      %p408 = por %p406, %p407
      %p409 = scmp.ne.s32.totalorder %s397, %s398
      %p410 = scmp.eq.s32.totalorder %s37, 1
      %p411 = por %p409, %p410
      %p413 = scmp.ne.s32.totalorder %s398, %s412
      %p414 = scmp.eq.s32.totalorder %s37, 0
      %p415 = por %p413, %p414
      %s417 = sadd.s32 %s416, 1
      %p420 = scmp.eq.s32.totalorder %s31, 1
      %p421 = scmp.ne.s32.totalorder %s416, %s418
      %p422 = scmp.eq.s32.totalorder %s31, 0
      %p423 = por %p421, %p422
      %p424 = scmp.ne.s32.totalorder %s416, %s418
      %p425 = scmp.eq.s32.totalorder %s36, 1
      %p426 = por %p424, %p425
      %p427 = scmp.ne.s32.totalorder %s418, %s419
      %p428 = scmp.eq.s32.totalorder %s36, 0
      %p429 = por %p427, %p428
      %p430 = scmp.ne.s32.totalorder %s418, %s419
      %p431 = scmp.eq.s32.totalorder %s37, 1
      %p432 = por %p430, %p431
      %p434 = scmp.ne.s32.totalorder %s419, %s433
      %p435 = scmp.eq.s32.totalorder %s37, 0
      %p436 = por %p434, %p435
      %s438 = sadd.s32 %s437, 1
      %p441 = scmp.eq.s32.totalorder %s31, 1
      %p442 = scmp.ne.s32.totalorder %s437, %s439
      %p443 = scmp.eq.s32.totalorder %s31, 0
      %p444 = por %p442, %p443
      %p445 = scmp.ne.s32.totalorder %s437, %s439
      %p446 = scmp.eq.s32.totalorder %s36, 1
      %p447 = por %p445, %p446
      %p448 = scmp.ne.s32.totalorder %s439, %s440
      %p449 = scmp.eq.s32.totalorder %s36, 0
      %p450 = por %p448, %p449
      %p451 = scmp.ne.s32.totalorder %s439, %s440
      %p452 = scmp.eq.s32.totalorder %s37, 1
      %p453 = por %p451, %p452
      %p455 = scmp.ne.s32.totalorder %s440, %s454
      %p456 = scmp.eq.s32.totalorder %s37, 0
      %p457 = por %p455, %p456
      %s459 = sadd.s32 %s458, 1
      %p462 = scmp.eq.s32.totalorder %s31, 1
      %p463 = scmp.ne.s32.totalorder %s458, %s460
      %p464 = scmp.eq.s32.totalorder %s31, 0
      %p465 = por %p463, %p464
      %p466 = scmp.ne.s32.totalorder %s458, %s460
      %p467 = scmp.eq.s32.totalorder %s36, 1
      %p468 = por %p466, %p467
      %p469 = scmp.ne.s32.totalorder %s460, %s461
      %p470 = scmp.eq.s32.totalorder %s36, 0
      %p471 = por %p469, %p470
      %p472 = scmp.ne.s32.totalorder %s460, %s461
      %p473 = scmp.eq.s32.totalorder %s37, 1
      %p474 = por %p472, %p473
      %p476 = scmp.ne.s32.totalorder %s461, %s475
      %p477 = scmp.eq.s32.totalorder %s37, 0
      %p478 = por %p476, %p477
      %s479 = ssub.s32 %s31, %s38
      %p480 = scmp.eq.s32.totalorder %s479, 0
      %s482 = sadd.s32 %s481, 1
      %s483 = scalar_select %p480, %s481, %s482
      %p486 = pneg %p480
      %p487 = scmp.eq.s32.totalorder %s31, 1
      %p488 = por %p486, %p487
      %p489 = scmp.ne.s32.totalorder %s481, %s484
      %p490 = scmp.eq.s32.totalorder %s31, 0
      %p491 = por %p489, %p490
      %p492 = scmp.ne.s32.totalorder %s481, %s484
      %p493 = scmp.eq.s32.totalorder %s36, 1
      %p494 = por %p492, %p493
      %p495 = scmp.ne.s32.totalorder %s484, %s485
      %p496 = scmp.eq.s32.totalorder %s36, 0
      %p497 = por %p495, %p496
      %p498 = scmp.ne.s32.totalorder %s484, %s485
      %p499 = scmp.eq.s32.totalorder %s37, 1
      %p500 = por %p498, %p499
      %p502 = scmp.ne.s32.totalorder %s485, %s501
      %p503 = scmp.eq.s32.totalorder %s37, 0
      %p504 = por %p502, %p503
      %s505 = ssub.s32 %s31, %s38
      %p506 = scmp.eq.s32.totalorder %s505, 0
      %s508 = sadd.s32 %s507, 1
      %s509 = scalar_select %p506, %s507, %s508
      %p512 = pneg %p506
      %p513 = scmp.eq.s32.totalorder %s31, 1
      %p514 = por %p512, %p513
      %p515 = scmp.ne.s32.totalorder %s507, %s510
      %p516 = scmp.eq.s32.totalorder %s31, 0
      %p517 = por %p515, %p516
      %p518 = scmp.ne.s32.totalorder %s507, %s510
      %p519 = scmp.eq.s32.totalorder %s36, 1
      %p520 = por %p518, %p519
      %p521 = scmp.ne.s32.totalorder %s510, %s511
      %p522 = scmp.eq.s32.totalorder %s36, 0
      %p523 = por %p521, %p522
      %p524 = scmp.ne.s32.totalorder %s510, %s511
      %p525 = scmp.eq.s32.totalorder %s37, 1
      %p526 = por %p524, %p525
      %p528 = scmp.ne.s32.totalorder %s511, %s527
      %p529 = scmp.eq.s32.totalorder %s37, 0
      %p530 = por %p528, %p529
      %s531 = ssub.s32 %s31, %s38
      %p532 = scmp.eq.s32.totalorder %s531, 0
      %s534 = sadd.s32 %s533, 1
      %s535 = scalar_select %p532, %s533, %s534
      %p538 = pneg %p532
      %p539 = scmp.eq.s32.totalorder %s31, 1
      %p540 = por %p538, %p539
      %p541 = scmp.ne.s32.totalorder %s533, %s536
      %p542 = scmp.eq.s32.totalorder %s31, 0
      %p543 = por %p541, %p542
      %p544 = scmp.ne.s32.totalorder %s533, %s536
      %p545 = scmp.eq.s32.totalorder %s36, 1
      %p546 = por %p544, %p545
      %p547 = scmp.ne.s32.totalorder %s536, %s537
      %p548 = scmp.eq.s32.totalorder %s36, 0
      %p549 = por %p547, %p548
      %p550 = scmp.ne.s32.totalorder %s536, %s537
      %p551 = scmp.eq.s32.totalorder %s37, 1
      %p552 = por %p550, %p551
      %p554 = scmp.ne.s32.totalorder %s537, %s553
      %p555 = scmp.eq.s32.totalorder %s37, 0
      %p556 = por %p554, %p555
      %s557 = ssub.s32 %s31, %s38
      %p558 = scmp.eq.s32.totalorder %s557, 0
      %s560 = sadd.s32 %s559, 1
      %s561 = scalar_select %p558, %s559, %s560
      %p564 = pneg %p558
      %p565 = scmp.eq.s32.totalorder %s31, 1
      %p566 = por %p564, %p565
      %p567 = scmp.ne.s32.totalorder %s559, %s562
      %p568 = scmp.eq.s32.totalorder %s31, 0
      %p569 = por %p567, %p568
      %p570 = scmp.ne.s32.totalorder %s559, %s562
      %p571 = scmp.eq.s32.totalorder %s36, 1
      %p572 = por %p570, %p571
      %p573 = scmp.ne.s32.totalorder %s562, %s563
      %p574 = scmp.eq.s32.totalorder %s36, 0
      %p575 = por %p573, %p574
      %p576 = scmp.ne.s32.totalorder %s562, %s563
      %p577 = scmp.eq.s32.totalorder %s37, 1
      %p578 = por %p576, %p577
      %p580 = scmp.ne.s32.totalorder %s563, %s579
      %p581 = scmp.eq.s32.totalorder %s37, 0
      %p582 = por %p580, %p581
      %p583 = scmp.le.s32.totalorder 1, %s31
      %p584 = scmp.lt.s32.totalorder %s31, 3
      %p585 = pnand %p583, %p584
      %p586 = pneg %p585
      // Predicated region
      $region9: #{_lambda_.3} parent=5 // pred_check
        _
      $region10: #{_lambda_.3} parent=5 // pred_check_branch
        %588 = sbr.rel (%p585) target = $region12
      $region11: #{_lambda_.3} parent=5 // pred_region
        %s589 = ssub.s32 %s31, 1
        // Predicated region
        $region13: #{_lambda_.3} parent=11 // pred_check
          %p590 = pneg %p52
        $region14: #{_lambda_.3} parent=11 // pred_check_branch
          %592 = sbr.rel (%p590) target = $region16
        $region15: #{_lambda_.3} parent=11 // pred_region
          %s594 = ssub.s32 16, 16
          %595 = vsyncadd [#allocation3], %s594
          %s597 = sshll.u32 %s0, 4
          %s598 = int_to_ptr.vmem [resolvable:$true] %s597
          %600 = dma.vmem_to_smem %s598, 16, [#allocation2], [#allocation3]
        $region16: #{_lambda_.3} parent=11 // pred_fallthru
          _
        // Predicated region
        $region17: #{_lambda_.3} parent=11 // pred_check
          %p601 = pneg %p177
        $region18: #{_lambda_.3} parent=11 // pred_check_branch
          %603 = sbr.rel (%p601) target = $region20
        $region19: #{_lambda_.3} parent=11 // pred_region
          _
        $region20: #{_lambda_.3} parent=11 // pred_fallthru
          _
        // Predicated region
        $region21: #{_lambda_.3} parent=11 // pred_check
          %p604 = pneg %p198
        $region22: #{_lambda_.3} parent=11 // pred_check_branch
          %606 = sbr.rel (%p604) target = $region24
        $region23: #{_lambda_.3} parent=11 // pred_region
          _
        $region24: #{_lambda_.3} parent=11 // pred_fallthru
          _
        // Predicated region
        $region25: #{_lambda_.3} parent=11 // pred_check
          %p607 = pneg %p219
        $region26: #{_lambda_.3} parent=11 // pred_check_branch
          %609 = sbr.rel (%p607) target = $region28
        $region27: #{_lambda_.3} parent=11 // pred_region
          _
        $region28: #{_lambda_.3} parent=11 // pred_fallthru
          _
        // Predicated region
        $region29: #{_lambda_.3} parent=11 // pred_check
          %p610 = pneg %p240
        $region30: #{_lambda_.3} parent=11 // pred_check_branch
          %612 = sbr.rel (%p610) target = $region32
        $region31: #{_lambda_.3} parent=11 // pred_region
          _
        $region32: #{_lambda_.3} parent=11 // pred_fallthru
          _
        // Predicated region
        $region33: #{_lambda_.3} parent=11 // pred_check
          %p613 = pneg %p261
        $region34: #{_lambda_.3} parent=11 // pred_check_branch
          %615 = sbr.rel (%p613) target = $region36
        $region35: #{_lambda_.3} parent=11 // pred_region
          _
        $region36: #{_lambda_.3} parent=11 // pred_fallthru
          _
        // Predicated region
        $region37: #{_lambda_.3} parent=11 // pred_check
          %p616 = pneg %p282
        $region38: #{_lambda_.3} parent=11 // pred_check_branch
          %618 = sbr.rel (%p616) target = $region40
        $region39: #{_lambda_.3} parent=11 // pred_region
          _
        $region40: #{_lambda_.3} parent=11 // pred_fallthru
          _
        // Predicated region
        $region41: #{_lambda_.3} parent=11 // pred_check
          %p619 = pneg %p303
        $region42: #{_lambda_.3} parent=11 // pred_check_branch
          %621 = sbr.rel (%p619) target = $region44
        $region43: #{_lambda_.3} parent=11 // pred_region
          _
        $region44: #{_lambda_.3} parent=11 // pred_fallthru
          _
        // Predicated region
        $region45: #{_lambda_.3} parent=11 // pred_check
          %p622 = pneg %p324
        $region46: #{_lambda_.3} parent=11 // pred_check_branch
          %624 = sbr.rel (%p622) target = $region48
        $region47: #{_lambda_.3} parent=11 // pred_region
          _
        $region48: #{_lambda_.3} parent=11 // pred_fallthru
          _
        // Predicated region
        $region49: #{_lambda_.3} parent=11 // pred_check
          %p625 = pneg %p345
        $region50: #{_lambda_.3} parent=11 // pred_check_branch
          %627 = sbr.rel (%p625) target = $region52
        $region51: #{_lambda_.3} parent=11 // pred_region
          _
        $region52: #{_lambda_.3} parent=11 // pred_fallthru
          _
        // Predicated region
        $region53: #{_lambda_.3} parent=11 // pred_check
          %p628 = pneg %p366
        $region54: #{_lambda_.3} parent=11 // pred_check_branch
          %630 = sbr.rel (%p628) target = $region56
        $region55: #{_lambda_.3} parent=11 // pred_region
          _
        $region56: #{_lambda_.3} parent=11 // pred_fallthru
          _
        // Predicated region
        $region57: #{_lambda_.3} parent=11 // pred_check
          %p631 = pneg %p387
        $region58: #{_lambda_.3} parent=11 // pred_check_branch
          %633 = sbr.rel (%p631) target = $region60
        $region59: #{_lambda_.3} parent=11 // pred_region
          _
        $region60: #{_lambda_.3} parent=11 // pred_fallthru
          _
        // Predicated region
        $region61: #{_lambda_.3} parent=11 // pred_check
          %p634 = pneg %p408
        $region62: #{_lambda_.3} parent=11 // pred_check_branch
          %636 = sbr.rel (%p634) target = $region64
        $region63: #{_lambda_.3} parent=11 // pred_region
          _
        $region64: #{_lambda_.3} parent=11 // pred_fallthru
          _
        // Predicated region
        $region65: #{_lambda_.3} parent=11 // pred_check
          %p637 = pneg %p429
        $region66: #{_lambda_.3} parent=11 // pred_check_branch
          %639 = sbr.rel (%p637) target = $region68
        $region67: #{_lambda_.3} parent=11 // pred_region
          _
        $region68: #{_lambda_.3} parent=11 // pred_fallthru
          _
        // Predicated region
        $region69: #{_lambda_.3} parent=11 // pred_check
          %p640 = pneg %p450
        $region70: #{_lambda_.3} parent=11 // pred_check_branch
          %642 = sbr.rel (%p640) target = $region72
        $region71: #{_lambda_.3} parent=11 // pred_region
          _
        $region72: #{_lambda_.3} parent=11 // pred_fallthru
          _
        // Predicated region
        $region73: #{_lambda_.3} parent=11 // pred_check
          %p643 = pneg %p471
        $region74: #{_lambda_.3} parent=11 // pred_check_branch
          %645 = sbr.rel (%p643) target = $region76
        $region75: #{_lambda_.3} parent=11 // pred_region
          _
        $region76: #{_lambda_.3} parent=11 // pred_fallthru
          _
      $region12: #{_lambda_.3} parent=5 // pred_fallthru
        _
      %p646 = scmp.lt.s32.totalorder %s31, 2
      // Predicated region
      $region77: #{_lambda_.3} parent=5 // pred_check
        %p647 = pneg %p646
      $region78: #{_lambda_.3} parent=5 // pred_check_branch
        %649 = sbr.rel (%p647) target = $region80
      $region79: #{_lambda_.3} parent=5 // pred_region
        // Predicated region
        $region81: #{_lambda_.3} parent=79 // pred_check
          %p650 = pneg %p72
        $region82: #{_lambda_.3} parent=79 // pred_check_branch
          %652 = sbr.rel (%p650) target = $region84
        $region83: #{_lambda_.3} parent=79 // pred_region
          %s653 = smul.u32 4, %s31
          %s654 = ssub.s32 6, %s653
          %p655 = scmp.lt.s32.totalorder %s654, 4
          %s656 = scalar_select %p655, %s654, 4
          %s657 = smul.u32 64, %s656
          %p658 = scmp.lt.s32.totalorder %s653, 5
          %s659 = scalar_select %p658, %s653, 5
          %s660 = smul.addr %s659, 4
          %s661 = scalar_lea.vmem %s1, %s660
          %s662 = smul.u32 4, %s31
          %s663 = ssub.s32 6, %s662
          %p664 = scmp.lt.s32.totalorder %s663, 4
          %s665 = scalar_select %p664, %s663, 4
          %s666 = smul.u32 64, %s665
        $region84: #{_lambda_.3} parent=79 // pred_fallthru
          _
        // Predicated region
        $region85: #{_lambda_.3} parent=79 // pred_check
          %p667 = pneg %p98
        $region86: #{_lambda_.3} parent=79 // pred_check_branch
          %669 = sbr.rel (%p667) target = $region88
        $region87: #{_lambda_.3} parent=79 // pred_region
          %s670 = smul.u32 4, %s31
          %s671 = ssub.s32 6, %s670
          %p672 = scmp.lt.s32.totalorder %s671, 4
          %s673 = scalar_select %p672, %s671, 4
          %s674 = smul.u32 64, %s673
          %p675 = scmp.lt.s32.totalorder %s670, 5
          %s676 = scalar_select %p675, %s670, 5
          %s677 = smul.addr %s676, 4
          %s678 = scalar_lea.vmem %s2, %s677
          %s679 = smul.u32 4, %s31
          %s680 = ssub.s32 6, %s679
          %p681 = scmp.lt.s32.totalorder %s680, 4
          %s682 = scalar_select %p681, %s680, 4
          %s683 = smul.u32 64, %s682
        $region88: #{_lambda_.3} parent=79 // pred_fallthru
          _
        // Predicated region
        $region89: #{_lambda_.3} parent=79 // pred_check
          %p684 = pneg %p124
        $region90: #{_lambda_.3} parent=79 // pred_check_branch
          %686 = sbr.rel (%p684) target = $region92
        $region91: #{_lambda_.3} parent=79 // pred_region
          %s687 = smul.u32 4, %s31
          %s688 = ssub.s32 6, %s687
          %p689 = scmp.lt.s32.totalorder %s688, 4
          %s690 = scalar_select %p689, %s688, 4
          %s691 = smul.u32 64, %s690
          %p692 = scmp.lt.s32.totalorder %s687, 5
          %s693 = scalar_select %p692, %s687, 5
          %s694 = smul.addr %s693, 4
          %s695 = scalar_lea.vmem %s3, %s694
          %s696 = smul.u32 4, %s31
          %s697 = ssub.s32 6, %s696
          %p698 = scmp.lt.s32.totalorder %s697, 4
          %s699 = scalar_select %p698, %s697, 4
          %s700 = smul.u32 64, %s699
        $region92: #{_lambda_.3} parent=79 // pred_fallthru
          _
        // Predicated region
        $region93: #{_lambda_.3} parent=79 // pred_check
          %p701 = pneg %p150
        $region94: #{_lambda_.3} parent=79 // pred_check_branch
          %703 = sbr.rel (%p701) target = $region96
        $region95: #{_lambda_.3} parent=79 // pred_region
          %s704 = smul.u32 4, %s31
          %s705 = ssub.s32 6, %s704
          %p706 = scmp.lt.s32.totalorder %s705, 4
          %s707 = scalar_select %p706, %s705, 4
          %s708 = smul.u32 128, %s707
          %p709 = scmp.lt.s32.totalorder %s704, 5
          %s710 = scalar_select %p709, %s704, 5
          %s711 = smul.addr %s710, 8
          %s712 = scalar_lea.vmem %s4, %s711
          %s713 = smul.u32 4, %s31
          %s714 = ssub.s32 6, %s713
          %p715 = scmp.lt.s32.totalorder %s714, 4
          %s716 = scalar_select %p715, %s714, 4
          %s717 = smul.u32 128, %s716
        $region96: #{_lambda_.3} parent=79 // pred_fallthru
          _
      $region80: #{_lambda_.3} parent=5 // pred_fallthru
        _
      %p718 = scmp.le.s32.totalorder 1, %s31
      %p719 = scmp.lt.s32.totalorder %s31, 3
      %p720 = pnand %p718, %p719
      %p721 = pneg %p720
      // Predicated region
      $region97: #{_lambda_.3} parent=5 // pred_check
        _
      $region98: #{_lambda_.3} parent=5 // pred_check_branch
        %723 = sbr.rel (%p720) target = $region100
      $region99: #{_lambda_.3} parent=5 // pred_region
        %s724 = ssub.s32 %s31, 1
        // Predicated region
        $region101: #{_lambda_.3} parent=99 // pred_check
          %p725 = pneg %p52
        $region102: #{_lambda_.3} parent=99 // pred_check_branch
          %727 = sbr.rel (%p725) target = $region104
        $region103: #{_lambda_.3} parent=99 // pred_region
          %728 = dma.done [#allocation3], 16
        $region104: #{_lambda_.3} parent=99 // pred_fallthru
          _
        %729 = sfence
        %p730 = pneg %p52
        %p731 = pneg %p49
        %s732 = smul.u32 4, %s36
        %s733 = ssub.s32 6, %s732
        %p734 = scmp.lt.s32.totalorder %s733, 4
        %s735 = scalar_select %p734, %s733, 4
        %s736 = smul.u32 64, %s735
        %p737 = scmp.lt.s32.totalorder %s732, 5
        %s738 = scalar_select %p737, %s732, 5
        %s739 = smul.addr %s738, 4
        %s740 = scalar_lea.vmem %s1, %s739
        %p741 = pneg %p78
        %p742 = pneg %p75
        %s743 = smul.u32 4, %s36
        %s744 = ssub.s32 6, %s743
        %p745 = scmp.lt.s32.totalorder %s744, 4
        %s746 = scalar_select %p745, %s744, 4
        %s747 = smul.u32 64, %s746
        %p748 = scmp.lt.s32.totalorder %s743, 5
        %s749 = scalar_select %p748, %s743, 5
        %s750 = smul.addr %s749, 4
        %s751 = scalar_lea.vmem %s2, %s750
        %p752 = pneg %p104
        %p753 = pneg %p101
        %s754 = smul.u32 4, %s36
        %s755 = ssub.s32 6, %s754
        %p756 = scmp.lt.s32.totalorder %s755, 4
        %s757 = scalar_select %p756, %s755, 4
        %s758 = smul.u32 64, %s757
        %p759 = scmp.lt.s32.totalorder %s754, 5
        %s760 = scalar_select %p759, %s754, 5
        %s761 = smul.addr %s760, 4
        %s762 = scalar_lea.vmem %s3, %s761
        %p763 = pneg %p130
        %p764 = pneg %p127
        %s765 = smul.u32 4, %s36
        %s766 = ssub.s32 6, %s765
        %p767 = scmp.lt.s32.totalorder %s766, 4
        %s768 = scalar_select %p767, %s766, 4
        %s769 = smul.u32 128, %s768
        %p770 = scmp.lt.s32.totalorder %s765, 5
        %s771 = scalar_select %p770, %s765, 5
        %s772 = smul.addr %s771, 8
        %s773 = scalar_lea.vmem %s4, %s772
        %p774 = pneg %p156
        %p775 = pneg %p153
        %p776 = pneg %p177
        %p777 = pneg %p174
        %p778 = pneg %p198
        %p779 = pneg %p195
        %p780 = pneg %p219
        %p781 = pneg %p216
        %p782 = pneg %p240
        %p783 = pneg %p237
        %p784 = pneg %p261
        %p785 = pneg %p258
        %p786 = pneg %p282
        %p787 = pneg %p279
        %p788 = pneg %p303
        %p789 = pneg %p300
        %p790 = pneg %p324
        %p791 = pneg %p321
        %p792 = pneg %p345
        %p793 = pneg %p342
        %p794 = pneg %p366
        %p795 = pneg %p363
        %p796 = pneg %p387
        %p797 = pneg %p384
        %p798 = pneg %p408
        %p799 = pneg %p405
        %p800 = pneg %p429
        %p801 = pneg %p426
        %p802 = pneg %p450
        %p803 = pneg %p447
        %p804 = pneg %p471
        %p805 = pneg %p468
        %p806 = pneg %p497
        %p807 = pneg %p494
        %s808 = sand.u32 %s484, 1
        %s809 = sand.u32 %s484, 1
        %s810 = smul.addr %s809, 32
        %s811 = scalar_lea.vmem [#allocation4], %s810
        %p812 = pneg %p523
        %p813 = pneg %p520
        %s814 = sand.u32 %s510, 1
        %s815 = sand.u32 %s510, 1
        %s816 = smul.addr %s815, 32
        %s817 = scalar_lea.vmem [#allocation5], %s816
        %p818 = pneg %p549
        %p819 = pneg %p546
        %s820 = sand.u32 %s536, 1
        %s821 = sand.u32 %s536, 1
        %s822 = smul.addr %s821, 32
        %s823 = scalar_lea.vmem [#allocation6], %s822
        %p824 = pneg %p575
        %p825 = pneg %p572
        %s826 = sand.u32 %s562, 1
        %s827 = sand.u32 %s562, 1
        %s828 = smul.addr %s827, 32
        %s829 = scalar_lea.vmem [#allocation7], %s828
        %s830 = smul.u32 4, %s36
        %s831 = ssub.s32 6, %s830
        %p832 = scmp.lt.s32.totalorder %s831, 4
        %s833 = scalar_select %p832, %s831, 4
        %s834 = smul.u32 64, %s833
        %p835 = scmp.lt.s32.totalorder %s830, 5
        %s836 = scalar_select %p835, %s830, 5
        %s837 = smul.addr %s836, 4
        %s838 = scalar_lea.vmem %s1, %s837
        %s839 = smul.u32 4, %s36
        %s840 = ssub.s32 6, %s839
        %p841 = scmp.lt.s32.totalorder %s840, 4
        %s842 = scalar_select %p841, %s840, 4
        %s843 = smul.u32 64, %s842
        %s844 = smul.u32 4, %s36
        %s845 = ssub.s32 6, %s844
        %p846 = scmp.lt.s32.totalorder %s845, 4
        %s847 = scalar_select %p846, %s845, 4
        %s848 = smul.u32 64, %s847
        %p849 = scmp.lt.s32.totalorder %s844, 5
        %s850 = scalar_select %p849, %s844, 5
        %s851 = smul.addr %s850, 4
        %s852 = scalar_lea.vmem %s2, %s851
        %s853 = smul.u32 4, %s36
        %s854 = ssub.s32 6, %s853
        %p855 = scmp.lt.s32.totalorder %s854, 4
        %s856 = scalar_select %p855, %s854, 4
        %s857 = smul.u32 64, %s856
        %s858 = smul.u32 4, %s36
        %s859 = ssub.s32 6, %s858
        %p860 = scmp.lt.s32.totalorder %s859, 4
        %s861 = scalar_select %p860, %s859, 4
        %s862 = smul.u32 64, %s861
        %p863 = scmp.lt.s32.totalorder %s858, 5
        %s864 = scalar_select %p863, %s858, 5
        %s865 = smul.addr %s864, 4
        %s866 = scalar_lea.vmem %s3, %s865
        %s867 = smul.u32 4, %s36
        %s868 = ssub.s32 6, %s867
        %p869 = scmp.lt.s32.totalorder %s868, 4
        %s870 = scalar_select %p869, %s868, 4
        %s871 = smul.u32 64, %s870
        %s872 = smul.u32 4, %s36
        %s873 = ssub.s32 6, %s872
        %p874 = scmp.lt.s32.totalorder %s873, 4
        %s875 = scalar_select %p874, %s873, 4
        %s876 = smul.u32 128, %s875
        %p877 = scmp.lt.s32.totalorder %s872, 5
        %s878 = scalar_select %p877, %s872, 5
        %s879 = smul.addr %s878, 8
        %s880 = scalar_lea.vmem %s4, %s879
        %s881 = smul.u32 4, %s36
        %s882 = ssub.s32 6, %s881
        %p883 = scmp.lt.s32.totalorder %s882, 4
        %s884 = scalar_select %p883, %s882, 4
        %s885 = smul.u32 128, %s884
        %s886 = smul.u32 4, %s36
        %s887 = ssub.s32 6, %s886
        %p888 = scmp.lt.s32.totalorder %s887, 4
        %s889 = scalar_select %p888, %s887, 4
        %s890 = smul.u32 128, %s889
        %s891 = smul.u32 4, %s36
        %s892 = ssub.s32 6, %s891
        %p893 = scmp.lt.s32.totalorder %s892, 4
        %s894 = scalar_select %p893, %s892, 4
        %s895 = smul.u32 128, %s894
        %s896 = smul.u32 4, %s36
        %s897 = ssub.s32 6, %s896
        %p898 = scmp.lt.s32.totalorder %s897, 4
        %s899 = scalar_select %p898, %s897, 4
        %s900 = smul.u32 128, %s899
        %s901 = smul.u32 4, %s36
        %s902 = ssub.s32 6, %s901
        %p903 = scmp.lt.s32.totalorder %s902, 4
        %s904 = scalar_select %p903, %s902, 4
        %s905 = smul.u32 128, %s904
        %v907 = vld [vmem:[%s838] sm:$0xf]
        %v908 = vld [vmem:[%s838 + $0x4] sm:$0xf]
        %v909 = vld [vmem:[%s838 + $0x8] sm:$0xf]
        %v910 = vld [vmem:[%s838 + $0xc] sm:$0xf]
        %v911 = vld [vmem:[%s852] sm:$0xf]
        %v912 = vld [vmem:[%s852 + $0x4] sm:$0xf]
        %v913 = vld [vmem:[%s852 + $0x8] sm:$0xf]
        %v914 = vld [vmem:[%s852 + $0xc] sm:$0xf]
        %v915 = vld [vmem:[%s866] sm:$0xf]
        %v916 = vld [vmem:[%s866 + $0x4] sm:$0xf]
        %v917 = vld [vmem:[%s866 + $0x8] sm:$0xf]
        %v918 = vld [vmem:[%s866 + $0xc] sm:$0xf]
        %v919 = vld [vmem:[%s11] sm:$0x1]
        %v920 = vld [vmem:[%s5] sm:$0xf]
        %v921 = vld [vmem:[%s5 + $0x4] sm:$0xf]
        %v922 = vld [vmem:[%s5 + $0x8] sm:$0xf]
        %v923 = vld [vmem:[%s5 + $0xc] sm:$0xf]
        %v924 = vlaneseq
        %v925 = vshrl.u32 %v924, 7
        %v926 = vsub.s32 0, %v925
        %v927 = vrot.slane %v919, %v926
        %v932 = vunpack.c.l.b16 %v907
        %v933 = vunpack.c.l.b16 %v908
        %v934 = vunpack.c.l.b16 %v909
        %v935 = vunpack.c.l.b16 %v910
        %v936 = vpack.c.b16 %v933, %v932
        %v937 = vpack.c.b16 %v935, %v934
        %v942 = vunpack.c.l.b16 %v920
        %v943 = vunpack.c.l.b16 %v921
        %v944 = vunpack.c.l.b16 %v922
        %v945 = vunpack.c.l.b16 %v923
        %v946 = vpack.c.b16 %v943, %v942
        %v947 = vpack.c.b16 %v945, %v944
        %vm950 = vcmask 261120
        %v952 = vsel %vm950, %v936, 0
        %v955 = vsel %vm950, %v937, 0
        %957 = vmatprep.subr.bf16.mxu0 0
        %958 = vmatpush1.bf16.msra.mxu0 0
        %959 = vmatprep.subr.bf16.mxu0 0
        %960 = vmatpush1.bf16.msra.mxu0 0
        %961 = vmatprep.subr.bf16.mxu0 0
        %962 = vmatpush1.bf16.msra.mxu0 0
        %963 = vmatprep.subr.bf16.mxu0 0
        %964 = vmatpush1.bf16.msra.mxu0 0
        %965 = vmatprep.subr.bf16.mxu0 0
        %966 = vmatpush1.bf16.msra.mxu0 0
        %967 = vmatprep.subr.bf16.mxu0 0
        %968 = vmatpush1.bf16.msra.mxu0 0
        %969 = vmatprep.subr.bf16.mxu0 0
        %970 = vmatpush1.bf16.msra.mxu0 %v947
        %971 = vmatprep.subr.bf16.mxu0 0
        %972 = vmatpush1.bf16.msra.mxu0 %v946
        %973 = vmatprep.subr.bf16.mxu0 0
        %974 = vmatpush2.bf16.msra.mxu0 0
        %975 = vmatprep.subr.bf16.mxu0 0
        %976 = vmatpush2.bf16.msra.mxu0 0
        %977 = vmatprep.subr.bf16.mxu0 0
        %978 = vmatpush2.bf16.msra.mxu0 0
        %979 = vmatprep.subr.bf16.mxu0 0
        %980 = vmatpush2.bf16.msra.mxu0 0
        %981 = vmatprep.subr.bf16.mxu0 0
        %982 = vmatpush2.bf16.msra.mxu0 0
        %983 = vmatprep.subr.bf16.mxu0 0
        %984 = vmatpush2.bf16.msra.mxu0 0
        %985 = vmatprep.subr.bf16.mxu0 0
        %986 = vmatpush2.bf16.msra.mxu0 0
        %987 = vmatprep.subr.bf16.mxu0 0
        %988 = vmatpush2.bf16.msra.mxu0 0
        %989 = vmatprep.mubr.bf16.mxu0 0
        %990 = vmatmul.mubr.bf16.gmra.mxu0 %v952
        %v991 = vpop.f32.mrf.mxu0
        %v992 = vadd.f32 %v927, %v991
        %v993 = vpop.f32.mrf.mxu0
        %v994 = vpop.f32.mrf.mxu0
        %v995 = vadd.f32 %v927, %v994
        %v996 = vpop.f32.mrf.mxu0
        %997 = vmatprep.mubr.bf16.mxu0 0
        %998 = vmatmul.mubr.bf16.gmra.mxu0 %v955
        %v999 = vpop.f32.mrf.mxu0
        %v1000 = vadd.f32 %v927, %v999
        %v1001 = vpop.f32.mrf.mxu0
        %v1002 = vpop.f32.mrf.mxu0
        %v1003 = vadd.f32 %v927, %v1002
        %v1004 = vpop.f32.mrf.mxu0
        %1005 = vdwg.mxu0
        %v1006 = vmax.f32 %v992, 0.0
        %v1007 = vmax.f32 %v995, 0.0
        %v1008 = vmax.f32 %v1000, 0.0
        %v1009 = vmax.f32 %v1003, 0.0
        %v1010 = vpack.c.bf16 %v1007, %v1006
        %v1011 = vpack.c.bf16 %v1009, %v1008
        %v1012 = vld [vmem:[%s11 + $0x1] sm:$0x1]
        %v1013 = vld [vmem:[%s6] sm:$0xf]
        %v1014 = vld [vmem:[%s6 + $0x4] sm:$0xf]
        %v1015 = vld [vmem:[%s6 + $0x8] sm:$0xf]
        %v1016 = vld [vmem:[%s6 + $0xc] sm:$0xf]
        %v1017 = vlaneseq
        %v1018 = vshrl.u32 %v1017, 7
        %v1019 = vsub.s32 0, %v1018
        %v1020 = vrot.slane %v1012, %v1019
        %v1025 = vunpack.c.l.b16 %v1013
        %v1026 = vunpack.c.l.b16 %v1014
        %v1027 = vunpack.c.l.b16 %v1015
        %v1028 = vunpack.c.l.b16 %v1016
        %v1029 = vpack.c.b16 %v1026, %v1025
        %v1030 = vpack.c.b16 %v1028, %v1027
        %v1034 = vsel %vm950, %v1010, 0
        %v1037 = vsel %vm950, %v1011, 0
        %1039 = vmatprep.subr.bf16.mxu0 0
        %1040 = vmatpush1.bf16.msra.mxu0 0
        %1041 = vmatprep.subr.bf16.mxu0 0
        %1042 = vmatpush1.bf16.msra.mxu0 0
        %1043 = vmatprep.subr.bf16.mxu0 0
        %1044 = vmatpush1.bf16.msra.mxu0 0
        %1045 = vmatprep.subr.bf16.mxu0 0
        %1046 = vmatpush1.bf16.msra.mxu0 0
        %1047 = vmatprep.subr.bf16.mxu0 0
        %1048 = vmatpush1.bf16.msra.mxu0 0
        %1049 = vmatprep.subr.bf16.mxu0 0
        %1050 = vmatpush1.bf16.msra.mxu0 0
        %1051 = vmatprep.subr.bf16.mxu0 0
        %1052 = vmatpush1.bf16.msra.mxu0 %v1030
        %1053 = vmatprep.subr.bf16.mxu0 0
        %1054 = vmatpush1.bf16.msra.mxu0 %v1029
        %1055 = vmatprep.subr.bf16.mxu0 0
        %1056 = vmatpush2.bf16.msra.mxu0 0
        %1057 = vmatprep.subr.bf16.mxu0 0
        %1058 = vmatpush2.bf16.msra.mxu0 0
        %1059 = vmatprep.subr.bf16.mxu0 0
        %1060 = vmatpush2.bf16.msra.mxu0 0
        %1061 = vmatprep.subr.bf16.mxu0 0
        %1062 = vmatpush2.bf16.msra.mxu0 0
        %1063 = vmatprep.subr.bf16.mxu0 0
        %1064 = vmatpush2.bf16.msra.mxu0 0
        %1065 = vmatprep.subr.bf16.mxu0 0
        %1066 = vmatpush2.bf16.msra.mxu0 0
        %1067 = vmatprep.subr.bf16.mxu0 0
        %1068 = vmatpush2.bf16.msra.mxu0 0
        %1069 = vmatprep.subr.bf16.mxu0 0
        %1070 = vmatpush2.bf16.msra.mxu0 0
        %1071 = vmatprep.mubr.bf16.mxu0 0
        %1072 = vmatmul.mubr.bf16.gmra.mxu0 %v1034
        %v1073 = vpop.f32.mrf.mxu0
        %v1074 = vadd.f32 %v1020, %v1073
        %v1075 = vpop.f32.mrf.mxu0
        %v1076 = vpop.f32.mrf.mxu0
        %v1077 = vadd.f32 %v1020, %v1076
        %v1078 = vpop.f32.mrf.mxu0
        %1079 = vmatprep.mubr.bf16.mxu0 0
        %1080 = vmatmul.mubr.bf16.gmra.mxu0 %v1037
        %v1081 = vpop.f32.mrf.mxu0
        %v1082 = vadd.f32 %v1020, %v1081
        %v1083 = vpop.f32.mrf.mxu0
        %v1084 = vpop.f32.mrf.mxu0
        %v1085 = vadd.f32 %v1020, %v1084
        %v1086 = vpop.f32.mrf.mxu0
        %1087 = vdwg.mxu0
        %v1088 = vmax.f32 %v1074, 0.0
        %v1089 = vmax.f32 %v1077, 0.0
        %v1090 = vmax.f32 %v1082, 0.0
        %v1091 = vmax.f32 %v1085, 0.0
        %v1092 = vpack.c.bf16 %v1089, %v1088
        %v1093 = vpack.c.bf16 %v1091, %v1090
        %v1094 = vld [vmem:[%s11 + $0x2] sm:$0x1]
        %v1095 = vld [vmem:[%s8] sm:$0xf]
        %v1096 = vld [vmem:[%s8 + $0x4] sm:$0xf]
        %v1097 = vld [vmem:[%s8 + $0x8] sm:$0xf]
        %v1098 = vld [vmem:[%s8 + $0xc] sm:$0xf]
        %v1099 = vlaneseq
        %v1100 = vshrl.u32 %v1099, 7
        %v1101 = vsub.s32 0, %v1100
        %v1102 = vrot.slane %v1094, %v1101
        %v1107 = vunpack.c.l.b16 %v911
        %v1108 = vunpack.c.l.b16 %v912
        %v1109 = vunpack.c.l.b16 %v913
        %v1110 = vunpack.c.l.b16 %v914
        %v1111 = vpack.c.b16 %v1108, %v1107
        %v1112 = vpack.c.b16 %v1110, %v1109
        %v1117 = vunpack.c.l.b16 %v1095
        %v1118 = vunpack.c.l.b16 %v1096
        %v1119 = vunpack.c.l.b16 %v1097
        %v1120 = vunpack.c.l.b16 %v1098
        %v1121 = vpack.c.b16 %v1118, %v1117
        %v1122 = vpack.c.b16 %v1120, %v1119
        %v1126 = vsel %vm950, %v1111, 0
        %v1129 = vsel %vm950, %v1112, 0
        %1131 = vmatprep.subr.bf16.mxu0 0
        %1132 = vmatpush1.bf16.msra.mxu0 0
        %1133 = vmatprep.subr.bf16.mxu0 0
        %1134 = vmatpush1.bf16.msra.mxu0 0
        %1135 = vmatprep.subr.bf16.mxu0 0
        %1136 = vmatpush1.bf16.msra.mxu0 0
        %1137 = vmatprep.subr.bf16.mxu0 0
        %1138 = vmatpush1.bf16.msra.mxu0 0
        %1139 = vmatprep.subr.bf16.mxu0 0
        %1140 = vmatpush1.bf16.msra.mxu0 0
        %1141 = vmatprep.subr.bf16.mxu0 0
        %1142 = vmatpush1.bf16.msra.mxu0 0
        %1143 = vmatprep.subr.bf16.mxu0 0
        %1144 = vmatpush1.bf16.msra.mxu0 %v1122
        %1145 = vmatprep.subr.bf16.mxu0 0
        %1146 = vmatpush1.bf16.msra.mxu0 %v1121
        %1147 = vmatprep.subr.bf16.mxu0 0
        %1148 = vmatpush2.bf16.msra.mxu0 0
        %1149 = vmatprep.subr.bf16.mxu0 0
        %1150 = vmatpush2.bf16.msra.mxu0 0
        %1151 = vmatprep.subr.bf16.mxu0 0
        %1152 = vmatpush2.bf16.msra.mxu0 0
        %1153 = vmatprep.subr.bf16.mxu0 0
        %1154 = vmatpush2.bf16.msra.mxu0 0
        %1155 = vmatprep.subr.bf16.mxu0 0
        %1156 = vmatpush2.bf16.msra.mxu0 0
        %1157 = vmatprep.subr.bf16.mxu0 0
        %1158 = vmatpush2.bf16.msra.mxu0 0
        %1159 = vmatprep.subr.bf16.mxu0 0
        %1160 = vmatpush2.bf16.msra.mxu0 0
        %1161 = vmatprep.subr.bf16.mxu0 0
        %1162 = vmatpush2.bf16.msra.mxu0 0
        %1163 = vmatprep.mubr.bf16.mxu0 0
        %1164 = vmatmul.mubr.bf16.gmra.mxu0 %v1126
        %v1165 = vpop.f32.mrf.mxu0
        %v1166 = vadd.f32 %v1102, %v1165
        %v1167 = vpop.f32.mrf.mxu0
        %v1168 = vpop.f32.mrf.mxu0
        %v1169 = vadd.f32 %v1102, %v1168
        %v1170 = vpop.f32.mrf.mxu0
        %1171 = vmatprep.mubr.bf16.mxu0 0
        %1172 = vmatmul.mubr.bf16.gmra.mxu0 %v1129
        %v1173 = vpop.f32.mrf.mxu0
        %v1174 = vadd.f32 %v1102, %v1173
        %v1175 = vpop.f32.mrf.mxu0
        %v1176 = vpop.f32.mrf.mxu0
        %v1177 = vadd.f32 %v1102, %v1176
        %v1178 = vpop.f32.mrf.mxu0
        %1179 = vdwg.mxu0
        %v1180 = vmax.f32 %v1166, 0.0
        %v1181 = vmax.f32 %v1169, 0.0
        %v1182 = vmax.f32 %v1174, 0.0
        %v1183 = vmax.f32 %v1177, 0.0
        %v1184 = vpack.c.bf16 %v1181, %v1180
        %v1185 = vpack.c.bf16 %v1183, %v1182
        %v1186 = vld [vmem:[%s11 + $0x3] sm:$0x1]
        %v1187 = vld [vmem:[%s9] sm:$0xf]
        %v1188 = vld [vmem:[%s9 + $0x4] sm:$0xf]
        %v1189 = vld [vmem:[%s9 + $0x8] sm:$0xf]
        %v1190 = vld [vmem:[%s9 + $0xc] sm:$0xf]
        %v1191 = vlaneseq
        %v1192 = vshrl.u32 %v1191, 7
        %v1193 = vsub.s32 0, %v1192
        %v1194 = vrot.slane %v1186, %v1193
        %v1199 = vunpack.c.l.b16 %v1187
        %v1200 = vunpack.c.l.b16 %v1188
        %v1201 = vunpack.c.l.b16 %v1189
        %v1202 = vunpack.c.l.b16 %v1190
        %v1203 = vpack.c.b16 %v1200, %v1199
        %v1204 = vpack.c.b16 %v1202, %v1201
        %v1208 = vsel %vm950, %v1184, 0
        %v1211 = vsel %vm950, %v1185, 0
        %1213 = vmatprep.subr.bf16.mxu0 0
        %1214 = vmatpush1.bf16.msra.mxu0 0
        %1215 = vmatprep.subr.bf16.mxu0 0
        %1216 = vmatpush1.bf16.msra.mxu0 0
        %1217 = vmatprep.subr.bf16.mxu0 0
        %1218 = vmatpush1.bf16.msra.mxu0 0
        %1219 = vmatprep.subr.bf16.mxu0 0
        %1220 = vmatpush1.bf16.msra.mxu0 0
        %1221 = vmatprep.subr.bf16.mxu0 0
        %1222 = vmatpush1.bf16.msra.mxu0 0
        %1223 = vmatprep.subr.bf16.mxu0 0
        %1224 = vmatpush1.bf16.msra.mxu0 0
        %1225 = vmatprep.subr.bf16.mxu0 0
        %1226 = vmatpush1.bf16.msra.mxu0 %v1204
        %1227 = vmatprep.subr.bf16.mxu0 0
        %1228 = vmatpush1.bf16.msra.mxu0 %v1203
        %1229 = vmatprep.subr.bf16.mxu0 0
        %1230 = vmatpush2.bf16.msra.mxu0 0
        %1231 = vmatprep.subr.bf16.mxu0 0
        %1232 = vmatpush2.bf16.msra.mxu0 0
        %1233 = vmatprep.subr.bf16.mxu0 0
        %1234 = vmatpush2.bf16.msra.mxu0 0
        %1235 = vmatprep.subr.bf16.mxu0 0
        %1236 = vmatpush2.bf16.msra.mxu0 0
        %1237 = vmatprep.subr.bf16.mxu0 0
        %1238 = vmatpush2.bf16.msra.mxu0 0
        %1239 = vmatprep.subr.bf16.mxu0 0
        %1240 = vmatpush2.bf16.msra.mxu0 0
        %1241 = vmatprep.subr.bf16.mxu0 0
        %1242 = vmatpush2.bf16.msra.mxu0 0
        %1243 = vmatprep.subr.bf16.mxu0 0
        %1244 = vmatpush2.bf16.msra.mxu0 0
        %1245 = vmatprep.mubr.bf16.mxu0 0
        %1246 = vmatmul.mubr.bf16.gmra.mxu0 %v1208
        %v1247 = vpop.f32.mrf.mxu0
        %v1248 = vadd.f32 %v1194, %v1247
        %v1249 = vpop.f32.mrf.mxu0
        %v1250 = vpop.f32.mrf.mxu0
        %v1251 = vadd.f32 %v1194, %v1250
        %v1252 = vpop.f32.mrf.mxu0
        %1253 = vmatprep.mubr.bf16.mxu0 0
        %1254 = vmatmul.mubr.bf16.gmra.mxu0 %v1211
        %v1255 = vpop.f32.mrf.mxu0
        %v1256 = vadd.f32 %v1194, %v1255
        %v1257 = vpop.f32.mrf.mxu0
        %v1258 = vpop.f32.mrf.mxu0
        %v1259 = vadd.f32 %v1194, %v1258
        %v1260 = vpop.f32.mrf.mxu0
        %1261 = vdwg.mxu0
        %v1262 = vmax.f32 %v1248, 0.0
        %v1263 = vmax.f32 %v1251, 0.0
        %v1264 = vmax.f32 %v1256, 0.0
        %v1265 = vmax.f32 %v1259, 0.0
        %v1266 = vpack.c.bf16 %v1263, %v1262
        %v1267 = vpack.c.bf16 %v1265, %v1264
        %v1268 = vld [vmem:[%s7] sm:$0xf]
        %v1269 = vld [vmem:[%s7 + $0x4] sm:$0xf]
        %v1270 = vld [vmem:[%s7 + $0x8] sm:$0xf]
        %v1271 = vld [vmem:[%s7 + $0xc] sm:$0xf]
        %v1272 = vld [vmem:[%s10] sm:$0xf]
        %v1273 = vld [vmem:[%s10 + $0x4] sm:$0xf]
        %v1274 = vld [vmem:[%s10 + $0x8] sm:$0xf]
        %v1275 = vld [vmem:[%s10 + $0xc] sm:$0xf]
        %v1280 = vunpack.c.l.b16 %v1272
        %v1281 = vunpack.c.l.b16 %v1273
        %v1282 = vunpack.c.l.b16 %v1274
        %v1283 = vunpack.c.l.b16 %v1275
        %v1284 = vpack.c.b16 %v1281, %v1280
        %v1285 = vpack.c.b16 %v1283, %v1282
        %v1289 = vsel %vm950, %v1266, 0
        %v1292 = vsel %vm950, %v1267, 0
        %1294 = vmatprep.subr.bf16.mxu0 0
        %1295 = vmatpush1.bf16.msra.mxu0 0
        %1296 = vmatprep.subr.bf16.mxu0 0
        %1297 = vmatpush1.bf16.msra.mxu0 0
        %1298 = vmatprep.subr.bf16.mxu0 0
        %1299 = vmatpush1.bf16.msra.mxu0 0
        %1300 = vmatprep.subr.bf16.mxu0 0
        %1301 = vmatpush1.bf16.msra.mxu0 0
        %1302 = vmatprep.subr.bf16.mxu0 0
        %1303 = vmatpush1.bf16.msra.mxu0 0
        %1304 = vmatprep.subr.bf16.mxu0 0
        %1305 = vmatpush1.bf16.msra.mxu0 0
        %1306 = vmatprep.subr.bf16.mxu0 0
        %1307 = vmatpush1.bf16.msra.mxu0 %v1285
        %1308 = vmatprep.subr.bf16.mxu0 0
        %1309 = vmatpush1.bf16.msra.mxu0 %v1284
        %1310 = vmatprep.subr.bf16.mxu0 0
        %1311 = vmatpush2.bf16.msra.mxu0 0
        %1312 = vmatprep.subr.bf16.mxu0 0
        %1313 = vmatpush2.bf16.msra.mxu0 0
        %1314 = vmatprep.subr.bf16.mxu0 0
        %1315 = vmatpush2.bf16.msra.mxu0 0
        %1316 = vmatprep.subr.bf16.mxu0 0
        %1317 = vmatpush2.bf16.msra.mxu0 0
        %1318 = vmatprep.subr.bf16.mxu0 0
        %1319 = vmatpush2.bf16.msra.mxu0 0
        %1320 = vmatprep.subr.bf16.mxu0 0
        %1321 = vmatpush2.bf16.msra.mxu0 0
        %1322 = vmatprep.subr.bf16.mxu0 0
        %1323 = vmatpush2.bf16.msra.mxu0 0
        %1324 = vmatprep.subr.bf16.mxu0 0
        %1325 = vmatpush2.bf16.msra.mxu0 0
        %1326 = vmatprep.mubr.bf16.mxu0 0
        %1327 = vmatmul.mubr.bf16.gmra.mxu0 %v1289
        %v1328 = vpop.f32.mrf.mxu0
        %v1329 = vadd.f32 0.0, %v1328
        %v1330 = vpop.f32.mrf.mxu0
        %v1331 = vpop.f32.mrf.mxu0
        %v1332 = vadd.f32 0.0, %v1331
        %v1333 = vpop.f32.mrf.mxu0
        %1334 = vmatprep.mubr.bf16.mxu0 0
        %1335 = vmatmul.mubr.bf16.gmra.mxu0 %v1292
        %v1336 = vpop.f32.mrf.mxu0
        %v1337 = vadd.f32 0.0, %v1336
        %v1338 = vpop.f32.mrf.mxu0
        %v1339 = vpop.f32.mrf.mxu0
        %v1340 = vadd.f32 0.0, %v1339
        %v1341 = vpop.f32.mrf.mxu0
        %1342 = vdwg.mxu0
        %v1347 = vunpack.c.l.b16 %v1268
        %v1348 = vunpack.c.l.b16 %v1269
        %v1349 = vunpack.c.l.b16 %v1270
        %v1350 = vunpack.c.l.b16 %v1271
        %v1351 = vpack.c.b16 %v1348, %v1347
        %v1352 = vpack.c.b16 %v1350, %v1349
        %v1356 = vsel %vm950, %v1092, 0
        %v1359 = vsel %vm950, %v1093, 0
        %1361 = vmatprep.subr.bf16.mxu0 0
        %1362 = vmatpush1.bf16.msra.mxu0 0
        %1363 = vmatprep.subr.bf16.mxu0 0
        %1364 = vmatpush1.bf16.msra.mxu0 0
        %1365 = vmatprep.subr.bf16.mxu0 0
        %1366 = vmatpush1.bf16.msra.mxu0 0
        %1367 = vmatprep.subr.bf16.mxu0 0
        %1368 = vmatpush1.bf16.msra.mxu0 0
        %1369 = vmatprep.subr.bf16.mxu0 0
        %1370 = vmatpush1.bf16.msra.mxu0 0
        %1371 = vmatprep.subr.bf16.mxu0 0
        %1372 = vmatpush1.bf16.msra.mxu0 0
        %1373 = vmatprep.subr.bf16.mxu0 0
        %1374 = vmatpush1.bf16.msra.mxu0 %v1352
        %1375 = vmatprep.subr.bf16.mxu0 0
        %1376 = vmatpush1.bf16.msra.mxu0 %v1351
        %1377 = vmatprep.subr.bf16.mxu0 0
        %1378 = vmatpush2.bf16.msra.mxu0 0
        %1379 = vmatprep.subr.bf16.mxu0 0
        %1380 = vmatpush2.bf16.msra.mxu0 0
        %1381 = vmatprep.subr.bf16.mxu0 0
        %1382 = vmatpush2.bf16.msra.mxu0 0
        %1383 = vmatprep.subr.bf16.mxu0 0
        %1384 = vmatpush2.bf16.msra.mxu0 0
        %1385 = vmatprep.subr.bf16.mxu0 0
        %1386 = vmatpush2.bf16.msra.mxu0 0
        %1387 = vmatprep.subr.bf16.mxu0 0
        %1388 = vmatpush2.bf16.msra.mxu0 0
        %1389 = vmatprep.subr.bf16.mxu0 0
        %1390 = vmatpush2.bf16.msra.mxu0 0
        %1391 = vmatprep.subr.bf16.mxu0 0
        %1392 = vmatpush2.bf16.msra.mxu0 0
        %1393 = vmatprep.mubr.bf16.mxu0 0
        %1394 = vmatmul.mubr.bf16.gmra.mxu0 %v1356
        %v1395 = vpop.f32.mrf.mxu0
        %v1396 = vadd.f32 %v1329, %v1395
        %v1397 = vpop.f32.mrf.mxu0
        %v1398 = vpop.f32.mrf.mxu0
        %v1399 = vadd.f32 %v1332, %v1398
        %v1400 = vpop.f32.mrf.mxu0
        %1401 = vmatprep.mubr.bf16.mxu0 0
        %1402 = vmatmul.mubr.bf16.gmra.mxu0 %v1359
        %v1403 = vpop.f32.mrf.mxu0
        %v1404 = vadd.f32 %v1337, %v1403
        %v1405 = vpop.f32.mrf.mxu0
        %v1406 = vpop.f32.mrf.mxu0
        %v1407 = vadd.f32 %v1340, %v1406
        %v1408 = vpop.f32.mrf.mxu0
        %1409 = vdwg.mxu0
        %v1410 = vld [vmem:[%s12] sm:$0x1]
        %v1412 = vlaneseq
        %v1413 = vshrl.u32 %v1412, 7
        %v1414 = vsub.s32 0, %v1413
        %v1415 = vrot.slane %v1410, %v1414
        %v1417 = vadd.f32 %v1396, %v1415
        %v1418 = vadd.f32 %v1399, %v1415
        %v1419 = vadd.f32 %v1404, %v1415
        %v1420 = vadd.f32 %v1407, %v1415
        %v1421 = vxor.u32 %v1417, 2147483648
        %v1422 = vxor.u32 %v1418, 2147483648
        %v1423 = vxor.u32 %v1419, 2147483648
        %v1424 = vxor.u32 %v1420, 2147483648
        %v1425 = vmul.f32 %v1421, 1.442695
        %v1426 = vpow.pop %v1425
        %v1427 = vmul.f32 %v1422, 1.442695
        %v1428 = vpow.pop %v1427
        %v1429 = vmul.f32 %v1423, 1.442695
        %v1430 = vpow.pop %v1429
        %v1431 = vmul.f32 %v1424, 1.442695
        %v1432 = vpow.pop %v1431
        %v1433 = vadd.f32 %v1426, 1.0
        %v1434 = vadd.f32 %v1428, 1.0
        %v1435 = vadd.f32 %v1430, 1.0
        %v1436 = vadd.f32 %v1432, 1.0
        %v1437 = vrcp.pop %v1433
        %v1438 = vmul.f32 1.0, %v1437
        %v1439 = vrcp.pop %v1434
        %v1440 = vmul.f32 1.0, %v1439
        %v1441 = vrcp.pop %v1435
        %v1442 = vmul.f32 1.0, %v1441
        %v1443 = vrcp.pop %v1436
        %v1444 = vmul.f32 1.0, %v1443
        %1445 = vst [vmem:[%s811] sm:$0xff] %v1438
        %1446 = vst [vmem:[%s811 + $0x8] sm:$0xff] %v1440
        %1447 = vst [vmem:[%s811 + $0x10] sm:$0xff] %v1442
        %1448 = vst [vmem:[%s811 + $0x18] sm:$0xff] %v1444
        %v1449 = vld [vmem:[%s13] sm:$0xf]
        %v1450 = vld [vmem:[%s13 + $0x4] sm:$0xf]
        %v1451 = vld [vmem:[%s13 + $0x8] sm:$0xf]
        %v1452 = vld [vmem:[%s13 + $0xc] sm:$0xf]
        %v1453 = vld [vmem:[%s17] sm:$0x1]
        %v1454 = vlaneseq
        %v1455 = vshrl.u32 %v1454, 7
        %v1456 = vsub.s32 0, %v1455
        %v1457 = vrot.slane %v1453, %v1456
        %v1462 = vunpack.c.l.b16 %v1449
        %v1463 = vunpack.c.l.b16 %v1450
        %v1464 = vunpack.c.l.b16 %v1451
        %v1465 = vunpack.c.l.b16 %v1452
        %v1466 = vpack.c.b16 %v1463, %v1462
        %v1467 = vpack.c.b16 %v1465, %v1464
        %1470 = vmatprep.subr.bf16.mxu0 0
        %1471 = vmatpush1.bf16.msra.mxu0 0
        %1472 = vmatprep.subr.bf16.mxu0 0
        %1473 = vmatpush1.bf16.msra.mxu0 0
        %1474 = vmatprep.subr.bf16.mxu0 0
        %1475 = vmatpush1.bf16.msra.mxu0 0
        %1476 = vmatprep.subr.bf16.mxu0 0
        %1477 = vmatpush1.bf16.msra.mxu0 0
        %1478 = vmatprep.subr.bf16.mxu0 0
        %1479 = vmatpush1.bf16.msra.mxu0 0
        %1480 = vmatprep.subr.bf16.mxu0 0
        %1481 = vmatpush1.bf16.msra.mxu0 0
        %1482 = vmatprep.subr.bf16.mxu0 0
        %1483 = vmatpush1.bf16.msra.mxu0 %v1467
        %1484 = vmatprep.subr.bf16.mxu0 0
        %1485 = vmatpush1.bf16.msra.mxu0 %v1466
        %1486 = vmatprep.subr.bf16.mxu0 0
        %1487 = vmatpush2.bf16.msra.mxu0 0
        %1488 = vmatprep.subr.bf16.mxu0 0
        %1489 = vmatpush2.bf16.msra.mxu0 0
        %1490 = vmatprep.subr.bf16.mxu0 0
        %1491 = vmatpush2.bf16.msra.mxu0 0
        %1492 = vmatprep.subr.bf16.mxu0 0
        %1493 = vmatpush2.bf16.msra.mxu0 0
        %1494 = vmatprep.subr.bf16.mxu0 0
        %1495 = vmatpush2.bf16.msra.mxu0 0
        %1496 = vmatprep.subr.bf16.mxu0 0
        %1497 = vmatpush2.bf16.msra.mxu0 0
        %1498 = vmatprep.subr.bf16.mxu0 0
        %1499 = vmatpush2.bf16.msra.mxu0 0
        %1500 = vmatprep.subr.bf16.mxu0 0
        %1501 = vmatpush2.bf16.msra.mxu0 0
        %1502 = vmatprep.mubr.bf16.mxu0 0
        %1503 = vmatmul.mubr.bf16.gmra.mxu0 %v1126
        %v1504 = vpop.f32.mrf.mxu0
        %v1505 = vadd.f32 %v1457, %v1504
        %v1506 = vpop.f32.mrf.mxu0
        %v1507 = vpop.f32.mrf.mxu0
        %v1508 = vadd.f32 %v1457, %v1507
        %v1509 = vpop.f32.mrf.mxu0
        %1510 = vmatprep.mubr.bf16.mxu0 0
        %1511 = vmatmul.mubr.bf16.gmra.mxu0 %v1129
        %v1512 = vpop.f32.mrf.mxu0
        %v1513 = vadd.f32 %v1457, %v1512
        %v1514 = vpop.f32.mrf.mxu0
        %v1515 = vpop.f32.mrf.mxu0
        %v1516 = vadd.f32 %v1457, %v1515
        %v1517 = vpop.f32.mrf.mxu0
        %1518 = vdwg.mxu0
        %v1519 = vld [vmem:[%s17 + $0x1] sm:$0x1]
        %v1520 = vld [vmem:[%s17 + $0x2] sm:$0x1]
        %v1521 = vsel %vm950, %v1505, 0.0
        %1522 = vadd.xlane.f32.xlu0 %v1521
        %v1523 = vpop.xlane.xlu0 %1522
        %v1524 = vsel %vm950, %v1508, 0.0
        %1525 = vadd.xlane.f32.xlu0 %v1524
        %v1526 = vpop.xlane.xlu0 %1525
        %v1527 = vsel %vm950, %v1513, 0.0
        %1528 = vadd.xlane.f32.xlu0 %v1527
        %v1529 = vpop.xlane.xlu0 %1528
        %v1530 = vsel %vm950, %v1516, 0.0
        %1531 = vadd.xlane.f32.xlu0 %v1530
        %v1532 = vpop.xlane.xlu0 %1531
        %v1533 = vrcp.pop 32.0
        %v1534 = vmul.f32 %v1523, %v1533
        %v1535 = vmul.f32 %v1526, %v1533
        %v1536 = vmul.f32 %v1529, %v1533
        %v1537 = vmul.f32 %v1532, %v1533
        %v1538 = vsub.f32 %v1505, %v1534
        %v1539 = vsub.f32 %v1508, %v1535
        %v1540 = vsub.f32 %v1513, %v1536
        %v1541 = vsub.f32 %v1516, %v1537
        %v1542 = vmul.f32 %v1538, %v1538
        %v1543 = vmul.f32 %v1539, %v1539
        %v1544 = vmul.f32 %v1540, %v1540
        %v1545 = vmul.f32 %v1541, %v1541
        %v1546 = vsel %vm950, %v1542, 0.0
        %1547 = vadd.xlane.f32.xlu0 %v1546
        %v1548 = vpop.xlane.xlu0 %1547
        %v1549 = vsel %vm950, %v1543, 0.0
        %1550 = vadd.xlane.f32.xlu0 %v1549
        %v1551 = vpop.xlane.xlu0 %1550
        %v1552 = vsel %vm950, %v1544, 0.0
        %1553 = vadd.xlane.f32.xlu0 %v1552
        %v1554 = vpop.xlane.xlu0 %1553
        %v1555 = vsel %vm950, %v1545, 0.0
        %1556 = vadd.xlane.f32.xlu0 %v1555
        %v1557 = vpop.xlane.xlu0 %1556
        %v1558 = vmul.f32 %v1548, %v1533
        %v1559 = vmul.f32 %v1551, %v1533
        %v1560 = vmul.f32 %v1554, %v1533
        %v1561 = vmul.f32 %v1557, %v1533
        %v1562 = vadd.f32 %v1558, 1e-05
        %v1563 = vadd.f32 %v1559, 1e-05
        %v1564 = vadd.f32 %v1560, 1e-05
        %v1565 = vadd.f32 %v1561, 1e-05
        %v1566 = vrsqrt.pop %v1562
        %v1567 = vrsqrt.pop %v1563
        %v1568 = vrsqrt.pop %v1564
        %v1569 = vrsqrt.pop %v1565
        %v1570 = vmul.f32 %v1538, %v1566
        %v1571 = vmul.f32 %v1539, %v1567
        %v1572 = vmul.f32 %v1540, %v1568
        %v1573 = vmul.f32 %v1541, %v1569
        %v1574 = vlaneseq
        %v1575 = vshrl.u32 %v1574, 7
        %v1576 = vsub.s32 0, %v1575
        %v1577 = vrot.slane %v1519, %v1576
        %v1578 = vmul.f32 %v1570, %v1577
        %v1579 = vmul.f32 %v1571, %v1577
        %v1580 = vmul.f32 %v1572, %v1577
        %v1581 = vmul.f32 %v1573, %v1577
        %v1582 = vlaneseq
        %v1583 = vshrl.u32 %v1582, 7
        %v1584 = vsub.s32 0, %v1583
        %v1585 = vrot.slane %v1520, %v1584
        %v1586 = vadd.f32 %v1578, %v1585
        %v1587 = vadd.f32 %v1579, %v1585
        %v1588 = vadd.f32 %v1580, %v1585
        %v1589 = vadd.f32 %v1581, %v1585
        %v1590 = vmul.f32 %v1586, %v1586
        %v1591 = vmul.f32 %v1587, %v1587
        %v1592 = vmul.f32 %v1588, %v1588
        %v1593 = vmul.f32 %v1589, %v1589
        %v1594 = vsel %vm950, %v1590, 0.0
        %1595 = vadd.xlane.f32.xlu0 %v1594
        %v1596 = vpop.xlane.xlu0 %1595
        %v1597 = vsel %vm950, %v1591, 0.0
        %1598 = vadd.xlane.f32.xlu0 %v1597
        %v1599 = vpop.xlane.xlu0 %1598
        %v1600 = vsel %vm950, %v1592, 0.0
        %1601 = vadd.xlane.f32.xlu0 %v1600
        %v1602 = vpop.xlane.xlu0 %1601
        %v1603 = vsel %vm950, %v1593, 0.0
        %1604 = vadd.xlane.f32.xlu0 %v1603
        %v1605 = vpop.xlane.xlu0 %1604
        %v1606 = vadd.f32 %v1596, 1e-12
        %v1607 = vadd.f32 %v1599, 1e-12
        %v1608 = vadd.f32 %v1602, 1e-12
        %v1609 = vadd.f32 %v1605, 1e-12
        %v1610 = vrsqrt.pop %v1606
        %v1611 = vrsqrt.pop %v1607
        %v1612 = vrsqrt.pop %v1608
        %v1613 = vrsqrt.pop %v1609
        %v1614 = vmul.f32 %v1586, %v1610
        %v1615 = vmul.f32 %v1587, %v1611
        %v1616 = vmul.f32 %v1588, %v1612
        %v1617 = vmul.f32 %v1589, %v1613
        %v1618 = vpack.c.bf16 %v1615, %v1614
        %v1619 = vpack.c.bf16 %v1617, %v1616
        %s1620 = sld [smem:[#allocation2]]
        %v1621 = vld [vmem:[%s14] sm:$0xf]
        %v1622 = vld [vmem:[%s14 + $0x4] sm:$0xf]
        %v1623 = vld [vmem:[%s14 + $0x8] sm:$0xf]
        %v1624 = vld [vmem:[%s14 + $0xc] sm:$0xf]
        %v1625 = vld [vmem:[%s18] sm:$0x1]
        %v1627 = vlaneseq
        %v1628 = vshrl.u32 %v1627, 7
        %v1629 = vsub.s32 0, %v1628
        %v1630 = vrot.slane %v1625, %v1629
        %v1636 = vunpack.c.l.b16 %v1621
        %v1637 = vunpack.c.l.b16 %v1622
        %v1638 = vunpack.c.l.b16 %v1623
        %v1639 = vunpack.c.l.b16 %v1624
        %v1640 = vpack.c.b16 %v1637, %v1636
        %v1641 = vpack.c.b16 %v1639, %v1638
        %v1645 = vsel %vm950, %v1618, 0
        %v1648 = vsel %vm950, %v1619, 0
        %1650 = vmatprep.subr.bf16.mxu0 0
        %1651 = vmatpush1.bf16.msra.mxu0 0
        %1652 = vmatprep.subr.bf16.mxu0 0
        %1653 = vmatpush1.bf16.msra.mxu0 0
        %1654 = vmatprep.subr.bf16.mxu0 0
        %1655 = vmatpush1.bf16.msra.mxu0 0
        %1656 = vmatprep.subr.bf16.mxu0 0
        %1657 = vmatpush1.bf16.msra.mxu0 0
        %1658 = vmatprep.subr.bf16.mxu0 0
        %1659 = vmatpush1.bf16.msra.mxu0 0
        %1660 = vmatprep.subr.bf16.mxu0 0
        %1661 = vmatpush1.bf16.msra.mxu0 0
        %1662 = vmatprep.subr.bf16.mxu0 0
        %1663 = vmatpush1.bf16.msra.mxu0 %v1641
        %1664 = vmatprep.subr.bf16.mxu0 0
        %1665 = vmatpush1.bf16.msra.mxu0 %v1640
        %1666 = vmatprep.subr.bf16.mxu0 0
        %1667 = vmatpush2.bf16.msra.mxu0 0
        %1668 = vmatprep.subr.bf16.mxu0 0
        %1669 = vmatpush2.bf16.msra.mxu0 0
        %1670 = vmatprep.subr.bf16.mxu0 0
        %1671 = vmatpush2.bf16.msra.mxu0 0
        %1672 = vmatprep.subr.bf16.mxu0 0
        %1673 = vmatpush2.bf16.msra.mxu0 0
        %1674 = vmatprep.subr.bf16.mxu0 0
        %1675 = vmatpush2.bf16.msra.mxu0 0
        %1676 = vmatprep.subr.bf16.mxu0 0
        %1677 = vmatpush2.bf16.msra.mxu0 0
        %1678 = vmatprep.subr.bf16.mxu0 0
        %1679 = vmatpush2.bf16.msra.mxu0 0
        %1680 = vmatprep.subr.bf16.mxu0 0
        %1681 = vmatpush2.bf16.msra.mxu0 0
        %1682 = vmatprep.mubr.bf16.mxu0 0
        %1683 = vmatmul.mubr.bf16.gmra.mxu0 %v1645
        %v1684 = vpop.f32.mrf.mxu0
        %v1685 = vadd.f32 %v1630, %v1684
        %v1686 = vpop.f32.mrf.mxu0
        %v1687 = vpop.f32.mrf.mxu0
        %v1688 = vadd.f32 %v1630, %v1687
        %v1689 = vpop.f32.mrf.mxu0
        %1690 = vmatprep.mubr.bf16.mxu0 0
        %1691 = vmatmul.mubr.bf16.gmra.mxu0 %v1648
        %v1692 = vpop.f32.mrf.mxu0
        %v1693 = vadd.f32 %v1630, %v1692
        %v1694 = vpop.f32.mrf.mxu0
        %v1695 = vpop.f32.mrf.mxu0
        %v1696 = vadd.f32 %v1630, %v1695
        %v1697 = vpop.f32.mrf.mxu0
        %1698 = vdwg.mxu0
        %v1699 = vstv %s1620
        %v1700 = vmul.f32 %v1699, %v1685
        %v1701 = vmul.f32 %v1699, %v1688
        %v1702 = vmul.f32 %v1699, %v1693
        %v1703 = vmul.f32 %v1699, %v1696
        %1704 = vst [vmem:[%s817] sm:$0xff] %v1700
        %1705 = vst [vmem:[%s817 + $0x8] sm:$0xff] %v1701
        %1706 = vst [vmem:[%s817 + $0x10] sm:$0xff] %v1702
        %1707 = vst [vmem:[%s817 + $0x18] sm:$0xff] %v1703
        %v1708 = vld [vmem:[%s15] sm:$0xf]
        %v1709 = vld [vmem:[%s15 + $0x4] sm:$0xf]
        %v1710 = vld [vmem:[%s15 + $0x8] sm:$0xf]
        %v1711 = vld [vmem:[%s15 + $0xc] sm:$0xf]
        %v1712 = vld [vmem:[%s17 + $0x3] sm:$0x1]
        %v1713 = vlaneseq
        %v1714 = vshrl.u32 %v1713, 7
        %v1715 = vsub.s32 0, %v1714
        %v1716 = vrot.slane %v1712, %v1715
        %v1721 = vunpack.c.l.b16 %v915
        %v1722 = vunpack.c.l.b16 %v916
        %v1723 = vunpack.c.l.b16 %v917
        %v1724 = vunpack.c.l.b16 %v918
        %v1725 = vpack.c.b16 %v1722, %v1721
        %v1726 = vpack.c.b16 %v1724, %v1723
        %v1731 = vunpack.c.l.b16 %v1708
        %v1732 = vunpack.c.l.b16 %v1709
        %v1733 = vunpack.c.l.b16 %v1710
        %v1734 = vunpack.c.l.b16 %v1711
        %v1735 = vpack.c.b16 %v1732, %v1731
        %v1736 = vpack.c.b16 %v1734, %v1733
        %v1740 = vsel %vm950, %v1725, 0
        %v1743 = vsel %vm950, %v1726, 0
        %1745 = vmatprep.subr.bf16.mxu0 0
        %1746 = vmatpush1.bf16.msra.mxu0 0
        %1747 = vmatprep.subr.bf16.mxu0 0
        %1748 = vmatpush1.bf16.msra.mxu0 0
        %1749 = vmatprep.subr.bf16.mxu0 0
        %1750 = vmatpush1.bf16.msra.mxu0 0
        %1751 = vmatprep.subr.bf16.mxu0 0
        %1752 = vmatpush1.bf16.msra.mxu0 0
        %1753 = vmatprep.subr.bf16.mxu0 0
        %1754 = vmatpush1.bf16.msra.mxu0 0
        %1755 = vmatprep.subr.bf16.mxu0 0
        %1756 = vmatpush1.bf16.msra.mxu0 0
        %1757 = vmatprep.subr.bf16.mxu0 0
        %1758 = vmatpush1.bf16.msra.mxu0 %v1736
        %1759 = vmatprep.subr.bf16.mxu0 0
        %1760 = vmatpush1.bf16.msra.mxu0 %v1735
        %1761 = vmatprep.subr.bf16.mxu0 0
        %1762 = vmatpush2.bf16.msra.mxu0 0
        %1763 = vmatprep.subr.bf16.mxu0 0
        %1764 = vmatpush2.bf16.msra.mxu0 0
        %1765 = vmatprep.subr.bf16.mxu0 0
        %1766 = vmatpush2.bf16.msra.mxu0 0
        %1767 = vmatprep.subr.bf16.mxu0 0
        %1768 = vmatpush2.bf16.msra.mxu0 0
        %1769 = vmatprep.subr.bf16.mxu0 0
        %1770 = vmatpush2.bf16.msra.mxu0 0
        %1771 = vmatprep.subr.bf16.mxu0 0
        %1772 = vmatpush2.bf16.msra.mxu0 0
        %1773 = vmatprep.subr.bf16.mxu0 0
        %1774 = vmatpush2.bf16.msra.mxu0 0
        %1775 = vmatprep.subr.bf16.mxu0 0
        %1776 = vmatpush2.bf16.msra.mxu0 0
        %1777 = vmatprep.mubr.bf16.mxu0 0
        %1778 = vmatmul.mubr.bf16.gmra.mxu0 %v1740
        %v1779 = vpop.f32.mrf.mxu0
        %v1780 = vadd.f32 %v1716, %v1779
        %v1781 = vpop.f32.mrf.mxu0
        %v1782 = vpop.f32.mrf.mxu0
        %v1783 = vadd.f32 %v1716, %v1782
        %v1784 = vpop.f32.mrf.mxu0
        %1785 = vmatprep.mubr.bf16.mxu0 0
        %1786 = vmatmul.mubr.bf16.gmra.mxu0 %v1743
        %v1787 = vpop.f32.mrf.mxu0
        %v1788 = vadd.f32 %v1716, %v1787
        %v1789 = vpop.f32.mrf.mxu0
        %v1790 = vpop.f32.mrf.mxu0
        %v1791 = vadd.f32 %v1716, %v1790
        %v1792 = vpop.f32.mrf.mxu0
        %1793 = vdwg.mxu0
        %v1794 = vld [vmem:[%s17 + $0x4] sm:$0x1]
        %v1795 = vld [vmem:[%s17 + $0x5] sm:$0x1]
        %v1796 = vsel %vm950, %v1780, 0.0
        %1797 = vadd.xlane.f32.xlu0 %v1796
        %v1798 = vpop.xlane.xlu0 %1797
        %v1799 = vsel %vm950, %v1783, 0.0
        %1800 = vadd.xlane.f32.xlu0 %v1799
        %v1801 = vpop.xlane.xlu0 %1800
        %v1802 = vsel %vm950, %v1788, 0.0
        %1803 = vadd.xlane.f32.xlu0 %v1802
        %v1804 = vpop.xlane.xlu0 %1803
        %v1805 = vsel %vm950, %v1791, 0.0
        %1806 = vadd.xlane.f32.xlu0 %v1805
        %v1807 = vpop.xlane.xlu0 %1806
        %v1808 = vmul.f32 %v1798, %v1533
        %v1809 = vmul.f32 %v1801, %v1533
        %v1810 = vmul.f32 %v1804, %v1533
        %v1811 = vmul.f32 %v1807, %v1533
        %v1812 = vsub.f32 %v1780, %v1808
        %v1813 = vsub.f32 %v1783, %v1809
        %v1814 = vsub.f32 %v1788, %v1810
        %v1815 = vsub.f32 %v1791, %v1811
        %v1816 = vmul.f32 %v1812, %v1812
        %v1817 = vmul.f32 %v1813, %v1813
        %v1818 = vmul.f32 %v1814, %v1814
        %v1819 = vmul.f32 %v1815, %v1815
        %v1820 = vsel %vm950, %v1816, 0.0
        %1821 = vadd.xlane.f32.xlu0 %v1820
        %v1822 = vpop.xlane.xlu0 %1821
        %v1823 = vsel %vm950, %v1817, 0.0
        %1824 = vadd.xlane.f32.xlu0 %v1823
        %v1825 = vpop.xlane.xlu0 %1824
        %v1826 = vsel %vm950, %v1818, 0.0
        %1827 = vadd.xlane.f32.xlu0 %v1826
        %v1828 = vpop.xlane.xlu0 %1827
        %v1829 = vsel %vm950, %v1819, 0.0
        %1830 = vadd.xlane.f32.xlu0 %v1829
        %v1831 = vpop.xlane.xlu0 %1830
        %v1832 = vmul.f32 %v1822, %v1533
        %v1833 = vmul.f32 %v1825, %v1533
        %v1834 = vmul.f32 %v1828, %v1533
        %v1835 = vmul.f32 %v1831, %v1533
        %v1836 = vadd.f32 %v1832, 1e-05
        %v1837 = vadd.f32 %v1833, 1e-05
        %v1838 = vadd.f32 %v1834, 1e-05
        %v1839 = vadd.f32 %v1835, 1e-05
        %v1840 = vrsqrt.pop %v1836
        %v1841 = vrsqrt.pop %v1837
        %v1842 = vrsqrt.pop %v1838
        %v1843 = vrsqrt.pop %v1839
        %v1844 = vmul.f32 %v1812, %v1840
        %v1845 = vmul.f32 %v1813, %v1841
        %v1846 = vmul.f32 %v1814, %v1842
        %v1847 = vmul.f32 %v1815, %v1843
        %v1848 = vlaneseq
        %v1849 = vshrl.u32 %v1848, 7
        %v1850 = vsub.s32 0, %v1849
        %v1851 = vrot.slane %v1794, %v1850
        %v1852 = vmul.f32 %v1844, %v1851
        %v1853 = vmul.f32 %v1845, %v1851
        %v1854 = vmul.f32 %v1846, %v1851
        %v1855 = vmul.f32 %v1847, %v1851
        %v1856 = vlaneseq
        %v1857 = vshrl.u32 %v1856, 7
        %v1858 = vsub.s32 0, %v1857
        %v1859 = vrot.slane %v1795, %v1858
        %v1860 = vadd.f32 %v1852, %v1859
        %v1861 = vadd.f32 %v1853, %v1859
        %v1862 = vadd.f32 %v1854, %v1859
        %v1863 = vadd.f32 %v1855, %v1859
        %1864 = vst.msk [vmem:[%s829] sm:$0xff] %vm950, %v1860
        %1865 = vst.msk [vmem:[%s829 + $0x8] sm:$0xff] %vm950, %v1861
        %1866 = vst.msk [vmem:[%s829 + $0x10] sm:$0xff] %vm950, %v1862
        %1867 = vst.msk [vmem:[%s829 + $0x18] sm:$0xff] %vm950, %v1863
        %v1868 = vld [vmem:[%s880] sm:$0xff]
        %v1869 = vld [vmem:[%s880 + $0x8] sm:$0xff]
        %v1870 = vld [vmem:[%s880 + $0x10] sm:$0xff]
        %v1871 = vld [vmem:[%s880 + $0x18] sm:$0xff]
        %v1872 = vadd.f32 %v1860, %v1868
        %v1873 = vadd.f32 %v1861, %v1869
        %v1874 = vadd.f32 %v1862, %v1870
        %v1875 = vadd.f32 %v1863, %v1871
        %v1876 = vmul.f32 %v1872, %v1872
        %v1877 = vmul.f32 %v1873, %v1873
        %v1878 = vmul.f32 %v1874, %v1874
        %v1879 = vmul.f32 %v1875, %v1875
        %v1880 = vsel %vm950, %v1876, 0.0
        %1881 = vadd.xlane.f32.xlu0 %v1880
        %v1882 = vpop.xlane.xlu0 %1881
        %v1883 = vsel %vm950, %v1877, 0.0
        %1884 = vadd.xlane.f32.xlu0 %v1883
        %v1885 = vpop.xlane.xlu0 %1884
        %v1886 = vsel %vm950, %v1878, 0.0
        %1887 = vadd.xlane.f32.xlu0 %v1886
        %v1888 = vpop.xlane.xlu0 %1887
        %v1889 = vsel %vm950, %v1879, 0.0
        %1890 = vadd.xlane.f32.xlu0 %v1889
        %v1891 = vpop.xlane.xlu0 %1890
        %v1892 = vadd.f32 %v1882, 1e-12
        %v1893 = vadd.f32 %v1885, 1e-12
        %v1894 = vadd.f32 %v1888, 1e-12
        %v1895 = vadd.f32 %v1891, 1e-12
        %v1896 = vrsqrt.pop %v1892
        %v1897 = vrsqrt.pop %v1893
        %v1898 = vrsqrt.pop %v1894
        %v1899 = vrsqrt.pop %v1895
        %v1900 = vmul.f32 %v1872, %v1896
        %v1901 = vmul.f32 %v1873, %v1897
        %v1902 = vmul.f32 %v1874, %v1898
        %v1903 = vmul.f32 %v1875, %v1899
        %v1904 = vpack.c.bf16 %v1901, %v1900
        %v1905 = vpack.c.bf16 %v1903, %v1902
        %s1906 = sld [smem:[#allocation2 + $0x1]]
        %v1907 = vld [vmem:[%s16] sm:$0xf]
        %v1908 = vld [vmem:[%s16 + $0x4] sm:$0xf]
        %v1909 = vld [vmem:[%s16 + $0x8] sm:$0xf]
        %v1910 = vld [vmem:[%s16 + $0xc] sm:$0xf]
        %v1911 = vld [vmem:[%s19] sm:$0x1]
        %v1913 = vlaneseq
        %v1914 = vshrl.u32 %v1913, 7
        %v1915 = vsub.s32 0, %v1914
        %v1916 = vrot.slane %v1911, %v1915
        %v1922 = vunpack.c.l.b16 %v1907
        %v1923 = vunpack.c.l.b16 %v1908
        %v1924 = vunpack.c.l.b16 %v1909
        %v1925 = vunpack.c.l.b16 %v1910
        %v1926 = vpack.c.b16 %v1923, %v1922
        %v1927 = vpack.c.b16 %v1925, %v1924
        %v1931 = vsel %vm950, %v1904, 0
        %v1934 = vsel %vm950, %v1905, 0
        %1936 = vmatprep.subr.bf16.mxu0 0
        %1937 = vmatpush1.bf16.msra.mxu0 0
        %1938 = vmatprep.subr.bf16.mxu0 0
        %1939 = vmatpush1.bf16.msra.mxu0 0
        %1940 = vmatprep.subr.bf16.mxu0 0
        %1941 = vmatpush1.bf16.msra.mxu0 0
        %1942 = vmatprep.subr.bf16.mxu0 0
        %1943 = vmatpush1.bf16.msra.mxu0 0
        %1944 = vmatprep.subr.bf16.mxu0 0
        %1945 = vmatpush1.bf16.msra.mxu0 0
        %1946 = vmatprep.subr.bf16.mxu0 0
        %1947 = vmatpush1.bf16.msra.mxu0 0
        %1948 = vmatprep.subr.bf16.mxu0 0
        %1949 = vmatpush1.bf16.msra.mxu0 %v1927
        %1950 = vmatprep.subr.bf16.mxu0 0
        %1951 = vmatpush1.bf16.msra.mxu0 %v1926
        %1952 = vmatprep.subr.bf16.mxu0 0
        %1953 = vmatpush2.bf16.msra.mxu0 0
        %1954 = vmatprep.subr.bf16.mxu0 0
        %1955 = vmatpush2.bf16.msra.mxu0 0
        %1956 = vmatprep.subr.bf16.mxu0 0
        %1957 = vmatpush2.bf16.msra.mxu0 0
        %1958 = vmatprep.subr.bf16.mxu0 0
        %1959 = vmatpush2.bf16.msra.mxu0 0
        %1960 = vmatprep.subr.bf16.mxu0 0
        %1961 = vmatpush2.bf16.msra.mxu0 0
        %1962 = vmatprep.subr.bf16.mxu0 0
        %1963 = vmatpush2.bf16.msra.mxu0 0
        %1964 = vmatprep.subr.bf16.mxu0 0
        %1965 = vmatpush2.bf16.msra.mxu0 0
        %1966 = vmatprep.subr.bf16.mxu0 0
        %1967 = vmatpush2.bf16.msra.mxu0 0
        %1968 = vmatprep.mubr.bf16.mxu0 0
        %1969 = vmatmul.mubr.bf16.gmra.mxu0 %v1931
        %v1970 = vpop.f32.mrf.mxu0
        %v1971 = vadd.f32 %v1916, %v1970
        %v1972 = vpop.f32.mrf.mxu0
        %v1973 = vpop.f32.mrf.mxu0
        %v1974 = vadd.f32 %v1916, %v1973
        %v1975 = vpop.f32.mrf.mxu0
        %1976 = vmatprep.mubr.bf16.mxu0 0
        %1977 = vmatmul.mubr.bf16.gmra.mxu0 %v1934
        %v1978 = vpop.f32.mrf.mxu0
        %v1979 = vadd.f32 %v1916, %v1978
        %v1980 = vpop.f32.mrf.mxu0
        %v1981 = vpop.f32.mrf.mxu0
        %v1982 = vadd.f32 %v1916, %v1981
        %v1983 = vpop.f32.mrf.mxu0
        %1984 = vdwg.mxu0
        %v1985 = vstv %s1906
        %v1986 = vmul.f32 %v1985, %v1971
        %v1987 = vmul.f32 %v1985, %v1974
        %v1988 = vmul.f32 %v1985, %v1979
        %v1989 = vmul.f32 %v1985, %v1982
        %1990 = vst [vmem:[%s823] sm:$0xff] %v1986
        %1991 = vst [vmem:[%s823 + $0x8] sm:$0xff] %v1987
        %1992 = vst [vmem:[%s823 + $0x10] sm:$0xff] %v1988
        %1993 = vst [vmem:[%s823 + $0x18] sm:$0xff] %v1989
        %s1994 = sand.u32 %s484, 1
        %s1995 = sand.u32 %s484, 1
        %s1996 = smul.addr %s1995, 32
        %s1997 = scalar_lea.vmem [#allocation4], %s1996
        %s1998 = sand.u32 %s510, 1
        %s1999 = sand.u32 %s510, 1
        %s2000 = smul.addr %s1999, 32
        %s2001 = scalar_lea.vmem [#allocation5], %s2000
        %s2002 = sand.u32 %s536, 1
        %s2003 = sand.u32 %s536, 1
        %s2004 = smul.addr %s2003, 32
        %s2005 = scalar_lea.vmem [#allocation6], %s2004
        %s2006 = sand.u32 %s562, 1
        %s2007 = sand.u32 %s562, 1
        %s2008 = smul.addr %s2007, 32
        %s2009 = scalar_lea.vmem [#allocation7], %s2008
        // Predicated region
        $region105: #{_lambda_.3} parent=99 // pred_check
          %p2010 = pneg %p494
        $region106: #{_lambda_.3} parent=99 // pred_check_branch
          %2012 = sbr.rel (%p2010) target = $region108
        $region107: #{_lambda_.3} parent=99 // pred_region
          %s2013 = smul.u32 4, %s36
          %s2014 = ssub.s32 6, %s2013
          %p2015 = scmp.lt.s32.totalorder %s2014, 4
          %s2016 = scalar_select %p2015, %s2014, 4
          %s2017 = smul.u32 128, %s2016
          %p2018 = scmp.ne.s32.totalorder 0, %s2017
          %s2019 = smul.addr %s2013, 8
          %s2020 = scalar_lea.vmem %s20, %s2019
          // Predicated region
          $region109: #{_lambda_.3} parent=107 // pred_check
            %p2021 = pneg %p2018
          $region110: #{_lambda_.3} parent=107 // pred_check_branch
            %2023 = sbr.rel (%p2021) target = $region112
          $region111: #{_lambda_.3} parent=107 // pred_region
            // Predicated region
            $region113: #{_lambda_.3} parent=111 // pred_check
              _
            $region114: #{_lambda_.3} parent=111 // pred_check_branch
              %2025 = sbr.rel (0) target = $region116
            $region115: #{_lambda_.3} parent=111 // pred_region
              // Predicated region
              $region135: #{_lambda_.3} parent=115 // pred_check
                _
              $region136: #{_lambda_.3} parent=115 // pred_check_branch
                %2081 = sbr.rel (0) target = $region138
              $region137: #{_lambda_.3} parent=115 // pred_region
                %s2082 = sshrl.u32 %s2016, 2
                // While loop
                $region139: #{_lambda_.3} parent=137 // loop_pre_header
                  _
                $region140: #{_lambda_.3} parent=137 // loop_header
                  %s2084 = sphi 0, %s2086
                  %p2085 = scmp.ge.s32.totalorder %s2084, %s2082
                  %s2089 = sphi 0, %s2102
                  %s2090 = sphi %s1997, %s2105
                  %s2091 = sphi %s2020, %s2106
                $region141: #{_lambda_.3} parent=137 // loop_header_branch
                  %2088 = sbr.rel (%p2085) target = $region145
                $region142: #{_lambda_.3} parent=137 // loop_body
                  %v2092 = vld [vmem:[%s2090] sm:$0xff]
                  %2093 = vst [vmem:[%s2091] sm:$0xff] %v2092
                  %v2094 = vld [vmem:[%s2090 + $0x8] sm:$0xff]
                  %2095 = vst [vmem:[%s2091 + $0x8] sm:$0xff] %v2094
                  %v2096 = vld [vmem:[%s2090 + $0x10] sm:$0xff]
                  %2097 = vst [vmem:[%s2091 + $0x10] sm:$0xff] %v2096
                  %v2098 = vld [vmem:[%s2090 + $0x18] sm:$0xff]
                  %2099 = vst [vmem:[%s2091 + $0x18] sm:$0xff] %v2098
                  %s2100 = sadd.s32 1, %s2089
                  %p2101 = scmp.ge.s32.totalorder %s2100, %s2082
                  %s2102 = scalar_select %p2101, 0, %s2100
                  %s2103 = smul.u32 %s2102, 32
                  %s2104 = smul.u32 %s2102, 32
                  %s2105 = scalar_lea.vmem %s1997, %s2103 [#allocation4]
                  %s2106 = scalar_lea.vmem %s2020, %s2104
                $region143: #{_lambda_.3} parent=137 // loop_footer
                  %s2086 = sadd.s32 %s2084, 1
                $region144: #{_lambda_.3} parent=137 // loop_footer_branch
                  %2083 = sbr.rel target = $region140
                $region145: #{_lambda_.3} parent=137 // loop_exit
                  _
                %s2107 = sshrl.u32 %s2016, 2
                %s2108 = sand.u32 %s2016, 3
                %s2109 = smul.u32 %s2107, 4
                %s2110 = smul.u32 8, %s2109
                %s2111 = scalar_lea.vmem %s1997, %s2110 [#allocation4]
                %s2112 = smul.u32 8, %s2109
                %s2113 = scalar_lea.vmem %s2020, %s2112
                // While loop
                $region146: #{_lambda_.3} parent=137 // loop_pre_header
                  _
                $region147: #{_lambda_.3} parent=137 // loop_header
                  %s2115 = sphi 0, %s2117
                  %p2116 = scmp.ge.s32.totalorder %s2115, %s2108
                  %s2120 = sphi 0, %s2127
                  %s2121 = sphi %s2111, %s2130
                  %s2122 = sphi %s2113, %s2131
                $region148: #{_lambda_.3} parent=137 // loop_header_branch
                  %2119 = sbr.rel (%p2116) target = $region152
                $region149: #{_lambda_.3} parent=137 // loop_body
                  %v2123 = vld [vmem:[%s2121] sm:$0xff]
                  %2124 = vst [vmem:[%s2122] sm:$0xff] %v2123
                  %s2125 = sadd.s32 1, %s2120
                  %p2126 = scmp.ge.s32.totalorder %s2125, %s2108
                  %s2127 = scalar_select %p2126, 0, %s2125
                  %s2128 = smul.u32 %s2127, 8
                  %s2129 = smul.u32 %s2127, 8
                  %s2130 = scalar_lea.vmem %s2111, %s2128 [#allocation4]
                  %s2131 = scalar_lea.vmem %s2113, %s2129
                $region150: #{_lambda_.3} parent=137 // loop_footer
                  %s2117 = sadd.s32 %s2115, 1
                $region151: #{_lambda_.3} parent=137 // loop_footer_branch
                  %2114 = sbr.rel target = $region147
                $region152: #{_lambda_.3} parent=137 // loop_exit
                  _
              $region138: #{_lambda_.3} parent=115 // pred_fallthru
                _
              // Predicated region
              $region153: #{_lambda_.3} parent=115 // pred_check
                _
              $region154: #{_lambda_.3} parent=115 // pred_check_branch
                %2133 = sbr.rel target = $region156
              $region155: #{_lambda_.3} parent=115 // pred_region
                _
              $region156: #{_lambda_.3} parent=115 // pred_fallthru
                _
            $region116: #{_lambda_.3} parent=111 // pred_fallthru
              _
            // Predicated region
            $region117: #{_lambda_.3} parent=111 // pred_check
              _
            $region118: #{_lambda_.3} parent=111 // pred_check_branch
              %2027 = sbr.rel target = $region120
            $region119: #{_lambda_.3} parent=111 // pred_region
              %s2029 = ssub.s32 256, 1
              %s2030 = sshrl.u32 %s2016, 2
              // While loop
              $region121: #{_lambda_.3} parent=119 // loop_pre_header
                _
              $region122: #{_lambda_.3} parent=119 // loop_header
                %s2032 = sphi 0, %s2034
                %p2033 = scmp.ge.s32.totalorder %s2032, %s2030
                %s2037 = sphi 0, %s2050
                %s2038 = sphi %s1997, %s2053
                %s2039 = sphi %s2020, %s2054
              $region123: #{_lambda_.3} parent=119 // loop_header_branch
                %2036 = sbr.rel (%p2033) target = $region127
              $region124: #{_lambda_.3} parent=119 // loop_body
                %v2040 = vld [vmem:[%s2038] sm:%s2029]
                %2041 = vst [vmem:[%s2039] sm:%s2029] %v2040
                %v2042 = vld [vmem:[%s2038 + $0x8] sm:%s2029]
                %2043 = vst [vmem:[%s2039 + $0x8] sm:%s2029] %v2042
                %v2044 = vld [vmem:[%s2038 + $0x10] sm:%s2029]
                %2045 = vst [vmem:[%s2039 + $0x10] sm:%s2029] %v2044
                %v2046 = vld [vmem:[%s2038 + $0x18] sm:%s2029]
                %2047 = vst [vmem:[%s2039 + $0x18] sm:%s2029] %v2046
                %s2048 = sadd.s32 1, %s2037
                %p2049 = scmp.ge.s32.totalorder %s2048, %s2030
                %s2050 = scalar_select %p2049, 0, %s2048
                %s2051 = smul.u32 %s2050, 32
                %s2052 = smul.u32 %s2050, 32
                %s2053 = scalar_lea.vmem %s1997, %s2051 [#allocation4]
                %s2054 = scalar_lea.vmem %s2020, %s2052
              $region125: #{_lambda_.3} parent=119 // loop_footer
                %s2034 = sadd.s32 %s2032, 1
              $region126: #{_lambda_.3} parent=119 // loop_footer_branch
                %2031 = sbr.rel target = $region122
              $region127: #{_lambda_.3} parent=119 // loop_exit
                _
              %s2055 = sshrl.u32 %s2016, 2
              %s2056 = sand.u32 %s2016, 3
              %s2057 = smul.u32 %s2055, 4
              %s2058 = smul.u32 8, %s2057
              %s2059 = scalar_lea.vmem %s1997, %s2058 [#allocation4]
              %s2060 = smul.u32 8, %s2057
              %s2061 = scalar_lea.vmem %s2020, %s2060
              // While loop
              $region128: #{_lambda_.3} parent=119 // loop_pre_header
                _
              $region129: #{_lambda_.3} parent=119 // loop_header
                %s2063 = sphi 0, %s2065
                %p2064 = scmp.ge.s32.totalorder %s2063, %s2056
                %s2068 = sphi 0, %s2075
                %s2069 = sphi %s2059, %s2078
                %s2070 = sphi %s2061, %s2079
              $region130: #{_lambda_.3} parent=119 // loop_header_branch
                %2067 = sbr.rel (%p2064) target = $region134
              $region131: #{_lambda_.3} parent=119 // loop_body
                %v2071 = vld [vmem:[%s2069] sm:%s2029]
                %2072 = vst [vmem:[%s2070] sm:%s2029] %v2071
                %s2073 = sadd.s32 1, %s2068
                %p2074 = scmp.ge.s32.totalorder %s2073, %s2056
                %s2075 = scalar_select %p2074, 0, %s2073
                %s2076 = smul.u32 %s2075, 8
                %s2077 = smul.u32 %s2075, 8
                %s2078 = scalar_lea.vmem %s2059, %s2076 [#allocation4]
                %s2079 = scalar_lea.vmem %s2061, %s2077
              $region132: #{_lambda_.3} parent=119 // loop_footer
                %s2065 = sadd.s32 %s2063, 1
              $region133: #{_lambda_.3} parent=119 // loop_footer_branch
                %2062 = sbr.rel target = $region129
              $region134: #{_lambda_.3} parent=119 // loop_exit
                _
            $region120: #{_lambda_.3} parent=111 // pred_fallthru
              _
          $region112: #{_lambda_.3} parent=107 // pred_fallthru
            _
          %2134 = vnop
        $region108: #{_lambda_.3} parent=99 // pred_fallthru
          _
        // Predicated region
        $region157: #{_lambda_.3} parent=99 // pred_check
          %p2135 = pneg %p520
        $region158: #{_lambda_.3} parent=99 // pred_check_branch
          %2137 = sbr.rel (%p2135) target = $region160
        $region159: #{_lambda_.3} parent=99 // pred_region
          %s2138 = smul.u32 4, %s36
          %s2139 = ssub.s32 6, %s2138
          %p2140 = scmp.lt.s32.totalorder %s2139, 4
          %s2141 = scalar_select %p2140, %s2139, 4
          %s2142 = smul.u32 128, %s2141
          %p2143 = scmp.ne.s32.totalorder 0, %s2142
          %s2144 = smul.addr %s2138, 8
          %s2145 = scalar_lea.vmem %s21, %s2144
          // Predicated region
          $region161: #{_lambda_.3} parent=159 // pred_check
            %p2146 = pneg %p2143
          $region162: #{_lambda_.3} parent=159 // pred_check_branch
            %2148 = sbr.rel (%p2146) target = $region164
          $region163: #{_lambda_.3} parent=159 // pred_region
            // Predicated region
            $region165: #{_lambda_.3} parent=163 // pred_check
              _
            $region166: #{_lambda_.3} parent=163 // pred_check_branch
              %2150 = sbr.rel (0) target = $region168
            $region167: #{_lambda_.3} parent=163 // pred_region
              // Predicated region
              $region187: #{_lambda_.3} parent=167 // pred_check
                _
              $region188: #{_lambda_.3} parent=167 // pred_check_branch
                %2206 = sbr.rel (0) target = $region190
              $region189: #{_lambda_.3} parent=167 // pred_region
                %s2207 = sshrl.u32 %s2141, 2
                // While loop
                $region191: #{_lambda_.3} parent=189 // loop_pre_header
                  _
                $region192: #{_lambda_.3} parent=189 // loop_header
                  %s2209 = sphi 0, %s2211
                  %p2210 = scmp.ge.s32.totalorder %s2209, %s2207
                  %s2214 = sphi 0, %s2227
                  %s2215 = sphi %s2001, %s2230
                  %s2216 = sphi %s2145, %s2231
                $region193: #{_lambda_.3} parent=189 // loop_header_branch
                  %2213 = sbr.rel (%p2210) target = $region197
                $region194: #{_lambda_.3} parent=189 // loop_body
                  %v2217 = vld [vmem:[%s2215] sm:$0xff]
                  %2218 = vst [vmem:[%s2216] sm:$0xff] %v2217
                  %v2219 = vld [vmem:[%s2215 + $0x8] sm:$0xff]
                  %2220 = vst [vmem:[%s2216 + $0x8] sm:$0xff] %v2219
                  %v2221 = vld [vmem:[%s2215 + $0x10] sm:$0xff]
                  %2222 = vst [vmem:[%s2216 + $0x10] sm:$0xff] %v2221
                  %v2223 = vld [vmem:[%s2215 + $0x18] sm:$0xff]
                  %2224 = vst [vmem:[%s2216 + $0x18] sm:$0xff] %v2223
                  %s2225 = sadd.s32 1, %s2214
                  %p2226 = scmp.ge.s32.totalorder %s2225, %s2207
                  %s2227 = scalar_select %p2226, 0, %s2225
                  %s2228 = smul.u32 %s2227, 32
                  %s2229 = smul.u32 %s2227, 32
                  %s2230 = scalar_lea.vmem %s2001, %s2228 [#allocation5]
                  %s2231 = scalar_lea.vmem %s2145, %s2229
                $region195: #{_lambda_.3} parent=189 // loop_footer
                  %s2211 = sadd.s32 %s2209, 1
                $region196: #{_lambda_.3} parent=189 // loop_footer_branch
                  %2208 = sbr.rel target = $region192
                $region197: #{_lambda_.3} parent=189 // loop_exit
                  _
                %s2232 = sshrl.u32 %s2141, 2
                %s2233 = sand.u32 %s2141, 3
                %s2234 = smul.u32 %s2232, 4
                %s2235 = smul.u32 8, %s2234
                %s2236 = scalar_lea.vmem %s2001, %s2235 [#allocation5]
                %s2237 = smul.u32 8, %s2234
                %s2238 = scalar_lea.vmem %s2145, %s2237
                // While loop
                $region198: #{_lambda_.3} parent=189 // loop_pre_header
                  _
                $region199: #{_lambda_.3} parent=189 // loop_header
                  %s2240 = sphi 0, %s2242
                  %p2241 = scmp.ge.s32.totalorder %s2240, %s2233
                  %s2245 = sphi 0, %s2252
                  %s2246 = sphi %s2236, %s2255
                  %s2247 = sphi %s2238, %s2256
                $region200: #{_lambda_.3} parent=189 // loop_header_branch
                  %2244 = sbr.rel (%p2241) target = $region204
                $region201: #{_lambda_.3} parent=189 // loop_body
                  %v2248 = vld [vmem:[%s2246] sm:$0xff]
                  %2249 = vst [vmem:[%s2247] sm:$0xff] %v2248
                  %s2250 = sadd.s32 1, %s2245
                  %p2251 = scmp.ge.s32.totalorder %s2250, %s2233
                  %s2252 = scalar_select %p2251, 0, %s2250
                  %s2253 = smul.u32 %s2252, 8
                  %s2254 = smul.u32 %s2252, 8
                  %s2255 = scalar_lea.vmem %s2236, %s2253 [#allocation5]
                  %s2256 = scalar_lea.vmem %s2238, %s2254
                $region202: #{_lambda_.3} parent=189 // loop_footer
                  %s2242 = sadd.s32 %s2240, 1
                $region203: #{_lambda_.3} parent=189 // loop_footer_branch
                  %2239 = sbr.rel target = $region199
                $region204: #{_lambda_.3} parent=189 // loop_exit
                  _
              $region190: #{_lambda_.3} parent=167 // pred_fallthru
                _
              // Predicated region
              $region205: #{_lambda_.3} parent=167 // pred_check
                _
              $region206: #{_lambda_.3} parent=167 // pred_check_branch
                %2258 = sbr.rel target = $region208
              $region207: #{_lambda_.3} parent=167 // pred_region
                _
              $region208: #{_lambda_.3} parent=167 // pred_fallthru
                _
            $region168: #{_lambda_.3} parent=163 // pred_fallthru
              _
            // Predicated region
            $region169: #{_lambda_.3} parent=163 // pred_check
              _
            $region170: #{_lambda_.3} parent=163 // pred_check_branch
              %2152 = sbr.rel target = $region172
            $region171: #{_lambda_.3} parent=163 // pred_region
              %s2154 = ssub.s32 256, 1
              %s2155 = sshrl.u32 %s2141, 2
              // While loop
              $region173: #{_lambda_.3} parent=171 // loop_pre_header
                _
              $region174: #{_lambda_.3} parent=171 // loop_header
                %s2157 = sphi 0, %s2159
                %p2158 = scmp.ge.s32.totalorder %s2157, %s2155
                %s2162 = sphi 0, %s2175
                %s2163 = sphi %s2001, %s2178
                %s2164 = sphi %s2145, %s2179
              $region175: #{_lambda_.3} parent=171 // loop_header_branch
                %2161 = sbr.rel (%p2158) target = $region179
              $region176: #{_lambda_.3} parent=171 // loop_body
                %v2165 = vld [vmem:[%s2163] sm:%s2154]
                %2166 = vst [vmem:[%s2164] sm:%s2154] %v2165
                %v2167 = vld [vmem:[%s2163 + $0x8] sm:%s2154]
                %2168 = vst [vmem:[%s2164 + $0x8] sm:%s2154] %v2167
                %v2169 = vld [vmem:[%s2163 + $0x10] sm:%s2154]
                %2170 = vst [vmem:[%s2164 + $0x10] sm:%s2154] %v2169
                %v2171 = vld [vmem:[%s2163 + $0x18] sm:%s2154]
                %2172 = vst [vmem:[%s2164 + $0x18] sm:%s2154] %v2171
                %s2173 = sadd.s32 1, %s2162
                %p2174 = scmp.ge.s32.totalorder %s2173, %s2155
                %s2175 = scalar_select %p2174, 0, %s2173
                %s2176 = smul.u32 %s2175, 32
                %s2177 = smul.u32 %s2175, 32
                %s2178 = scalar_lea.vmem %s2001, %s2176 [#allocation5]
                %s2179 = scalar_lea.vmem %s2145, %s2177
              $region177: #{_lambda_.3} parent=171 // loop_footer
                %s2159 = sadd.s32 %s2157, 1
              $region178: #{_lambda_.3} parent=171 // loop_footer_branch
                %2156 = sbr.rel target = $region174
              $region179: #{_lambda_.3} parent=171 // loop_exit
                _
              %s2180 = sshrl.u32 %s2141, 2
              %s2181 = sand.u32 %s2141, 3
              %s2182 = smul.u32 %s2180, 4
              %s2183 = smul.u32 8, %s2182
              %s2184 = scalar_lea.vmem %s2001, %s2183 [#allocation5]
              %s2185 = smul.u32 8, %s2182
              %s2186 = scalar_lea.vmem %s2145, %s2185
              // While loop
              $region180: #{_lambda_.3} parent=171 // loop_pre_header
                _
              $region181: #{_lambda_.3} parent=171 // loop_header
                %s2188 = sphi 0, %s2190
                %p2189 = scmp.ge.s32.totalorder %s2188, %s2181
                %s2193 = sphi 0, %s2200
                %s2194 = sphi %s2184, %s2203
                %s2195 = sphi %s2186, %s2204
              $region182: #{_lambda_.3} parent=171 // loop_header_branch
                %2192 = sbr.rel (%p2189) target = $region186
              $region183: #{_lambda_.3} parent=171 // loop_body
                %v2196 = vld [vmem:[%s2194] sm:%s2154]
                %2197 = vst [vmem:[%s2195] sm:%s2154] %v2196
                %s2198 = sadd.s32 1, %s2193
                %p2199 = scmp.ge.s32.totalorder %s2198, %s2181
                %s2200 = scalar_select %p2199, 0, %s2198
                %s2201 = smul.u32 %s2200, 8
                %s2202 = smul.u32 %s2200, 8
                %s2203 = scalar_lea.vmem %s2184, %s2201 [#allocation5]
                %s2204 = scalar_lea.vmem %s2186, %s2202
              $region184: #{_lambda_.3} parent=171 // loop_footer
                %s2190 = sadd.s32 %s2188, 1
              $region185: #{_lambda_.3} parent=171 // loop_footer_branch
                %2187 = sbr.rel target = $region181
              $region186: #{_lambda_.3} parent=171 // loop_exit
                _
            $region172: #{_lambda_.3} parent=163 // pred_fallthru
              _
          $region164: #{_lambda_.3} parent=159 // pred_fallthru
            _
          %2259 = vnop
        $region160: #{_lambda_.3} parent=99 // pred_fallthru
          _
        // Predicated region
        $region209: #{_lambda_.3} parent=99 // pred_check
          %p2260 = pneg %p546
        $region210: #{_lambda_.3} parent=99 // pred_check_branch
          %2262 = sbr.rel (%p2260) target = $region212
        $region211: #{_lambda_.3} parent=99 // pred_region
          %s2263 = smul.u32 4, %s36
          %s2264 = ssub.s32 6, %s2263
          %p2265 = scmp.lt.s32.totalorder %s2264, 4
          %s2266 = scalar_select %p2265, %s2264, 4
          %s2267 = smul.u32 128, %s2266
          %p2268 = scmp.ne.s32.totalorder 0, %s2267
          %s2269 = smul.addr %s2263, 8
          %s2270 = scalar_lea.vmem %s22, %s2269
          // Predicated region
          $region213: #{_lambda_.3} parent=211 // pred_check
            %p2271 = pneg %p2268
          $region214: #{_lambda_.3} parent=211 // pred_check_branch
            %2273 = sbr.rel (%p2271) target = $region216
          $region215: #{_lambda_.3} parent=211 // pred_region
            // Predicated region
            $region217: #{_lambda_.3} parent=215 // pred_check
              _
            $region218: #{_lambda_.3} parent=215 // pred_check_branch
              %2275 = sbr.rel (0) target = $region220
            $region219: #{_lambda_.3} parent=215 // pred_region
              // Predicated region
              $region239: #{_lambda_.3} parent=219 // pred_check
                _
              $region240: #{_lambda_.3} parent=219 // pred_check_branch
                %2331 = sbr.rel (0) target = $region242
              $region241: #{_lambda_.3} parent=219 // pred_region
                %s2332 = sshrl.u32 %s2266, 2
                // While loop
                $region243: #{_lambda_.3} parent=241 // loop_pre_header
                  _
                $region244: #{_lambda_.3} parent=241 // loop_header
                  %s2334 = sphi 0, %s2336
                  %p2335 = scmp.ge.s32.totalorder %s2334, %s2332
                  %s2339 = sphi 0, %s2352
                  %s2340 = sphi %s2005, %s2355
                  %s2341 = sphi %s2270, %s2356
                $region245: #{_lambda_.3} parent=241 // loop_header_branch
                  %2338 = sbr.rel (%p2335) target = $region249
                $region246: #{_lambda_.3} parent=241 // loop_body
                  %v2342 = vld [vmem:[%s2340] sm:$0xff]
                  %2343 = vst [vmem:[%s2341] sm:$0xff] %v2342
                  %v2344 = vld [vmem:[%s2340 + $0x8] sm:$0xff]
                  %2345 = vst [vmem:[%s2341 + $0x8] sm:$0xff] %v2344
                  %v2346 = vld [vmem:[%s2340 + $0x10] sm:$0xff]
                  %2347 = vst [vmem:[%s2341 + $0x10] sm:$0xff] %v2346
                  %v2348 = vld [vmem:[%s2340 + $0x18] sm:$0xff]
                  %2349 = vst [vmem:[%s2341 + $0x18] sm:$0xff] %v2348
                  %s2350 = sadd.s32 1, %s2339
                  %p2351 = scmp.ge.s32.totalorder %s2350, %s2332
                  %s2352 = scalar_select %p2351, 0, %s2350
                  %s2353 = smul.u32 %s2352, 32
                  %s2354 = smul.u32 %s2352, 32
                  %s2355 = scalar_lea.vmem %s2005, %s2353 [#allocation6]
                  %s2356 = scalar_lea.vmem %s2270, %s2354
                $region247: #{_lambda_.3} parent=241 // loop_footer
                  %s2336 = sadd.s32 %s2334, 1
                $region248: #{_lambda_.3} parent=241 // loop_footer_branch
                  %2333 = sbr.rel target = $region244
                $region249: #{_lambda_.3} parent=241 // loop_exit
                  _
                %s2357 = sshrl.u32 %s2266, 2
                %s2358 = sand.u32 %s2266, 3
                %s2359 = smul.u32 %s2357, 4
                %s2360 = smul.u32 8, %s2359
                %s2361 = scalar_lea.vmem %s2005, %s2360 [#allocation6]
                %s2362 = smul.u32 8, %s2359
                %s2363 = scalar_lea.vmem %s2270, %s2362
                // While loop
                $region250: #{_lambda_.3} parent=241 // loop_pre_header
                  _
                $region251: #{_lambda_.3} parent=241 // loop_header
                  %s2365 = sphi 0, %s2367
                  %p2366 = scmp.ge.s32.totalorder %s2365, %s2358
                  %s2370 = sphi 0, %s2377
                  %s2371 = sphi %s2361, %s2380
                  %s2372 = sphi %s2363, %s2381
                $region252: #{_lambda_.3} parent=241 // loop_header_branch
                  %2369 = sbr.rel (%p2366) target = $region256
                $region253: #{_lambda_.3} parent=241 // loop_body
                  %v2373 = vld [vmem:[%s2371] sm:$0xff]
                  %2374 = vst [vmem:[%s2372] sm:$0xff] %v2373
                  %s2375 = sadd.s32 1, %s2370
                  %p2376 = scmp.ge.s32.totalorder %s2375, %s2358
                  %s2377 = scalar_select %p2376, 0, %s2375
                  %s2378 = smul.u32 %s2377, 8
                  %s2379 = smul.u32 %s2377, 8
                  %s2380 = scalar_lea.vmem %s2361, %s2378 [#allocation6]
                  %s2381 = scalar_lea.vmem %s2363, %s2379
                $region254: #{_lambda_.3} parent=241 // loop_footer
                  %s2367 = sadd.s32 %s2365, 1
                $region255: #{_lambda_.3} parent=241 // loop_footer_branch
                  %2364 = sbr.rel target = $region251
                $region256: #{_lambda_.3} parent=241 // loop_exit
                  _
              $region242: #{_lambda_.3} parent=219 // pred_fallthru
                _
              // Predicated region
              $region257: #{_lambda_.3} parent=219 // pred_check
                _
              $region258: #{_lambda_.3} parent=219 // pred_check_branch
                %2383 = sbr.rel target = $region260
              $region259: #{_lambda_.3} parent=219 // pred_region
                _
              $region260: #{_lambda_.3} parent=219 // pred_fallthru
                _
            $region220: #{_lambda_.3} parent=215 // pred_fallthru
              _
            // Predicated region
            $region221: #{_lambda_.3} parent=215 // pred_check
              _
            $region222: #{_lambda_.3} parent=215 // pred_check_branch
              %2277 = sbr.rel target = $region224
            $region223: #{_lambda_.3} parent=215 // pred_region
              %s2279 = ssub.s32 256, 1
              %s2280 = sshrl.u32 %s2266, 2
              // While loop
              $region225: #{_lambda_.3} parent=223 // loop_pre_header
                _
              $region226: #{_lambda_.3} parent=223 // loop_header
                %s2282 = sphi 0, %s2284
                %p2283 = scmp.ge.s32.totalorder %s2282, %s2280
                %s2287 = sphi 0, %s2300
                %s2288 = sphi %s2005, %s2303
                %s2289 = sphi %s2270, %s2304
              $region227: #{_lambda_.3} parent=223 // loop_header_branch
                %2286 = sbr.rel (%p2283) target = $region231
              $region228: #{_lambda_.3} parent=223 // loop_body
                %v2290 = vld [vmem:[%s2288] sm:%s2279]
                %2291 = vst [vmem:[%s2289] sm:%s2279] %v2290
                %v2292 = vld [vmem:[%s2288 + $0x8] sm:%s2279]
                %2293 = vst [vmem:[%s2289 + $0x8] sm:%s2279] %v2292
                %v2294 = vld [vmem:[%s2288 + $0x10] sm:%s2279]
                %2295 = vst [vmem:[%s2289 + $0x10] sm:%s2279] %v2294
                %v2296 = vld [vmem:[%s2288 + $0x18] sm:%s2279]
                %2297 = vst [vmem:[%s2289 + $0x18] sm:%s2279] %v2296
                %s2298 = sadd.s32 1, %s2287
                %p2299 = scmp.ge.s32.totalorder %s2298, %s2280
                %s2300 = scalar_select %p2299, 0, %s2298
                %s2301 = smul.u32 %s2300, 32
                %s2302 = smul.u32 %s2300, 32
                %s2303 = scalar_lea.vmem %s2005, %s2301 [#allocation6]
                %s2304 = scalar_lea.vmem %s2270, %s2302
              $region229: #{_lambda_.3} parent=223 // loop_footer
                %s2284 = sadd.s32 %s2282, 1
              $region230: #{_lambda_.3} parent=223 // loop_footer_branch
                %2281 = sbr.rel target = $region226
              $region231: #{_lambda_.3} parent=223 // loop_exit
                _
              %s2305 = sshrl.u32 %s2266, 2
              %s2306 = sand.u32 %s2266, 3
              %s2307 = smul.u32 %s2305, 4
              %s2308 = smul.u32 8, %s2307
              %s2309 = scalar_lea.vmem %s2005, %s2308 [#allocation6]
              %s2310 = smul.u32 8, %s2307
              %s2311 = scalar_lea.vmem %s2270, %s2310
              // While loop
              $region232: #{_lambda_.3} parent=223 // loop_pre_header
                _
              $region233: #{_lambda_.3} parent=223 // loop_header
                %s2313 = sphi 0, %s2315
                %p2314 = scmp.ge.s32.totalorder %s2313, %s2306
                %s2318 = sphi 0, %s2325
                %s2319 = sphi %s2309, %s2328
                %s2320 = sphi %s2311, %s2329
              $region234: #{_lambda_.3} parent=223 // loop_header_branch
                %2317 = sbr.rel (%p2314) target = $region238
              $region235: #{_lambda_.3} parent=223 // loop_body
                %v2321 = vld [vmem:[%s2319] sm:%s2279]
                %2322 = vst [vmem:[%s2320] sm:%s2279] %v2321
                %s2323 = sadd.s32 1, %s2318
                %p2324 = scmp.ge.s32.totalorder %s2323, %s2306
                %s2325 = scalar_select %p2324, 0, %s2323
                %s2326 = smul.u32 %s2325, 8
                %s2327 = smul.u32 %s2325, 8
                %s2328 = scalar_lea.vmem %s2309, %s2326 [#allocation6]
                %s2329 = scalar_lea.vmem %s2311, %s2327
              $region236: #{_lambda_.3} parent=223 // loop_footer
                %s2315 = sadd.s32 %s2313, 1
              $region237: #{_lambda_.3} parent=223 // loop_footer_branch
                %2312 = sbr.rel target = $region233
              $region238: #{_lambda_.3} parent=223 // loop_exit
                _
            $region224: #{_lambda_.3} parent=215 // pred_fallthru
              _
          $region216: #{_lambda_.3} parent=211 // pred_fallthru
            _
          %2384 = vnop
        $region212: #{_lambda_.3} parent=99 // pred_fallthru
          _
        // Predicated region
        $region261: #{_lambda_.3} parent=99 // pred_check
          %p2385 = pneg %p572
        $region262: #{_lambda_.3} parent=99 // pred_check_branch
          %2387 = sbr.rel (%p2385) target = $region264
        $region263: #{_lambda_.3} parent=99 // pred_region
          %s2388 = smul.u32 4, %s36
          %s2389 = ssub.s32 6, %s2388
          %p2390 = scmp.lt.s32.totalorder %s2389, 4
          %s2391 = scalar_select %p2390, %s2389, 4
          %s2392 = smul.u32 128, %s2391
          %p2393 = scmp.ne.s32.totalorder 0, %s2392
          %s2394 = smul.addr %s2388, 8
          %s2395 = scalar_lea.vmem %s23, %s2394
          // Predicated region
          $region265: #{_lambda_.3} parent=263 // pred_check
            %p2396 = pneg %p2393
          $region266: #{_lambda_.3} parent=263 // pred_check_branch
            %2398 = sbr.rel (%p2396) target = $region268
          $region267: #{_lambda_.3} parent=263 // pred_region
            // Predicated region
            $region269: #{_lambda_.3} parent=267 // pred_check
              _
            $region270: #{_lambda_.3} parent=267 // pred_check_branch
              %2400 = sbr.rel (0) target = $region272
            $region271: #{_lambda_.3} parent=267 // pred_region
              // Predicated region
              $region291: #{_lambda_.3} parent=271 // pred_check
                _
              $region292: #{_lambda_.3} parent=271 // pred_check_branch
                %2456 = sbr.rel (0) target = $region294
              $region293: #{_lambda_.3} parent=271 // pred_region
                %s2457 = sshrl.u32 %s2391, 2
                // While loop
                $region295: #{_lambda_.3} parent=293 // loop_pre_header
                  _
                $region296: #{_lambda_.3} parent=293 // loop_header
                  %s2459 = sphi 0, %s2461
                  %p2460 = scmp.ge.s32.totalorder %s2459, %s2457
                  %s2464 = sphi 0, %s2477
                  %s2465 = sphi %s2009, %s2480
                  %s2466 = sphi %s2395, %s2481
                $region297: #{_lambda_.3} parent=293 // loop_header_branch
                  %2463 = sbr.rel (%p2460) target = $region301
                $region298: #{_lambda_.3} parent=293 // loop_body
                  %v2467 = vld [vmem:[%s2465] sm:$0xff]
                  %2468 = vst [vmem:[%s2466] sm:$0xff] %v2467
                  %v2469 = vld [vmem:[%s2465 + $0x8] sm:$0xff]
                  %2470 = vst [vmem:[%s2466 + $0x8] sm:$0xff] %v2469
                  %v2471 = vld [vmem:[%s2465 + $0x10] sm:$0xff]
                  %2472 = vst [vmem:[%s2466 + $0x10] sm:$0xff] %v2471
                  %v2473 = vld [vmem:[%s2465 + $0x18] sm:$0xff]
                  %2474 = vst [vmem:[%s2466 + $0x18] sm:$0xff] %v2473
                  %s2475 = sadd.s32 1, %s2464
                  %p2476 = scmp.ge.s32.totalorder %s2475, %s2457
                  %s2477 = scalar_select %p2476, 0, %s2475
                  %s2478 = smul.u32 %s2477, 32
                  %s2479 = smul.u32 %s2477, 32
                  %s2480 = scalar_lea.vmem %s2009, %s2478 [#allocation7]
                  %s2481 = scalar_lea.vmem %s2395, %s2479
                $region299: #{_lambda_.3} parent=293 // loop_footer
                  %s2461 = sadd.s32 %s2459, 1
                $region300: #{_lambda_.3} parent=293 // loop_footer_branch
                  %2458 = sbr.rel target = $region296
                $region301: #{_lambda_.3} parent=293 // loop_exit
                  _
                %s2482 = sshrl.u32 %s2391, 2
                %s2483 = sand.u32 %s2391, 3
                %s2484 = smul.u32 %s2482, 4
                %s2485 = smul.u32 8, %s2484
                %s2486 = scalar_lea.vmem %s2009, %s2485 [#allocation7]
                %s2487 = smul.u32 8, %s2484
                %s2488 = scalar_lea.vmem %s2395, %s2487
                // While loop
                $region302: #{_lambda_.3} parent=293 // loop_pre_header
                  _
                $region303: #{_lambda_.3} parent=293 // loop_header
                  %s2490 = sphi 0, %s2492
                  %p2491 = scmp.ge.s32.totalorder %s2490, %s2483
                  %s2495 = sphi 0, %s2502
                  %s2496 = sphi %s2486, %s2505
                  %s2497 = sphi %s2488, %s2506
                $region304: #{_lambda_.3} parent=293 // loop_header_branch
                  %2494 = sbr.rel (%p2491) target = $region308
                $region305: #{_lambda_.3} parent=293 // loop_body
                  %v2498 = vld [vmem:[%s2496] sm:$0xff]
                  %2499 = vst [vmem:[%s2497] sm:$0xff] %v2498
                  %s2500 = sadd.s32 1, %s2495
                  %p2501 = scmp.ge.s32.totalorder %s2500, %s2483
                  %s2502 = scalar_select %p2501, 0, %s2500
                  %s2503 = smul.u32 %s2502, 8
                  %s2504 = smul.u32 %s2502, 8
                  %s2505 = scalar_lea.vmem %s2486, %s2503 [#allocation7]
                  %s2506 = scalar_lea.vmem %s2488, %s2504
                $region306: #{_lambda_.3} parent=293 // loop_footer
                  %s2492 = sadd.s32 %s2490, 1
                $region307: #{_lambda_.3} parent=293 // loop_footer_branch
                  %2489 = sbr.rel target = $region303
                $region308: #{_lambda_.3} parent=293 // loop_exit
                  _
              $region294: #{_lambda_.3} parent=271 // pred_fallthru
                _
              // Predicated region
              $region309: #{_lambda_.3} parent=271 // pred_check
                _
              $region310: #{_lambda_.3} parent=271 // pred_check_branch
                %2508 = sbr.rel target = $region312
              $region311: #{_lambda_.3} parent=271 // pred_region
                _
              $region312: #{_lambda_.3} parent=271 // pred_fallthru
                _
            $region272: #{_lambda_.3} parent=267 // pred_fallthru
              _
            // Predicated region
            $region273: #{_lambda_.3} parent=267 // pred_check
              _
            $region274: #{_lambda_.3} parent=267 // pred_check_branch
              %2402 = sbr.rel target = $region276
            $region275: #{_lambda_.3} parent=267 // pred_region
              %s2404 = ssub.s32 256, 1
              %s2405 = sshrl.u32 %s2391, 2
              // While loop
              $region277: #{_lambda_.3} parent=275 // loop_pre_header
                _
              $region278: #{_lambda_.3} parent=275 // loop_header
                %s2407 = sphi 0, %s2409
                %p2408 = scmp.ge.s32.totalorder %s2407, %s2405
                %s2412 = sphi 0, %s2425
                %s2413 = sphi %s2009, %s2428
                %s2414 = sphi %s2395, %s2429
              $region279: #{_lambda_.3} parent=275 // loop_header_branch
                %2411 = sbr.rel (%p2408) target = $region283
              $region280: #{_lambda_.3} parent=275 // loop_body
                %v2415 = vld [vmem:[%s2413] sm:%s2404]
                %2416 = vst [vmem:[%s2414] sm:%s2404] %v2415
                %v2417 = vld [vmem:[%s2413 + $0x8] sm:%s2404]
                %2418 = vst [vmem:[%s2414 + $0x8] sm:%s2404] %v2417
                %v2419 = vld [vmem:[%s2413 + $0x10] sm:%s2404]
                %2420 = vst [vmem:[%s2414 + $0x10] sm:%s2404] %v2419
                %v2421 = vld [vmem:[%s2413 + $0x18] sm:%s2404]
                %2422 = vst [vmem:[%s2414 + $0x18] sm:%s2404] %v2421
                %s2423 = sadd.s32 1, %s2412
                %p2424 = scmp.ge.s32.totalorder %s2423, %s2405
                %s2425 = scalar_select %p2424, 0, %s2423
                %s2426 = smul.u32 %s2425, 32
                %s2427 = smul.u32 %s2425, 32
                %s2428 = scalar_lea.vmem %s2009, %s2426 [#allocation7]
                %s2429 = scalar_lea.vmem %s2395, %s2427
              $region281: #{_lambda_.3} parent=275 // loop_footer
                %s2409 = sadd.s32 %s2407, 1
              $region282: #{_lambda_.3} parent=275 // loop_footer_branch
                %2406 = sbr.rel target = $region278
              $region283: #{_lambda_.3} parent=275 // loop_exit
                _
              %s2430 = sshrl.u32 %s2391, 2
              %s2431 = sand.u32 %s2391, 3
              %s2432 = smul.u32 %s2430, 4
              %s2433 = smul.u32 8, %s2432
              %s2434 = scalar_lea.vmem %s2009, %s2433 [#allocation7]
              %s2435 = smul.u32 8, %s2432
              %s2436 = scalar_lea.vmem %s2395, %s2435
              // While loop
              $region284: #{_lambda_.3} parent=275 // loop_pre_header
                _
              $region285: #{_lambda_.3} parent=275 // loop_header
                %s2438 = sphi 0, %s2440
                %p2439 = scmp.ge.s32.totalorder %s2438, %s2431
                %s2443 = sphi 0, %s2450
                %s2444 = sphi %s2434, %s2453
                %s2445 = sphi %s2436, %s2454
              $region286: #{_lambda_.3} parent=275 // loop_header_branch
                %2442 = sbr.rel (%p2439) target = $region290
              $region287: #{_lambda_.3} parent=275 // loop_body
                %v2446 = vld [vmem:[%s2444] sm:%s2404]
                %2447 = vst [vmem:[%s2445] sm:%s2404] %v2446
                %s2448 = sadd.s32 1, %s2443
                %p2449 = scmp.ge.s32.totalorder %s2448, %s2431
                %s2450 = scalar_select %p2449, 0, %s2448
                %s2451 = smul.u32 %s2450, 8
                %s2452 = smul.u32 %s2450, 8
                %s2453 = scalar_lea.vmem %s2434, %s2451 [#allocation7]
                %s2454 = scalar_lea.vmem %s2436, %s2452
              $region288: #{_lambda_.3} parent=275 // loop_footer
                %s2440 = sadd.s32 %s2438, 1
              $region289: #{_lambda_.3} parent=275 // loop_footer_branch
                %2437 = sbr.rel target = $region285
              $region290: #{_lambda_.3} parent=275 // loop_exit
                _
            $region276: #{_lambda_.3} parent=267 // pred_fallthru
              _
          $region268: #{_lambda_.3} parent=263 // pred_fallthru
            _
          %2509 = vnop
        $region264: #{_lambda_.3} parent=99 // pred_fallthru
          _
      $region100: #{_lambda_.3} parent=5 // pred_fallthru
        _
      %p2510 = scmp.le.s32.totalorder 2, %s31
      // Predicated region
      $region313: #{_lambda_.3} parent=5 // pred_check
        %p2511 = pneg %p2510
      $region314: #{_lambda_.3} parent=5 // pred_check_branch
        %2513 = sbr.rel (%p2511) target = $region316
      $region315: #{_lambda_.3} parent=5 // pred_region
        %s2514 = ssub.s32 %s31, 2
        // Predicated region
        $region317: #{_lambda_.3} parent=315 // pred_check
          %p2515 = pneg %p500
        $region318: #{_lambda_.3} parent=315 // pred_check_branch
          %2517 = sbr.rel (%p2515) target = $region320
        $region319: #{_lambda_.3} parent=315 // pred_region
          %s2518 = sand.u32 %s485, 1
          %s2519 = sand.u32 %s485, 1
          %s2520 = smul.addr %s2519, 32
          %s2521 = scalar_lea.vmem [#allocation4], %s2520
        $region320: #{_lambda_.3} parent=315 // pred_fallthru
          _
        // Predicated region
        $region321: #{_lambda_.3} parent=315 // pred_check
          %p2522 = pneg %p526
        $region322: #{_lambda_.3} parent=315 // pred_check_branch
          %2524 = sbr.rel (%p2522) target = $region324
        $region323: #{_lambda_.3} parent=315 // pred_region
          %s2525 = sand.u32 %s511, 1
          %s2526 = sand.u32 %s511, 1
          %s2527 = smul.addr %s2526, 32
          %s2528 = scalar_lea.vmem [#allocation5], %s2527
        $region324: #{_lambda_.3} parent=315 // pred_fallthru
          _
        // Predicated region
        $region325: #{_lambda_.3} parent=315 // pred_check
          %p2529 = pneg %p552
        $region326: #{_lambda_.3} parent=315 // pred_check_branch
          %2531 = sbr.rel (%p2529) target = $region328
        $region327: #{_lambda_.3} parent=315 // pred_region
          %s2532 = sand.u32 %s537, 1
          %s2533 = sand.u32 %s537, 1
          %s2534 = smul.addr %s2533, 32
          %s2535 = scalar_lea.vmem [#allocation6], %s2534
        $region328: #{_lambda_.3} parent=315 // pred_fallthru
          _
        // Predicated region
        $region329: #{_lambda_.3} parent=315 // pred_check
          %p2536 = pneg %p578
        $region330: #{_lambda_.3} parent=315 // pred_check_branch
          %2538 = sbr.rel (%p2536) target = $region332
        $region331: #{_lambda_.3} parent=315 // pred_region
          %s2539 = sand.u32 %s563, 1
          %s2540 = sand.u32 %s563, 1
          %s2541 = smul.addr %s2540, 32
          %s2542 = scalar_lea.vmem [#allocation7], %s2541
        $region332: #{_lambda_.3} parent=315 // pred_fallthru
          _
      $region316: #{_lambda_.3} parent=5 // pred_fallthru
        _
    $region6: #{_lambda_.3} parent=1 // loop_footer
      %s35 = sadd.s32 1, %s31
    $region7: #{_lambda_.3} parent=1 // loop_footer_branch
      %30 = sbr.rel target = $region3
    $region8: #{_lambda_.3} parent=1 // loop_exit
      _
    %2543 = vsyncpa [#allocation3], 1
    %s2544 = scalar_lea.sflag [#allocation3], 1
    %2545 = vsyncpa %s2544, 1

</llo_original>
